<compile_context>
chip_gen: v5e
topology: v5e:2x2
jax: 0.10.0
libtpu: 0.0.40
codegen_flags: <defaults>
</compile_context>

<pallas_src>
import functools

import jax
import jax.numpy as jnp
from jax.experimental import pallas as pl
from jax.experimental.pallas import tpu as pltpu

_LN_EPS = 1e-5


def _gelu_tanh(x):
    c = 0.7978845608028654  # sqrt(2/pi)
    return 0.5 * x * (1.0 + jnp.tanh(c * (x + 0.044715 * x * x * x)))


def _layer_norm(x, gamma, beta):
    mu = jnp.mean(x, axis=-1, keepdims=True)
    var = jnp.mean((x - mu) * (x - mu), axis=-1, keepdims=True)
    return (x - mu) * jax.lax.rsqrt(var + _LN_EPS) * gamma + beta


def _relative_position_bias(table, win_size, num_heads):
    """(num_heads, N, N) bias from the (2*ws-1)^2 x num_heads table."""
    ws = win_size
    n_tok = ws * ws
    coords = jnp.stack(jnp.meshgrid(jnp.arange(ws), jnp.arange(ws),
                                    indexing='ij'))               # (2, ws, ws)
    cf = coords.reshape(2, -1)                                    # (2, N)
    rel = jnp.transpose(cf[:, :, None] - cf[:, None, :], (1, 2, 0)) + (ws - 1)
    idx = rel[..., 0] * (2 * ws - 1) + rel[..., 1]                # (N, N)
    bias = jnp.take(table, idx.reshape(-1), axis=0)
    bias = bias.reshape(n_tok, n_tok, num_heads)
    return jnp.transpose(bias, (2, 0, 1)).astype(jnp.float32)     # (nH, N, N)


# --------------------------------------------------------------------------
# Kernel 1: LayerNorm1 + window attention + first residual (one window/step)
# --------------------------------------------------------------------------
def _win_attn_kernel(x_ref, g1_ref, b1_ref, wqkv_ref, bqkv_ref, wp_ref, bp_ref,
                     bias_ref, o_ref, *, win_size, dim, num_heads):
    ws = win_size
    n_tok = ws * ws
    c = dim
    d = c // num_heads
    scale = d ** -0.5

    # (1, ws, ws, C) block -> (N, C); this is also the pre-norm shortcut.
    x = x_ref[0].reshape(n_tok, c)

    xn = _layer_norm(x, g1_ref[...], b1_ref[...])

    # Fused QKV projection: one (N, C) @ (C, 3C) MXU matmul (to_q/to_kv folded).
    qkv = jnp.dot(xn, wqkv_ref[...],
                  preferred_element_type=jnp.float32) + bqkv_ref[...]
    q = qkv[:, :c]
    k = qkv[:, c:2 * c]
    v = qkv[:, 2 * c:]

    head_outs = []
    for h in range(num_heads):                    # static unroll over heads
        sl = slice(h * d, (h + 1) * d)
        qh = q[:, sl] * scale
        kh = k[:, sl]
        vh = v[:, sl]
        attn = jnp.einsum('nd,md->nm', qh, kh,
                          preferred_element_type=jnp.float32)      # (N, N)
        attn = attn + bias_ref[h]
        m = jnp.max(attn, axis=-1, keepdims=True)
        p = jnp.exp(attn - m)
        p = p / jnp.sum(p, axis=-1, keepdims=True)
        head_outs.append(jnp.dot(p, vh, preferred_element_type=jnp.float32))
    out = jnp.concatenate(head_outs, axis=-1)                      # (N, C)

    out = jnp.dot(out, wp_ref[...],
                  preferred_element_type=jnp.float32) + bp_ref[...]

    # First residual (shift_size == 0 -> per-window add == global add).
    o_ref[0] = (x + out).reshape(ws, ws, c).astype(o_ref.dtype)


def _window_attention_call(x_nhwc, g1, b1, wqkv, bqkv, wp, bp, rel_bias,
                           *, win_size, num_heads):
    B, H, W, C = x_nhwc.shape
    ws = win_size
    n_tok = ws * ws
    nwh, nww = H // ws, W // ws
    d = C // num_heads
    nwin = B * nwh * nww

    kernel = functools.partial(_win_attn_kernel, win_size=ws, dim=C,
                               num_heads=num_heads)

    flops = nwin * (2 * n_tok * C * (3 * C)
                    + num_heads * 2 * (2 * n_tok * n_tok * d)
                    + 2 * n_tok * C * C)
    bytes_accessed = 4 * (2 * B * H * W * C + C * 3 * C + 3 * C + C * C
                          + 4 * C + num_heads * n_tok * n_tok)
    cost = pl.CostEstimate(flops=int(flops),
                           transcendentals=int(nwin * num_heads * n_tok * n_tok),
                           bytes_accessed=int(bytes_accessed))

    return pl.pallas_call(
        kernel,
        out_shape=jax.ShapeDtypeStruct((B, H, W, C), x_nhwc.dtype),
        grid_spec=pltpu.PrefetchScalarGridSpec(
            num_scalar_prefetch=0,
            grid=(B, nwh, nww),
            in_specs=[
                pl.BlockSpec((1, ws, ws, C), lambda b, i, j: (b, i, j, 0)),
                pl.BlockSpec((1, C), lambda b, i, j: (0, 0)),
                pl.BlockSpec((1, C), lambda b, i, j: (0, 0)),
                pl.BlockSpec((C, 3 * C), lambda b, i, j: (0, 0)),
                pl.BlockSpec((1, 3 * C), lambda b, i, j: (0, 0)),
                pl.BlockSpec((C, C), lambda b, i, j: (0, 0)),
                pl.BlockSpec((1, C), lambda b, i, j: (0, 0)),
                pl.BlockSpec((num_heads, n_tok, n_tok),
                             lambda b, i, j: (0, 0, 0)),
            ],
            out_specs=pl.BlockSpec((1, ws, ws, C), lambda b, i, j: (b, i, j, 0)),
        ),
        compiler_params=pltpu.CompilerParams(
            dimension_semantics=("parallel", "parallel", "parallel")),
        cost_estimate=cost,
    )(x_nhwc, g1, b1, wqkv, bqkv, wp, bp, rel_bias)


# --------------------------------------------------------------------------
# Kernel 2: LayerNorm2 + LeFF (linear-GELU-dwconv-GELU-linear) + residual
# --------------------------------------------------------------------------
def _leff_kernel(y_ref, g2_ref, b2_ref, w1_ref, bb1_ref, wdw_ref, bdw_ref,
                 w2_ref, bb2_ref, o_ref, pad_ref, *, height, width, dim,
                 hidden):
    hw = height * width
    y = y_ref[0].reshape(hw, dim)

    # Per the reference module, BOTH the MLP input and the second residual use
    # the LayerNorm2 output:  x = norm2(x);  x = x + mlp(x).
    yn = _layer_norm(y, g2_ref[...], b2_ref[...])

    # linear1 + GELU -> (HW, hidden); hidden=128 keeps the lane dim dense.
    h1 = jnp.dot(yn, w1_ref[...],
                 preferred_element_type=jnp.float32) + bb1_ref[...]
    h1 = _gelu_tanh(h1)

    # 3x3 depthwise conv via a zero-padded VMEM scratch and 9 broadcast
    # multiply-adds on the VPU (no MXU needed for a depthwise conv).
    pad_ref[...] = jnp.zeros((height + 2, width + 2, hidden), jnp.float32)
    pad_ref[1:height + 1, 1:width + 1, :] = h1.reshape(height, width, hidden)
    wdw = wdw_ref[...]                                       # (3, 3, hidden)
    acc = jnp.zeros((height, width, hidden), jnp.float32)
    for kh in range(3):
        for kw in range(3):
            tap = wdw[kh:kh + 1, kw:kw + 1, :]               # (1, 1, hidden)
            acc = acc + pad_ref[kh:kh + height, kw:kw + width, :] * tap
    h2 = _gelu_tanh(acc.reshape(hw, hidden) + bdw_ref[...])

    # linear2 + second residual.
    out = jnp.dot(h2, w2_ref[...],
                  preferred_element_type=jnp.float32) + bb2_ref[...]
    o_ref[0] = (yn + out).reshape(height, width, dim).astype(o_ref.dtype)


def _leff_call(y_nhwc, g2, b2, w1, bb1, wdw, bdw, w2, bb2):
    B, H, W, C = y_nhwc.shape
    hidden = w1.shape[1]
    hw = H * W

    kernel = functools.partial(_leff_kernel, height=H, width=W, dim=C,
                               hidden=hidden)

    flops = B * (2 * hw * C * hidden + 2 * 9 * hw * hidden
                 + 2 * hw * hidden * C)
    bytes_accessed = 4 * (2 * B * H * W * C + C * hidden + hidden
                          + 9 * hidden + hidden + hidden * C + 3 * C)
    cost = pl.CostEstimate(flops=int(flops),
                           transcendentals=int(2 * B * hw * hidden),
                           bytes_accessed=int(bytes_accessed))

    return pl.pallas_call(
        kernel,
        out_shape=jax.ShapeDtypeStruct((B, H, W, C), y_nhwc.dtype),
        grid_spec=pltpu.PrefetchScalarGridSpec(
            num_scalar_prefetch=0,
            grid=(B,),
            in_specs=[
                pl.BlockSpec((1, H, W, C), lambda b: (b, 0, 0, 0)),
                pl.BlockSpec((1, C), lambda b: (0, 0)),
                pl.BlockSpec((1, C), lambda b: (0, 0)),
                pl.BlockSpec((C, hidden), lambda b: (0, 0)),
                pl.BlockSpec((1, hidden), lambda b: (0, 0)),
                pl.BlockSpec((3, 3, hidden), lambda b: (0, 0, 0)),
                pl.BlockSpec((1, hidden), lambda b: (0, 0)),
                pl.BlockSpec((hidden, C), lambda b: (0, 0)),
                pl.BlockSpec((1, C), lambda b: (0, 0)),
            ],
            out_specs=pl.BlockSpec((1, H, W, C), lambda b: (b, 0, 0, 0)),
            scratch_shapes=[pltpu.VMEM((H + 2, W + 2, hidden), jnp.float32)],
        ),
        compiler_params=pltpu.CompilerParams(
            dimension_semantics=("parallel",)),
        cost_estimate=cost,
    )(y_nhwc, g2, b2, w1, bb1, wdw, bdw, w2, bb2)


# --------------------------------------------------------------------------
# Full block forward + parameter preparation
# --------------------------------------------------------------------------
def lewin_transformer_block_forward(x_nchw, params, *, win_size, num_heads):
    B, C, H, W = x_nchw.shape
    ws = min(win_size, H, W)          # module shrinks win_size when needed
    assert H % ws == 0 and W % ws == 0, "H, W must be multiples of win_size"

    rel_bias = _relative_position_bias(params['rpb_table'], ws, num_heads)

    x_nhwc = jnp.transpose(x_nchw, (0, 2, 3, 1))

    y = _window_attention_call(x_nhwc, params['ln1_g'], params['ln1_b'],
                               params['wqkv'], params['bqkv'],
                               params['wproj'], params['bproj'], rel_bias,
                               win_size=ws, num_heads=num_heads)

    out = _leff_call(y, params['ln2_g'], params['ln2_b'],
                     params['w1'], params['b1'],
                     params['wdw'], params['bdw'],
                     params['w2'], params['b2'])

    return jnp.transpose(out, (0, 3, 1, 2))


def prepare_params(raw):
    """PyTorch-layout parameters -> kernel-friendly layouts."""
    C = raw['ln1_w'].shape[0]
    hidden = raw['b1'].shape[0]
    wqkv = jnp.concatenate([raw['wq'].T, raw['wkv'].T], axis=1)   # (C, 3C)
    bqkv = jnp.concatenate([raw['bq'], raw['bkv']]).reshape(1, 3 * C)
    return dict(
        ln1_g=raw['ln1_w'].reshape(1, C), ln1_b=raw['ln1_b'].reshape(1, C),
        wqkv=wqkv, bqkv=bqkv,
        wproj=raw['wproj'].T, bproj=raw['bproj'].reshape(1, C),
        rpb_table=raw['rpb_table'],
        ln2_g=raw['ln2_w'].reshape(1, C), ln2_b=raw['ln2_b'].reshape(1, C),
        w1=raw['w1'].T, b1=raw['b1'].reshape(1, hidden),
        wdw=jnp.transpose(raw['wdw'][:, 0], (1, 2, 0)),   # (hid,1,3,3)->(3,3,hid)
        bdw=raw['bdw'].reshape(1, hidden),
        w2=raw['w2'].T, b2=raw['b2'].reshape(1, C),
    )


# --------------------------------------------------------------------------
# Pure-JAX reference (mirrors the PyTorch module, f32 HIGHEST precision)
# --------------------------------------------------------------------------
def _reference_forward(x_nchw, params, *, win_size, num_heads):
    PREC = jax.lax.Precision.HIGHEST
    B, C, H, W = x_nchw.shape
    ws = min(win_size, H, W)
    n_tok = ws * ws
    d = C // num_heads
    scale = d ** -0.5
    hidden = params['w1'].shape[1]
    rel_bias = _relative_position_bias(params['rpb_table'], ws, num_heads)

    xf = jnp.transpose(x_nchw.reshape(B, C, H * W), (0, 2, 1))    # (B, HW, C)
    shortcut = xf
    xn = _layer_norm(xf, params['ln1_g'], params['ln1_b'])
    xw = xn.reshape(B, H, W, C)
    xwin = xw.reshape(B, H // ws, ws, W // ws, ws, C)
    xwin = jnp.transpose(xwin, (0, 1, 3, 2, 4, 5)).reshape(-1, n_tok, C)

    qkv = jnp.matmul(xwin, params['wqkv'], precision=PREC) + params['bqkv']
    q, k, v = qkv[..., :C], qkv[..., C:2 * C], qkv[..., 2 * C:]
    sh = lambda t: jnp.transpose(t.reshape(-1, n_tok, num_heads, d),
                                 (0, 2, 1, 3))
    q, k, v = sh(q) * scale, sh(k), sh(v)
    attn = jnp.einsum('bhnd,bhmd->bhnm', q, k, precision=PREC)
    attn = attn + rel_bias[None]
    attn = jax.nn.softmax(attn, axis=-1)
    out = jnp.einsum('bhnm,bhmd->bhnd', attn, v, precision=PREC)
    out = jnp.transpose(out, (0, 2, 1, 3)).reshape(-1, n_tok, C)
    out = jnp.matmul(out, params['wproj'], precision=PREC) + params['bproj']

    out = out.reshape(B, H // ws, W // ws, ws, ws, C)
    out = jnp.transpose(out, (0, 1, 3, 2, 4, 5)).reshape(B, H * W, C)
    y = shortcut + out

    yn = _layer_norm(y, params['ln2_g'], params['ln2_b'])
    h1 = _gelu_tanh(jnp.matmul(yn, params['w1'], precision=PREC)
                    + params['b1']).reshape(B, H, W, hidden)
    dw = jax.lax.conv_general_dilated(
        h1, params['wdw'].reshape(3, 3, 1, hidden),
        window_strides=(1, 1), padding=((1, 1), (1, 1)),
        dimension_numbers=('NHWC', 'HWIO', 'NHWC'),
        feature_group_count=hidden, precision=PREC)
    h2 = _gelu_tanh(dw.reshape(B, H * W, hidden) + params['bdw'])
    out2 = jnp.matmul(h2, params['w2'], precision=PREC) + params['b2']
    z = yn + out2
    return jnp.transpose(z.reshape(B, H, W, C), (0, 3, 1, 2))


if __name__ == "__main__":
    # LeWinTransformerBlock(dim=32, num_heads=2, win_size=8, shift_size=0,
    #                       mlp_ratio=4.0, token_mlp='leff')
    B, C, H, W = 2, 32, 16, 16
    num_heads, win_size = 2, 8
    hidden = int(C * 4.0)

    key = jax.random.PRNGKey(0)
    ks = jax.random.split(key, 20)
    u = lambda k, shape, s=0.1: jax.random.uniform(k, shape, jnp.float32, -s, s)

    x = jax.random.normal(ks[0], (B, C, H, W), jnp.float32)
    raw = dict(
        ln1_w=1.0 + u(ks[1], (C,)), ln1_b=u(ks[2], (C,)),
        wq=u(ks[3], (C, C)), bq=u(ks[4], (C,)),
        wkv=u(ks[5], (2 * C, C)), bkv=u(ks[6], (2 * C,)),
        wproj=u(ks[7], (C, C)), bproj=u(ks[8], (C,)),
        rpb_table=0.02 * jax.random.normal(
            ks[9], ((2 * win_size - 1) ** 2, num_heads), jnp.float32),
        ln2_w=1.0 + u(ks[10], (C,)), ln2_b=u(ks[11], (C,)),
        w1=u(ks[12], (hidden, C)), b1=u(ks[13], (hidden,)),
        wdw=u(ks[14], (hidden, 1, 3, 3)), bdw=u(ks[15], (hidden,)),
        w2=u(ks[16], (C, hidden)), b2=u(ks[17], (C,)),
    )
    params = prepare_params(raw)

    fwd = jax.jit(lambda xx, pp: lewin_transformer_block_forward(
        xx, pp, win_size=win_size, num_heads=num_heads))
    out = jax.block_until_ready(fwd(x, params))
    assert out.shape == (B, C, H, W), out.shape

    ref = _reference_forward(x, params, win_size=win_size, num_heads=num_heads)
    max_err = float(jnp.max(jnp.abs(out - ref)))
    assert jnp.allclose(out, ref, atol=1e-3, rtol=1e-3), f"mismatch: {max_err}"

    print("KERNEL_OK")
</pallas_src>

<mosaic_0001>
module attributes {stable_mosaic.version = 11 : i64} {
  func.func @_win_attn_kernel(%arg0: i32, %arg1: i32, %arg2: i32, %arg3: memref<1x8x8x32xf32, #tpu.memory_space<vmem>>, %arg4: memref<1x32xf32, #tpu.memory_space<vmem>>, %arg5: memref<1x32xf32, #tpu.memory_space<vmem>>, %arg6: memref<32x96xf32, #tpu.memory_space<vmem>>, %arg7: memref<1x96xf32, #tpu.memory_space<vmem>>, %arg8: memref<32x32xf32, #tpu.memory_space<vmem>>, %arg9: memref<1x32xf32, #tpu.memory_space<vmem>>, %arg10: memref<2x64x64xf32, #tpu.memory_space<vmem>>, %arg11: memref<1x8x8x32xf32, #tpu.memory_space<vmem>>) attributes {dimension_semantics = [#tpu.dimension_semantics<parallel>, #tpu.dimension_semantics<parallel>, #tpu.dimension_semantics<parallel>], iteration_bounds = array<i64: 2, 2, 2>, scalar_prefetch = 0 : i64, scratch_operands = 0 : i64, tpu.core_type = #tpu.core_type<tc>, window_params = [{transform_indices = @transform_0, window_bounds = array<i64: 1, 8, 8, 32>}, {pipeline_mode = #tpu.pipeline_mode<synchronous>, transform_indices = @transform_1, window_bounds = array<i64: 1, 32>}, {pipeline_mode = #tpu.pipeline_mode<synchronous>, transform_indices = @transform_2, window_bounds = array<i64: 1, 32>}, {pipeline_mode = #tpu.pipeline_mode<synchronous>, transform_indices = @transform_3, window_bounds = array<i64: 32, 96>}, {pipeline_mode = #tpu.pipeline_mode<synchronous>, transform_indices = @transform_4, window_bounds = array<i64: 1, 96>}, {pipeline_mode = #tpu.pipeline_mode<synchronous>, transform_indices = @transform_5, window_bounds = array<i64: 32, 32>}, {pipeline_mode = #tpu.pipeline_mode<synchronous>, transform_indices = @transform_6, window_bounds = array<i64: 1, 32>}, {pipeline_mode = #tpu.pipeline_mode<synchronous>, transform_indices = @transform_7, window_bounds = array<i64: 2, 64, 64>}, {transform_indices = @transform_8, window_bounds = array<i64: 1, 8, 8, 32>}]} {
    %c0 = arith.constant 0 : index
    %c0_0 = arith.constant 0 : index
    %c0_1 = arith.constant 0 : index
    %c0_2 = arith.constant 0 : index
    %0 = vector.load %arg3[%c0, %c0_0, %c0_1, %c0_2] : memref<1x8x8x32xf32, #tpu.memory_space<vmem>>, vector<1x8x8x32xf32>
    %1 = vector.shape_cast %0 : vector<1x8x8x32xf32> to vector<8x8x32xf32>
    %2 = vector.shape_cast %1 : vector<8x8x32xf32> to vector<64x32xf32>
    %c0_3 = arith.constant 0 : index
    %c0_4 = arith.constant 0 : index
    %3 = vector.load %arg4[%c0_3, %c0_4] : memref<1x32xf32, #tpu.memory_space<vmem>>, vector<1x32xf32>
    %c0_5 = arith.constant 0 : index
    %c0_6 = arith.constant 0 : index
    %4 = vector.load %arg5[%c0_5, %c0_6] : memref<1x32xf32, #tpu.memory_space<vmem>>, vector<1x32xf32>
    %cst = arith.constant dense<0.000000e+00> : vector<64xf32>
    %5 = vector.multi_reduction <add>, %2, %cst [1] : vector<64x32xf32> to vector<64xf32>
    %6 = vector.shape_cast %5 : vector<64xf32> to vector<64x1xf32>
    %cst_7 = arith.constant 3.200000e+01 : f32
    %7 = vector.broadcast %cst_7 : f32 to vector<64x1xf32>
    %8 = arith.divf %6, %7 : vector<64x1xf32>
    %9 = vector.broadcast %8 : vector<64x1xf32> to vector<64x32xf32>
    %10 = arith.subf %2, %9 : vector<64x32xf32>
    %11 = vector.broadcast %8 : vector<64x1xf32> to vector<64x32xf32>
    %12 = arith.subf %2, %11 : vector<64x32xf32>
    %13 = arith.mulf %10, %12 : vector<64x32xf32>
    %cst_8 = arith.constant dense<0.000000e+00> : vector<64xf32>
    %14 = vector.multi_reduction <add>, %13, %cst_8 [1] : vector<64x32xf32> to vector<64xf32>
    %15 = vector.shape_cast %14 : vector<64xf32> to vector<64x1xf32>
    %cst_9 = arith.constant 3.200000e+01 : f32
    %16 = vector.broadcast %cst_9 : f32 to vector<64x1xf32>
    %17 = arith.divf %15, %16 : vector<64x1xf32>
    %18 = vector.broadcast %8 : vector<64x1xf32> to vector<64x32xf32>
    %19 = arith.subf %2, %18 : vector<64x32xf32>
    %cst_10 = arith.constant 9.99999974E-6 : f32
    %20 = vector.broadcast %cst_10 : f32 to vector<64x1xf32>
    %21 = arith.addf %17, %20 : vector<64x1xf32>
    %22 = math.rsqrt %21 : vector<64x1xf32>
    %23 = vector.broadcast %22 : vector<64x1xf32> to vector<64x32xf32>
    %24 = arith.mulf %19, %23 : vector<64x32xf32>
    %25 = vector.broadcast %3 : vector<1x32xf32> to vector<64x32xf32>
    %26 = arith.mulf %24, %25 : vector<64x32xf32>
    %27 = vector.broadcast %4 : vector<1x32xf32> to vector<64x32xf32>
    %28 = arith.addf %26, %27 : vector<64x32xf32>
    %c0_11 = arith.constant 0 : index
    %c0_12 = arith.constant 0 : index
    %29 = vector.load %arg6[%c0_11, %c0_12] : memref<32x96xf32, #tpu.memory_space<vmem>>, vector<32x96xf32>
    %cst_13 = arith.constant dense<0.000000e+00> : vector<64x96xf32>
    %30 = tpu.matmul %28, %29, %cst_13 {dimension_numbers = #tpu.dot_dimension_numbers<[1], [0], [0], [1], [0, 0, 1, 1], [], []>} : vector<64x32xf32>, vector<32x96xf32>, vector<64x96xf32> -> vector<64x96xf32>
    %c0_14 = arith.constant 0 : index
    %c0_15 = arith.constant 0 : index
    %31 = vector.load %arg7[%c0_14, %c0_15] : memref<1x96xf32, #tpu.memory_space<vmem>>, vector<1x96xf32>
    %32 = vector.broadcast %31 : vector<1x96xf32> to vector<64x96xf32>
    %33 = arith.addf %30, %32 : vector<64x96xf32>
    %34 = vector.extract_strided_slice %33 {offsets = [0, 0], sizes = [64, 32], strides = [1, 1]} : vector<64x96xf32> to vector<64x32xf32>
    %35 = vector.extract_strided_slice %33 {offsets = [0, 32], sizes = [64, 32], strides = [1, 1]} : vector<64x96xf32> to vector<64x32xf32>
    %36 = vector.extract_strided_slice %33 {offsets = [0, 64], sizes = [64, 32], strides = [1, 1]} : vector<64x96xf32> to vector<64x32xf32>
    %37 = vector.extract_strided_slice %34 {offsets = [0, 0], sizes = [64, 16], strides = [1, 1]} : vector<64x32xf32> to vector<64x16xf32>
    %cst_16 = arith.constant 2.500000e-01 : f32
    %38 = vector.broadcast %cst_16 : f32 to vector<64x16xf32>
    %39 = arith.mulf %37, %38 : vector<64x16xf32>
    %40 = vector.extract_strided_slice %35 {offsets = [0, 0], sizes = [64, 16], strides = [1, 1]} : vector<64x32xf32> to vector<64x16xf32>
    %41 = vector.extract_strided_slice %36 {offsets = [0, 0], sizes = [64, 16], strides = [1, 1]} : vector<64x32xf32> to vector<64x16xf32>
    "tpu.trace_start"() <{level = 10 : i32, message = "nd,md->nm"}> : () -> ()
    %cst_17 = arith.constant dense<0.000000e+00> : vector<64x64xf32>
    %42 = tpu.matmul %39, %40, %cst_17 {dimension_numbers = #tpu.dot_dimension_numbers<[1], [1], [0], [0], [0, 0, 1, 0], [], []>} : vector<64x16xf32>, vector<64x16xf32>, vector<64x64xf32> -> vector<64x64xf32>
    "tpu.trace_stop"() : () -> ()
    %c0_18 = arith.constant 0 : index
    %c0_19 = arith.constant 0 : index
    %c0_20 = arith.constant 0 : index
    %43 = vector.load %arg10[%c0_18, %c0_19, %c0_20] : memref<2x64x64xf32, #tpu.memory_space<vmem>>, vector<1x64x64xf32>
    %44 = vector.shape_cast %43 : vector<1x64x64xf32> to vector<64x64xf32>
    %45 = arith.addf %42, %44 : vector<64x64xf32>
    %cst_21 = arith.constant dense<0xFF800000> : vector<64xf32>
    %46 = vector.multi_reduction <maximumf>, %45, %cst_21 [1] : vector<64x64xf32> to vector<64xf32>
    %47 = vector.shape_cast %46 : vector<64xf32> to vector<64x1xf32>
    %48 = vector.broadcast %47 : vector<64x1xf32> to vector<64x64xf32>
    %49 = arith.subf %45, %48 : vector<64x64xf32>
    %50 = math.exp %49 : vector<64x64xf32>
    %cst_22 = arith.constant dense<0.000000e+00> : vector<64xf32>
    %51 = vector.multi_reduction <add>, %50, %cst_22 [1] : vector<64x64xf32> to vector<64xf32>
    %52 = vector.shape_cast %51 : vector<64xf32> to vector<64x1xf32>
    %53 = vector.broadcast %52 : vector<64x1xf32> to vector<64x64xf32>
    %54 = arith.divf %50, %53 : vector<64x64xf32>
    %cst_23 = arith.constant dense<0.000000e+00> : vector<64x16xf32>
    %55 = tpu.matmul %54, %41, %cst_23 {dimension_numbers = #tpu.dot_dimension_numbers<[1], [0], [0], [1], [0, 0, 1, 1], [], []>} : vector<64x64xf32>, vector<64x16xf32>, vector<64x16xf32> -> vector<64x16xf32>
    %56 = vector.extract_strided_slice %34 {offsets = [0, 16], sizes = [64, 16], strides = [1, 1]} : vector<64x32xf32> to vector<64x16xf32>
    %cst_24 = arith.constant 2.500000e-01 : f32
    %57 = vector.broadcast %cst_24 : f32 to vector<64x16xf32>
    %58 = arith.mulf %56, %57 : vector<64x16xf32>
    %59 = vector.extract_strided_slice %35 {offsets = [0, 16], sizes = [64, 16], strides = [1, 1]} : vector<64x32xf32> to vector<64x16xf32>
    %60 = vector.extract_strided_slice %36 {offsets = [0, 16], sizes = [64, 16], strides = [1, 1]} : vector<64x32xf32> to vector<64x16xf32>
    "tpu.trace_start"() <{level = 10 : i32, message = "nd,md->nm"}> : () -> ()
    %cst_25 = arith.constant dense<0.000000e+00> : vector<64x64xf32>
    %61 = tpu.matmul %58, %59, %cst_25 {dimension_numbers = #tpu.dot_dimension_numbers<[1], [1], [0], [0], [0, 0, 1, 0], [], []>} : vector<64x16xf32>, vector<64x16xf32>, vector<64x64xf32> -> vector<64x64xf32>
    "tpu.trace_stop"() : () -> ()
    %c1 = arith.constant 1 : index
    %c0_26 = arith.constant 0 : index
    %c0_27 = arith.constant 0 : index
    %62 = vector.load %arg10[%c1, %c0_26, %c0_27] : memref<2x64x64xf32, #tpu.memory_space<vmem>>, vector<1x64x64xf32>
    %63 = vector.shape_cast %62 : vector<1x64x64xf32> to vector<64x64xf32>
    %64 = arith.addf %61, %63 : vector<64x64xf32>
    %cst_28 = arith.constant dense<0xFF800000> : vector<64xf32>
    %65 = vector.multi_reduction <maximumf>, %64, %cst_28 [1] : vector<64x64xf32> to vector<64xf32>
    %66 = vector.shape_cast %65 : vector<64xf32> to vector<64x1xf32>
    %67 = vector.broadcast %66 : vector<64x1xf32> to vector<64x64xf32>
    %68 = arith.subf %64, %67 : vector<64x64xf32>
    %69 = math.exp %68 : vector<64x64xf32>
    %cst_29 = arith.constant dense<0.000000e+00> : vector<64xf32>
    %70 = vector.multi_reduction <add>, %69, %cst_29 [1] : vector<64x64xf32> to vector<64xf32>
    %71 = vector.shape_cast %70 : vector<64xf32> to vector<64x1xf32>
    %72 = vector.broadcast %71 : vector<64x1xf32> to vector<64x64xf32>
    %73 = arith.divf %69, %72 : vector<64x64xf32>
    %cst_30 = arith.constant dense<0.000000e+00> : vector<64x16xf32>
    %74 = tpu.matmul %73, %60, %cst_30 {dimension_numbers = #tpu.dot_dimension_numbers<[1], [0], [0], [1], [0, 0, 1, 1], [], []>} : vector<64x64xf32>, vector<64x16xf32>, vector<64x16xf32> -> vector<64x16xf32>
    %75 = tpu.concatenate %55, %74 in 1 : vector<64x16xf32>, vector<64x16xf32> -> vector<64x32xf32>
    %c0_31 = arith.constant 0 : index
    %c0_32 = arith.constant 0 : index
    %76 = vector.load %arg8[%c0_31, %c0_32] : memref<32x32xf32, #tpu.memory_space<vmem>>, vector<32x32xf32>
    %cst_33 = arith.constant dense<0.000000e+00> : vector<64x32xf32>
    %77 = tpu.matmul %75, %76, %cst_33 {dimension_numbers = #tpu.dot_dimension_numbers<[1], [0], [0], [1], [0, 0, 1, 1], [], []>} : vector<64x32xf32>, vector<32x32xf32>, vector<64x32xf32> -> vector<64x32xf32>
    %c0_34 = arith.constant 0 : index
    %c0_35 = arith.constant 0 : index
    %78 = vector.load %arg9[%c0_34, %c0_35] : memref<1x32xf32, #tpu.memory_space<vmem>>, vector<1x32xf32>
    %79 = vector.broadcast %78 : vector<1x32xf32> to vector<64x32xf32>
    %80 = arith.addf %77, %79 : vector<64x32xf32>
    %81 = arith.addf %2, %80 : vector<64x32xf32>
    %82 = vector.shape_cast %81 : vector<64x32xf32> to vector<8x8x32xf32>
    %c0_36 = arith.constant 0 : index
    %c0_37 = arith.constant 0 : index
    %c0_38 = arith.constant 0 : index
    %c0_39 = arith.constant 0 : index
    %83 = vector.load %arg11[%c0_36, %c0_37, %c0_38, %c0_39] : memref<1x8x8x32xf32, #tpu.memory_space<vmem>>, vector<1x8x8x32xf32>
    %84 = vector.shape_cast %83 : vector<1x8x8x32xf32> to vector<8x8x32xf32>
    %85 = vector.shape_cast %82 : vector<8x8x32xf32> to vector<1x8x8x32xf32>
    tpu.vector_store %arg11[%c0_36, %c0_37, %c0_38, %c0_39], %85 {strides = array<i32>} : memref<1x8x8x32xf32, #tpu.memory_space<vmem>>, vector<1x8x8x32xf32>,
    return
  }
  func.func @transform_0(%arg0: i32, %arg1: i32, %arg2: i32) -> (i32, i32, i32, i32) {
    %c0_i32 = arith.constant 0 : i32
    %c0_i32_0 = arith.constant 0 : i32
    return %arg0, %arg1, %arg2, %c0_i32 : i32, i32, i32, i32
  }
  func.func @transform_1(%arg0: i32, %arg1: i32, %arg2: i32) -> (i32, i32) {
    %c0_i32 = arith.constant 0 : i32
    %c0_i32_0 = arith.constant 0 : i32
    %c0_i32_1 = arith.constant 0 : i32
    return %c0_i32, %c0_i32_0 : i32, i32
  }
  func.func @transform_2(%arg0: i32, %arg1: i32, %arg2: i32) -> (i32, i32) {
    %c0_i32 = arith.constant 0 : i32
    %c0_i32_0 = arith.constant 0 : i32
    %c0_i32_1 = arith.constant 0 : i32
    return %c0_i32, %c0_i32_0 : i32, i32
  }
  func.func @transform_3(%arg0: i32, %arg1: i32, %arg2: i32) -> (i32, i32) {
    %c0_i32 = arith.constant 0 : i32
    %c0_i32_0 = arith.constant 0 : i32
    %c0_i32_1 = arith.constant 0 : i32
    return %c0_i32, %c0_i32_0 : i32, i32
  }
  func.func @transform_4(%arg0: i32, %arg1: i32, %arg2: i32) -> (i32, i32) {
    %c0_i32 = arith.constant 0 : i32
    %c0_i32_0 = arith.constant 0 : i32
    %c0_i32_1 = arith.constant 0 : i32
    return %c0_i32, %c0_i32_0 : i32, i32
  }
  func.func @transform_5(%arg0: i32, %arg1: i32, %arg2: i32) -> (i32, i32) {
    %c0_i32 = arith.constant 0 : i32
    %c0_i32_0 = arith.constant 0 : i32
    %c0_i32_1 = arith.constant 0 : i32
    return %c0_i32, %c0_i32_0 : i32, i32
  }
  func.func @transform_6(%arg0: i32, %arg1: i32, %arg2: i32) -> (i32, i32) {
    %c0_i32 = arith.constant 0 : i32
    %c0_i32_0 = arith.constant 0 : i32
    %c0_i32_1 = arith.constant 0 : i32
    return %c0_i32, %c0_i32_0 : i32, i32
  }
  func.func @transform_7(%arg0: i32, %arg1: i32, %arg2: i32) -> (i32, i32, i32) {
    %c0_i32 = arith.constant 0 : i32
    %c0_i32_0 = arith.constant 0 : i32
    %c0_i32_1 = arith.constant 0 : i32
    %c0_i32_2 = arith.constant 0 : i32
    return %c0_i32, %c0_i32_0, %c0_i32_1 : i32, i32, i32
  }
  func.func @transform_8(%arg0: i32, %arg1: i32, %arg2: i32) -> (i32, i32, i32, i32) {
    %c0_i32 = arith.constant 0 : i32
    %c0_i32_0 = arith.constant 0 : i32
    return %arg0, %arg1, %arg2, %c0_i32 : i32, i32, i32, i32
  }
}

module attributes {stable_mosaic.version = 11 : i64} {
  func.func @_leff_kernel(%arg0: i32, %arg1: memref<1x16x16x32xf32, #tpu.memory_space<vmem>>, %arg2: memref<1x32xf32, #tpu.memory_space<vmem>>, %arg3: memref<1x32xf32, #tpu.memory_space<vmem>>, %arg4: memref<32x128xf32, #tpu.memory_space<vmem>>, %arg5: memref<1x128xf32, #tpu.memory_space<vmem>>, %arg6: memref<3x3x128xf32, #tpu.memory_space<vmem>>, %arg7: memref<1x128xf32, #tpu.memory_space<vmem>>, %arg8: memref<128x32xf32, #tpu.memory_space<vmem>>, %arg9: memref<1x32xf32, #tpu.memory_space<vmem>>, %arg10: memref<1x16x16x32xf32, #tpu.memory_space<vmem>>, %arg11: memref<18x18x128xf32, #tpu.memory_space<vmem>>) attributes {dimension_semantics = [#tpu.dimension_semantics<parallel>], iteration_bounds = array<i64: 2>, scalar_prefetch = 0 : i64, scratch_operands = 1 : i64, tpu.core_type = #tpu.core_type<tc>, window_params = [{transform_indices = @transform_0, window_bounds = array<i64: 1, 16, 16, 32>}, {pipeline_mode = #tpu.pipeline_mode<synchronous>, transform_indices = @transform_1, window_bounds = array<i64: 1, 32>}, {pipeline_mode = #tpu.pipeline_mode<synchronous>, transform_indices = @transform_2, window_bounds = array<i64: 1, 32>}, {pipeline_mode = #tpu.pipeline_mode<synchronous>, transform_indices = @transform_3, window_bounds = array<i64: 32, 128>}, {pipeline_mode = #tpu.pipeline_mode<synchronous>, transform_indices = @transform_4, window_bounds = array<i64: 1, 128>}, {pipeline_mode = #tpu.pipeline_mode<synchronous>, transform_indices = @transform_5, window_bounds = array<i64: 3, 3, 128>}, {pipeline_mode = #tpu.pipeline_mode<synchronous>, transform_indices = @transform_6, window_bounds = array<i64: 1, 128>}, {pipeline_mode = #tpu.pipeline_mode<synchronous>, transform_indices = @transform_7, window_bounds = array<i64: 128, 32>}, {pipeline_mode = #tpu.pipeline_mode<synchronous>, transform_indices = @transform_8, window_bounds = array<i64: 1, 32>}, {transform_indices = @transform_9, window_bounds = array<i64: 1, 16, 16, 32>}]} {
    %c0 = arith.constant 0 : index
    %c0_0 = arith.constant 0 : index
    %c0_1 = arith.constant 0 : index
    %c0_2 = arith.constant 0 : index
    %0 = vector.load %arg1[%c0, %c0_0, %c0_1, %c0_2] : memref<1x16x16x32xf32, #tpu.memory_space<vmem>>, vector<1x16x16x32xf32>
    %1 = vector.shape_cast %0 : vector<1x16x16x32xf32> to vector<16x16x32xf32>
    %2 = vector.shape_cast %1 : vector<16x16x32xf32> to vector<256x32xf32>
    %c0_3 = arith.constant 0 : index
    %c0_4 = arith.constant 0 : index
    %3 = vector.load %arg2[%c0_3, %c0_4] : memref<1x32xf32, #tpu.memory_space<vmem>>, vector<1x32xf32>
    %c0_5 = arith.constant 0 : index
    %c0_6 = arith.constant 0 : index
    %4 = vector.load %arg3[%c0_5, %c0_6] : memref<1x32xf32, #tpu.memory_space<vmem>>, vector<1x32xf32>
    %cst = arith.constant dense<0.000000e+00> : vector<256xf32>
    %5 = vector.multi_reduction <add>, %2, %cst [1] : vector<256x32xf32> to vector<256xf32>
    %6 = vector.shape_cast %5 : vector<256xf32> to vector<256x1xf32>
    %cst_7 = arith.constant 3.200000e+01 : f32
    %7 = vector.broadcast %cst_7 : f32 to vector<256x1xf32>
    %8 = arith.divf %6, %7 : vector<256x1xf32>
    %9 = vector.broadcast %8 : vector<256x1xf32> to vector<256x32xf32>
    %10 = arith.subf %2, %9 : vector<256x32xf32>
    %11 = vector.broadcast %8 : vector<256x1xf32> to vector<256x32xf32>
    %12 = arith.subf %2, %11 : vector<256x32xf32>
    %13 = arith.mulf %10, %12 : vector<256x32xf32>
    %cst_8 = arith.constant dense<0.000000e+00> : vector<256xf32>
    %14 = vector.multi_reduction <add>, %13, %cst_8 [1] : vector<256x32xf32> to vector<256xf32>
    %15 = vector.shape_cast %14 : vector<256xf32> to vector<256x1xf32>
    %cst_9 = arith.constant 3.200000e+01 : f32
    %16 = vector.broadcast %cst_9 : f32 to vector<256x1xf32>
    %17 = arith.divf %15, %16 : vector<256x1xf32>
    %18 = vector.broadcast %8 : vector<256x1xf32> to vector<256x32xf32>
    %19 = arith.subf %2, %18 : vector<256x32xf32>
    %cst_10 = arith.constant 9.99999974E-6 : f32
    %20 = vector.broadcast %cst_10 : f32 to vector<256x1xf32>
    %21 = arith.addf %17, %20 : vector<256x1xf32>
    %22 = math.rsqrt %21 : vector<256x1xf32>
    %23 = vector.broadcast %22 : vector<256x1xf32> to vector<256x32xf32>
    %24 = arith.mulf %19, %23 : vector<256x32xf32>
    %25 = vector.broadcast %3 : vector<1x32xf32> to vector<256x32xf32>
    %26 = arith.mulf %24, %25 : vector<256x32xf32>
    %27 = vector.broadcast %4 : vector<1x32xf32> to vector<256x32xf32>
    %28 = arith.addf %26, %27 : vector<256x32xf32>
    %c0_11 = arith.constant 0 : index
    %c0_12 = arith.constant 0 : index
    %29 = vector.load %arg4[%c0_11, %c0_12] : memref<32x128xf32, #tpu.memory_space<vmem>>, vector<32x128xf32>
    %cst_13 = arith.constant dense<0.000000e+00> : vector<256x128xf32>
    %30 = tpu.matmul %28, %29, %cst_13 {dimension_numbers = #tpu.dot_dimension_numbers<[1], [0], [0], [1], [0, 0, 1, 1], [], []>} : vector<256x32xf32>, vector<32x128xf32>, vector<256x128xf32> -> vector<256x128xf32>
    %c0_14 = arith.constant 0 : index
    %c0_15 = arith.constant 0 : index
    %31 = vector.load %arg5[%c0_14, %c0_15] : memref<1x128xf32, #tpu.memory_space<vmem>>, vector<1x128xf32>
    %32 = vector.broadcast %31 : vector<1x128xf32> to vector<256x128xf32>
    %33 = arith.addf %30, %32 : vector<256x128xf32>
    %cst_16 = arith.constant 5.000000e-01 : f32
    %34 = vector.broadcast %cst_16 : f32 to vector<256x128xf32>
    %35 = arith.mulf %34, %33 : vector<256x128xf32>
    %cst_17 = arith.constant 4.471500e-02 : f32
    %36 = vector.broadcast %cst_17 : f32 to vector<256x128xf32>
    %37 = arith.mulf %36, %33 : vector<256x128xf32>
    %38 = arith.mulf %37, %33 : vector<256x128xf32>
    %39 = arith.mulf %38, %33 : vector<256x128xf32>
    %40 = arith.addf %33, %39 : vector<256x128xf32>
    %cst_18 = arith.constant 0.797884583 : f32
    %41 = vector.broadcast %cst_18 : f32 to vector<256x128xf32>
    %42 = arith.mulf %41, %40 : vector<256x128xf32>
    %43 = math.tanh %42 : vector<256x128xf32>
    %cst_19 = arith.constant 1.000000e+00 : f32
    %44 = vector.broadcast %cst_19 : f32 to vector<256x128xf32>
    %45 = arith.addf %44, %43 : vector<256x128xf32>
    %46 = arith.mulf %35, %45 : vector<256x128xf32>
    %cst_20 = arith.constant 0.000000e+00 : f32
    %47 = vector.broadcast %cst_20 : f32 to vector<18x18x128xf32>
    %c0_21 = arith.constant 0 : index
    %c0_22 = arith.constant 0 : index
    %c0_23 = arith.constant 0 : index
    %48 = vector.load %arg11[%c0_21, %c0_22, %c0_23] : memref<18x18x128xf32, #tpu.memory_space<vmem>>, vector<18x18x128xf32>
    tpu.vector_store %arg11[%c0_21, %c0_22, %c0_23], %47 {strides = array<i32>} : memref<18x18x128xf32, #tpu.memory_space<vmem>>, vector<18x18x128xf32>,
    %49 = vector.shape_cast %46 : vector<256x128xf32> to vector<16x16x128xf32>
    %c1 = arith.constant 1 : index
    %c1_24 = arith.constant 1 : index
    %c0_25 = arith.constant 0 : index
    %50 = vector.load %arg11[%c1, %c1_24, %c0_25] : memref<18x18x128xf32, #tpu.memory_space<vmem>>, vector<16x16x128xf32>
    tpu.vector_store %arg11[%c1, %c1_24, %c0_25], %49 {strides = array<i32>} : memref<18x18x128xf32, #tpu.memory_space<vmem>>, vector<16x16x128xf32>,
    %c0_26 = arith.constant 0 : index
    %c0_27 = arith.constant 0 : index
    %c0_28 = arith.constant 0 : index
    %51 = vector.load %arg6[%c0_26, %c0_27, %c0_28] : memref<3x3x128xf32, #tpu.memory_space<vmem>>, vector<3x3x128xf32>
    %cst_29 = arith.constant 0.000000e+00 : f32
    %52 = vector.broadcast %cst_29 : f32 to vector<16x16x128xf32>
    %53 = vector.extract_strided_slice %51 {offsets = [0, 0, 0], sizes = [1, 1, 128], strides = [1, 1, 1]} : vector<3x3x128xf32> to vector<1x1x128xf32>
    %c0_30 = arith.constant 0 : index
    %c0_31 = arith.constant 0 : index
    %c0_32 = arith.constant 0 : index
    %54 = vector.load %arg11[%c0_30, %c0_31, %c0_32] : memref<18x18x128xf32, #tpu.memory_space<vmem>>, vector<16x16x128xf32>
    %55 = vector.broadcast %53 : vector<1x1x128xf32> to vector<16x16x128xf32>
    %56 = arith.mulf %54, %55 : vector<16x16x128xf32>
    %57 = arith.addf %52, %56 : vector<16x16x128xf32>
    %58 = vector.extract_strided_slice %51 {offsets = [0, 1, 0], sizes = [1, 1, 128], strides = [1, 1, 1]} : vector<3x3x128xf32> to vector<1x1x128xf32>
    %c0_33 = arith.constant 0 : index
    %c1_34 = arith.constant 1 : index
    %c0_35 = arith.constant 0 : index
    %59 = vector.load %arg11[%c0_33, %c1_34, %c0_35] : memref<18x18x128xf32, #tpu.memory_space<vmem>>, vector<16x16x128xf32>
    %60 = vector.broadcast %58 : vector<1x1x128xf32> to vector<16x16x128xf32>
    %61 = arith.mulf %59, %60 : vector<16x16x128xf32>
    %62 = arith.addf %57, %61 : vector<16x16x128xf32>
    %63 = vector.extract_strided_slice %51 {offsets = [0, 2, 0], sizes = [1, 1, 128], strides = [1, 1, 1]} : vector<3x3x128xf32> to vector<1x1x128xf32>
    %c0_36 = arith.constant 0 : index
    %c2 = arith.constant 2 : index
    %c0_37 = arith.constant 0 : index
    %64 = vector.load %arg11[%c0_36, %c2, %c0_37] : memref<18x18x128xf32, #tpu.memory_space<vmem>>, vector<16x16x128xf32>
    %65 = vector.broadcast %63 : vector<1x1x128xf32> to vector<16x16x128xf32>
    %66 = arith.mulf %64, %65 : vector<16x16x128xf32>
    %67 = arith.addf %62, %66 : vector<16x16x128xf32>
    %68 = vector.extract_strided_slice %51 {offsets = [1, 0, 0], sizes = [1, 1, 128], strides = [1, 1, 1]} : vector<3x3x128xf32> to vector<1x1x128xf32>
    %c1_38 = arith.constant 1 : index
    %c0_39 = arith.constant 0 : index
    %c0_40 = arith.constant 0 : index
    %69 = vector.load %arg11[%c1_38, %c0_39, %c0_40] : memref<18x18x128xf32, #tpu.memory_space<vmem>>, vector<16x16x128xf32>
    %70 = vector.broadcast %68 : vector<1x1x128xf32> to vector<16x16x128xf32>
    %71 = arith.mulf %69, %70 : vector<16x16x128xf32>
    %72 = arith.addf %67, %71 : vector<16x16x128xf32>
    %73 = vector.extract_strided_slice %51 {offsets = [1, 1, 0], sizes = [1, 1, 128], strides = [1, 1, 1]} : vector<3x3x128xf32> to vector<1x1x128xf32>
    %c1_41 = arith.constant 1 : index
    %c1_42 = arith.constant 1 : index
    %c0_43 = arith.constant 0 : index
    %74 = vector.load %arg11[%c1_41, %c1_42, %c0_43] : memref<18x18x128xf32, #tpu.memory_space<vmem>>, vector<16x16x128xf32>
    %75 = vector.broadcast %73 : vector<1x1x128xf32> to vector<16x16x128xf32>
    %76 = arith.mulf %74, %75 : vector<16x16x128xf32>
    %77 = arith.addf %72, %76 : vector<16x16x128xf32>
    %78 = vector.extract_strided_slice %51 {offsets = [1, 2, 0], sizes = [1, 1, 128], strides = [1, 1, 1]} : vector<3x3x128xf32> to vector<1x1x128xf32>
    %c1_44 = arith.constant 1 : index
    %c2_45 = arith.constant 2 : index
    %c0_46 = arith.constant 0 : index
    %79 = vector.load %arg11[%c1_44, %c2_45, %c0_46] : memref<18x18x128xf32, #tpu.memory_space<vmem>>, vector<16x16x128xf32>
    %80 = vector.broadcast %78 : vector<1x1x128xf32> to vector<16x16x128xf32>
    %81 = arith.mulf %79, %80 : vector<16x16x128xf32>
    %82 = arith.addf %77, %81 : vector<16x16x128xf32>
    %83 = vector.extract_strided_slice %51 {offsets = [2, 0, 0], sizes = [1, 1, 128], strides = [1, 1, 1]} : vector<3x3x128xf32> to vector<1x1x128xf32>
    %c2_47 = arith.constant 2 : index
    %c0_48 = arith.constant 0 : index
    %c0_49 = arith.constant 0 : index
    %84 = vector.load %arg11[%c2_47, %c0_48, %c0_49] : memref<18x18x128xf32, #tpu.memory_space<vmem>>, vector<16x16x128xf32>
    %85 = vector.broadcast %83 : vector<1x1x128xf32> to vector<16x16x128xf32>
    %86 = arith.mulf %84, %85 : vector<16x16x128xf32>
    %87 = arith.addf %82, %86 : vector<16x16x128xf32>
    %88 = vector.extract_strided_slice %51 {offsets = [2, 1, 0], sizes = [1, 1, 128], strides = [1, 1, 1]} : vector<3x3x128xf32> to vector<1x1x128xf32>
    %c2_50 = arith.constant 2 : index
    %c1_51 = arith.constant 1 : index
    %c0_52 = arith.constant 0 : index
    %89 = vector.load %arg11[%c2_50, %c1_51, %c0_52] : memref<18x18x128xf32, #tpu.memory_space<vmem>>, vector<16x16x128xf32>
    %90 = vector.broadcast %88 : vector<1x1x128xf32> to vector<16x16x128xf32>
    %91 = arith.mulf %89, %90 : vector<16x16x128xf32>
    %92 = arith.addf %87, %91 : vector<16x16x128xf32>
    %93 = vector.extract_strided_slice %51 {offsets = [2, 2, 0], sizes = [1, 1, 128], strides = [1, 1, 1]} : vector<3x3x128xf32> to vector<1x1x128xf32>
    %c2_53 = arith.constant 2 : index
    %c2_54 = arith.constant 2 : index
    %c0_55 = arith.constant 0 : index
    %94 = vector.load %arg11[%c2_53, %c2_54, %c0_55] : memref<18x18x128xf32, #tpu.memory_space<vmem>>, vector<16x16x128xf32>
    %95 = vector.broadcast %93 : vector<1x1x128xf32> to vector<16x16x128xf32>
    %96 = arith.mulf %94, %95 : vector<16x16x128xf32>
    %97 = arith.addf %92, %96 : vector<16x16x128xf32>
    %98 = vector.shape_cast %97 : vector<16x16x128xf32> to vector<256x128xf32>
    %c0_56 = arith.constant 0 : index
    %c0_57 = arith.constant 0 : index
    %99 = vector.load %arg7[%c0_56, %c0_57] : memref<1x128xf32, #tpu.memory_space<vmem>>, vector<1x128xf32>
    %100 = vector.broadcast %99 : vector<1x128xf32> to vector<256x128xf32>
    %101 = arith.addf %98, %100 : vector<256x128xf32>
    %cst_58 = arith.constant 5.000000e-01 : f32
    %102 = vector.broadcast %cst_58 : f32 to vector<256x128xf32>
    %103 = arith.mulf %102, %101 : vector<256x128xf32>
    %cst_59 = arith.constant 4.471500e-02 : f32
    %104 = vector.broadcast %cst_59 : f32 to vector<256x128xf32>
    %105 = arith.mulf %104, %101 : vector<256x128xf32>
    %106 = arith.mulf %105, %101 : vector<256x128xf32>
    %107 = arith.mulf %106, %101 : vector<256x128xf32>
    %108 = arith.addf %101, %107 : vector<256x128xf32>
    %cst_60 = arith.constant 0.797884583 : f32
    %109 = vector.broadcast %cst_60 : f32 to vector<256x128xf32>
    %110 = arith.mulf %109, %108 : vector<256x128xf32>
    %111 = math.tanh %110 : vector<256x128xf32>
    %cst_61 = arith.constant 1.000000e+00 : f32
    %112 = vector.broadcast %cst_61 : f32 to vector<256x128xf32>
    %113 = arith.addf %112, %111 : vector<256x128xf32>
    %114 = arith.mulf %103, %113 : vector<256x128xf32>
    %c0_62 = arith.constant 0 : index
    %c0_63 = arith.constant 0 : index
    %115 = vector.load %arg8[%c0_62, %c0_63] : memref<128x32xf32, #tpu.memory_space<vmem>>, vector<128x32xf32>
    %cst_64 = arith.constant dense<0.000000e+00> : vector<256x32xf32>
    %116 = tpu.matmul %114, %115, %cst_64 {dimension_numbers = #tpu.dot_dimension_numbers<[1], [0], [0], [1], [0, 0, 1, 1], [], []>} : vector<256x128xf32>, vector<128x32xf32>, vector<256x32xf32> -> vector<256x32xf32>
    %c0_65 = arith.constant 0 : index
    %c0_66 = arith.constant 0 : index
    %117 = vector.load %arg9[%c0_65, %c0_66] : memref<1x32xf32, #tpu.memory_space<vmem>>, vector<1x32xf32>
    %118 = vector.broadcast %117 : vector<1x32xf32> to vector<256x32xf32>
    %119 = arith.addf %116, %118 : vector<256x32xf32>
    %120 = arith.addf %28, %119 : vector<256x32xf32>
    %121 = vector.shape_cast %120 : vector<256x32xf32> to vector<16x16x32xf32>
    %c0_67 = arith.constant 0 : index
    %c0_68 = arith.constant 0 : index
    %c0_69 = arith.constant 0 : index
    %c0_70 = arith.constant 0 : index
    %122 = vector.load %arg10[%c0_67, %c0_68, %c0_69, %c0_70] : memref<1x16x16x32xf32, #tpu.memory_space<vmem>>, vector<1x16x16x32xf32>
    %123 = vector.shape_cast %122 : vector<1x16x16x32xf32> to vector<16x16x32xf32>
    %124 = vector.shape_cast %121 : vector<16x16x32xf32> to vector<1x16x16x32xf32>
    tpu.vector_store %arg10[%c0_67, %c0_68, %c0_69, %c0_70], %124 {strides = array<i32>} : memref<1x16x16x32xf32, #tpu.memory_space<vmem>>, vector<1x16x16x32xf32>,
    return
  }
  func.func @transform_0(%arg0: i32) -> (i32, i32, i32, i32) {
    %c0_i32 = arith.constant 0 : i32
    %c0_i32_0 = arith.constant 0 : i32
    %c0_i32_1 = arith.constant 0 : i32
    %c0_i32_2 = arith.constant 0 : i32
    return %arg0, %c0_i32, %c0_i32_0, %c0_i32_1 : i32, i32, i32, i32
  }
  func.func @transform_1(%arg0: i32) -> (i32, i32) {
    %c0_i32 = arith.constant 0 : i32
    %c0_i32_0 = arith.constant 0 : i32
    %c0_i32_1 = arith.constant 0 : i32
    return %c0_i32, %c0_i32_0 : i32, i32
  }
  func.func @transform_2(%arg0: i32) -> (i32, i32) {
    %c0_i32 = arith.constant 0 : i32
    %c0_i32_0 = arith.constant 0 : i32
    %c0_i32_1 = arith.constant 0 : i32
    return %c0_i32, %c0_i32_0 : i32, i32
  }
  func.func @transform_3(%arg0: i32) -> (i32, i32) {
    %c0_i32 = arith.constant 0 : i32
    %c0_i32_0 = arith.constant 0 : i32
    %c0_i32_1 = arith.constant 0 : i32
    return %c0_i32, %c0_i32_0 : i32, i32
  }
  func.func @transform_4(%arg0: i32) -> (i32, i32) {
    %c0_i32 = arith.constant 0 : i32
    %c0_i32_0 = arith.constant 0 : i32
    %c0_i32_1 = arith.constant 0 : i32
    return %c0_i32, %c0_i32_0 : i32, i32
  }
  func.func @transform_5(%arg0: i32) -> (i32, i32, i32) {
    %c0_i32 = arith.constant 0 : i32
    %c0_i32_0 = arith.constant 0 : i32
    %c0_i32_1 = arith.constant 0 : i32
    %c0_i32_2 = arith.constant 0 : i32
    return %c0_i32, %c0_i32_0, %c0_i32_1 : i32, i32, i32
  }
  func.func @transform_6(%arg0: i32) -> (i32, i32) {
    %c0_i32 = arith.constant 0 : i32
    %c0_i32_0 = arith.constant 0 : i32
    %c0_i32_1 = arith.constant 0 : i32
    return %c0_i32, %c0_i32_0 : i32, i32
  }
  func.func @transform_7(%arg0: i32) -> (i32, i32) {
    %c0_i32 = arith.constant 0 : i32
    %c0_i32_0 = arith.constant 0 : i32
    %c0_i32_1 = arith.constant 0 : i32
    return %c0_i32, %c0_i32_0 : i32, i32
  }
  func.func @transform_8(%arg0: i32) -> (i32, i32) {
    %c0_i32 = arith.constant 0 : i32
    %c0_i32_0 = arith.constant 0 : i32
    %c0_i32_1 = arith.constant 0 : i32
    return %c0_i32, %c0_i32_0 : i32, i32
  }
  func.func @transform_9(%arg0: i32) -> (i32, i32, i32, i32) {
    %c0_i32 = arith.constant 0 : i32
    %c0_i32_0 = arith.constant 0 : i32
    %c0_i32_1 = arith.constant 0 : i32
    %c0_i32_2 = arith.constant 0 : i32
    return %arg0, %c0_i32, %c0_i32_0, %c0_i32_1 : i32, i32, i32, i32
  }
}

</mosaic_0001>

<llo_original>
// kernel: sub.8
$region0: #{sub.8}
  %s0 = inlined_call_operand.vmem [shape: s32[2,8,8], index: 0, kind: input, shape index: {}]
  %s1 = inlined_call_operand.vmem [shape: s32[2,64], index: 1, kind: output, shape index: {}]
  $region1: #{sub.8} parent=0
    #allocation0 [shape = 'u8[4096]{0}', space=vmem, size = 0x1000, scoped, tag = 'scoped mem for output reshape']
    %s2 = smov 3
    %v3 = vld [vmem:[%s0] ss:$8 sm:%s2]
    %vm4 = vcmask 64512
    %5 = vst.msk [vmem:[#allocation0] sm:$0x3] %vm4, %v3
    %s6 = scalar_lea.vmem %s0, 7
    %s7 = smov 3
    %v8 = vld [vmem:[%s6] ss:$8 sm:%s7]
    %9 = vrot.lane.b32.xlu0 %v8, 56
    %v10 = vpop.permute.xlu0 %9
    %vm11 = vcmask 523712
    %12 = vst.msk [vmem:[#allocation0] sm:$0x3] %vm11, %v10
    %s13 = scalar_lea.vmem %s0, 6
    %s14 = smov 3
    %v15 = vld [vmem:[%s13] ss:$8 sm:%s14]
    %16 = vrot.lane.b32.xlu0 %v15, 48
    %v17 = vpop.permute.xlu0 %16
    %vm18 = vcmask 458112
    %19 = vst.msk [vmem:[#allocation0] sm:$0x3] %vm18, %v17
    %s20 = scalar_lea.vmem %s0, 5
    %s21 = smov 3
    %v22 = vld [vmem:[%s20] ss:$8 sm:%s21]
    %23 = vrot.lane.b32.xlu0 %v22, 40
    %v24 = vpop.permute.xlu0 %23
    %vm25 = vcmask 392512
    %26 = vst.msk [vmem:[#allocation0] sm:$0x3] %vm25, %v24
    %s27 = scalar_lea.vmem %s0, 4
    %s28 = smov 3
    %v29 = vld [vmem:[%s27] ss:$8 sm:%s28]
    %30 = vrot.lane.b32.xlu0 %v29, 32
    %v31 = vpop.permute.xlu0 %30
    %vm32 = vcmask 326912
    %33 = vst.msk [vmem:[#allocation0] sm:$0x3] %vm32, %v31
    %s34 = scalar_lea.vmem %s0, 3
    %s35 = smov 3
    %v36 = vld [vmem:[%s34] ss:$8 sm:%s35]
    %37 = vrot.lane.b32.xlu0 %v36, 24
    %v38 = vpop.permute.xlu0 %37
    %vm39 = vcmask 261312
    %40 = vst.msk [vmem:[#allocation0] sm:$0x3] %vm39, %v38
    %s41 = scalar_lea.vmem %s0, 2
    %s42 = smov 3
    %v43 = vld [vmem:[%s41] ss:$8 sm:%s42]
    %44 = vrot.lane.b32.xlu0 %v43, 16
    %v45 = vpop.permute.xlu0 %44
    %vm46 = vcmask 195712
    %47 = vst.msk [vmem:[#allocation0] sm:$0x3] %vm46, %v45
    %s48 = scalar_lea.vmem %s0, 1
    %s49 = smov 3
    %v50 = vld [vmem:[%s48] ss:$8 sm:%s49]
    %51 = vrot.lane.b32.xlu0 %v50, 8
    %v52 = vpop.permute.xlu0 %51
    %vm53 = vcmask 130112
    %54 = vst.msk [vmem:[#allocation0] sm:$0x3] %vm53, %v52
    %s56 = ssub.s32 4, 1
    %v57 = vld [vmem:[#allocation0] sm:%s56]
    %s59 = ssub.s32 4, 1
    %60 = vst [vmem:[%s1] sm:%s59] %v57

// kernel: _lambda_.2
$region0: #{_lambda_.2}
  #allocation0 [shape = 'u32[]', space=smem, size = 0x4, offset = 0x4, fixed_abs, tag = 'smem constant byte address 0x4 - core index']
  #allocation1 [shape = 'u32[72,128]{1,0:T(1,128)}', space=vmem, size = 0x9000, scoped, tag = 'internal scratch']
  %s0 = inlined_call_operand.vmem [shape: f32[2,16,16,32], index: 0, kind: input, shape index: {}]
  %s1 = inlined_call_operand.vmem [shape: f32[1,32], index: 1, kind: input, shape index: {}]
  %s2 = inlined_call_operand.vmem [shape: f32[1,32], index: 2, kind: input, shape index: {}]
  %s3 = inlined_call_operand.vmem [shape: f32[32,96], index: 3, kind: input, shape index: {}]
  %s4 = inlined_call_operand.vmem [shape: f32[1,96], index: 4, kind: input, shape index: {}]
  %s5 = inlined_call_operand.vmem [shape: f32[32,32], index: 5, kind: input, shape index: {}]
  %s6 = inlined_call_operand.vmem [shape: f32[1,32], index: 6, kind: input, shape index: {}]
  %s7 = inlined_call_operand.vmem [shape: f32[2,64,64], index: 7, kind: input, shape index: {}]
  %s8 = inlined_call_operand.vmem [shape: f32[2,16,16,32], index: 8, kind: output, shape index: {}]
  %s9 = sld [smem:[#allocation0]]
  $region137: #{_lambda_.2} parent=0
    _
  %s11 = ssub.s32 1, %s9
  %s12 = scalar_select 0, %s11, %s9
  $region1: #{_lambda_.2} parent=0
    #allocation2 [shape = 'u8[65536]{0}', space=vmem, size = 0x10000, scoped, tag = 'input window, operand 0']
    #allocation3 [shape = 'u8[65536]{0}', space=vmem, size = 0x10000, scoped, tag = 'output window, operand 0']
    loop: start=0, step=1, limit=10
    $region2: #{_lambda_.2} parent=1 // loop_pre_header
      _
    $region3: #{_lambda_.2} parent=1 // loop_header
      %s14 = sphi 0, %s18
      %p15 = scmp.ge.s32.totalorder %s14, 10
      %s21 = sphi 0, %s40
      %s22 = sphi 0, %s36
      %s23 = sphi 0, %s32
      %s24 = sphi 0, %s21
      %s25 = sphi 0, %s22
      %s26 = sphi 0, %s23
      %s27 = sphi 0, %s24
      %s28 = sphi 0, %s25
      %s29 = sphi 0, %s26
      %s47 = sphi 0, %s49
      %s50 = sphi 0, %s47
      %s51 = sphi 0, %s50
      %s67 = sphi 0, %s51
      %s71 = sphi 0, %s71
      %s73 = sphi 0, %s71
      %s74 = sphi 0, %s73
      %s88 = sphi 0, %s74
      %s92 = sphi 0, %s92
      %s94 = sphi 0, %s92
      %s95 = sphi 0, %s94
      %s109 = sphi 0, %s95
      %s113 = sphi 0, %s113
      %s115 = sphi 0, %s113
      %s116 = sphi 0, %s115
      %s130 = sphi 0, %s116
      %s134 = sphi 0, %s134
      %s136 = sphi 0, %s134
      %s137 = sphi 0, %s136
      %s151 = sphi 0, %s137
      %s155 = sphi 0, %s155
      %s157 = sphi 0, %s155
      %s158 = sphi 0, %s157
      %s172 = sphi 0, %s158
      %s176 = sphi 0, %s176
      %s178 = sphi 0, %s176
      %s179 = sphi 0, %s178
      %s193 = sphi 0, %s179
      %s197 = sphi 0, %s197
      %s199 = sphi 0, %s197
      %s200 = sphi 0, %s199
      %s214 = sphi 0, %s200
      %s224 = sphi 0, %s226
      %s227 = sphi 0, %s224
      %s228 = sphi 0, %s227
      %s244 = sphi 0, %s228
    $region4: #{_lambda_.2} parent=1 // loop_header_branch
      %17 = sbr.rel (%p15) target = $region8
    $region5: #{_lambda_.2} parent=1 // loop_body
      %s19 = ssub.s32 %s14, 1
      %s20 = ssub.s32 %s14, 2
      %s30 = sadd.s32 1, %s23
      %p31 = scmp.ge.s32.totalorder %s30, 2
      %s32 = scalar_select %p31, 0, %s30
      %s33 = sadd.s32 1, %s22
      %s34 = scalar_select %p31, %s33, %s22
      %p35 = scmp.ge.s32.totalorder %s34, 2
      %s36 = scalar_select %p35, 0, %s34
      %s37 = sadd.s32 1, %s21
      %s38 = scalar_select %p35, %s37, %s21
      %p39 = scmp.ge.s32.totalorder %s38, 2
      %s40 = scalar_select %p39, 0, %s38
      %s41 = ssub.s32 %s21, %s40
      %s42 = ssub.s32 %s22, %s36
      %s43 = sor.u32 %s41, %s42
      %s44 = ssub.s32 %s23, %s32
      %s45 = sor.u32 %s43, %s44
      %p46 = scmp.eq.s32.totalorder %s45, 0
      %s48 = sadd.s32 %s47, 1
      %s49 = scalar_select %p46, %s47, %s48
      %p52 = pneg %p46
      %p53 = scmp.eq.s32.totalorder %s14, 7
      %p54 = por %p52, %p53
      %p55 = scmp.ne.s32.totalorder %s47, %s50
      %p56 = scmp.eq.s32.totalorder %s14, 0
      %p57 = por %p55, %p56
      %p58 = scmp.ne.s32.totalorder %s47, %s50
      %p59 = scmp.eq.s32.totalorder %s19, 7
      %p60 = por %p58, %p59
      %p61 = scmp.ne.s32.totalorder %s50, %s51
      %p62 = scmp.eq.s32.totalorder %s19, 0
      %p63 = por %p61, %p62
      %p64 = scmp.ne.s32.totalorder %s50, %s51
      %p65 = scmp.eq.s32.totalorder %s20, 7
      %p66 = por %p64, %p65
      %p68 = scmp.ne.s32.totalorder %s51, %s67
      %p69 = scmp.eq.s32.totalorder %s20, 0
      %p70 = por %p68, %p69
      %s72 = sadd.s32 %s71, 1
      %p75 = scmp.eq.s32.totalorder %s14, 7
      %p76 = scmp.ne.s32.totalorder %s71, %s73
      %p77 = scmp.eq.s32.totalorder %s14, 0
      %p78 = por %p76, %p77
      %p79 = scmp.ne.s32.totalorder %s71, %s73
      %p80 = scmp.eq.s32.totalorder %s19, 7
      %p81 = por %p79, %p80
      %p82 = scmp.ne.s32.totalorder %s73, %s74
      %p83 = scmp.eq.s32.totalorder %s19, 0
      %p84 = por %p82, %p83
      %p85 = scmp.ne.s32.totalorder %s73, %s74
      %p86 = scmp.eq.s32.totalorder %s20, 7
      %p87 = por %p85, %p86
      %p89 = scmp.ne.s32.totalorder %s74, %s88
      %p90 = scmp.eq.s32.totalorder %s20, 0
      %p91 = por %p89, %p90
      %s93 = sadd.s32 %s92, 1
      %p96 = scmp.eq.s32.totalorder %s14, 7
      %p97 = scmp.ne.s32.totalorder %s92, %s94
      %p98 = scmp.eq.s32.totalorder %s14, 0
      %p99 = por %p97, %p98
      %p100 = scmp.ne.s32.totalorder %s92, %s94
      %p101 = scmp.eq.s32.totalorder %s19, 7
      %p102 = por %p100, %p101
      %p103 = scmp.ne.s32.totalorder %s94, %s95
      %p104 = scmp.eq.s32.totalorder %s19, 0
      %p105 = por %p103, %p104
      %p106 = scmp.ne.s32.totalorder %s94, %s95
      %p107 = scmp.eq.s32.totalorder %s20, 7
      %p108 = por %p106, %p107
      %p110 = scmp.ne.s32.totalorder %s95, %s109
      %p111 = scmp.eq.s32.totalorder %s20, 0
      %p112 = por %p110, %p111
      %s114 = sadd.s32 %s113, 1
      %p117 = scmp.eq.s32.totalorder %s14, 7
      %p118 = scmp.ne.s32.totalorder %s113, %s115
      %p119 = scmp.eq.s32.totalorder %s14, 0
      %p120 = por %p118, %p119
      %p121 = scmp.ne.s32.totalorder %s113, %s115
      %p122 = scmp.eq.s32.totalorder %s19, 7
      %p123 = por %p121, %p122
      %p124 = scmp.ne.s32.totalorder %s115, %s116
      %p125 = scmp.eq.s32.totalorder %s19, 0
      %p126 = por %p124, %p125
      %p127 = scmp.ne.s32.totalorder %s115, %s116
      %p128 = scmp.eq.s32.totalorder %s20, 7
      %p129 = por %p127, %p128
      %p131 = scmp.ne.s32.totalorder %s116, %s130
      %p132 = scmp.eq.s32.totalorder %s20, 0
      %p133 = por %p131, %p132
      %s135 = sadd.s32 %s134, 1
      %p138 = scmp.eq.s32.totalorder %s14, 7
      %p139 = scmp.ne.s32.totalorder %s134, %s136
      %p140 = scmp.eq.s32.totalorder %s14, 0
      %p141 = por %p139, %p140
      %p142 = scmp.ne.s32.totalorder %s134, %s136
      %p143 = scmp.eq.s32.totalorder %s19, 7
      %p144 = por %p142, %p143
      %p145 = scmp.ne.s32.totalorder %s136, %s137
      %p146 = scmp.eq.s32.totalorder %s19, 0
      %p147 = por %p145, %p146
      %p148 = scmp.ne.s32.totalorder %s136, %s137
      %p149 = scmp.eq.s32.totalorder %s20, 7
      %p150 = por %p148, %p149
      %p152 = scmp.ne.s32.totalorder %s137, %s151
      %p153 = scmp.eq.s32.totalorder %s20, 0
      %p154 = por %p152, %p153
      %s156 = sadd.s32 %s155, 1
      %p159 = scmp.eq.s32.totalorder %s14, 7
      %p160 = scmp.ne.s32.totalorder %s155, %s157
      %p161 = scmp.eq.s32.totalorder %s14, 0
      %p162 = por %p160, %p161
      %p163 = scmp.ne.s32.totalorder %s155, %s157
      %p164 = scmp.eq.s32.totalorder %s19, 7
      %p165 = por %p163, %p164
      %p166 = scmp.ne.s32.totalorder %s157, %s158
      %p167 = scmp.eq.s32.totalorder %s19, 0
      %p168 = por %p166, %p167
      %p169 = scmp.ne.s32.totalorder %s157, %s158
      %p170 = scmp.eq.s32.totalorder %s20, 7
      %p171 = por %p169, %p170
      %p173 = scmp.ne.s32.totalorder %s158, %s172
      %p174 = scmp.eq.s32.totalorder %s20, 0
      %p175 = por %p173, %p174
      %s177 = sadd.s32 %s176, 1
      %p180 = scmp.eq.s32.totalorder %s14, 7
      %p181 = scmp.ne.s32.totalorder %s176, %s178
      %p182 = scmp.eq.s32.totalorder %s14, 0
      %p183 = por %p181, %p182
      %p184 = scmp.ne.s32.totalorder %s176, %s178
      %p185 = scmp.eq.s32.totalorder %s19, 7
      %p186 = por %p184, %p185
      %p187 = scmp.ne.s32.totalorder %s178, %s179
      %p188 = scmp.eq.s32.totalorder %s19, 0
      %p189 = por %p187, %p188
      %p190 = scmp.ne.s32.totalorder %s178, %s179
      %p191 = scmp.eq.s32.totalorder %s20, 7
      %p192 = por %p190, %p191
      %p194 = scmp.ne.s32.totalorder %s179, %s193
      %p195 = scmp.eq.s32.totalorder %s20, 0
      %p196 = por %p194, %p195
      %s198 = sadd.s32 %s197, 1
      %p201 = scmp.eq.s32.totalorder %s14, 7
      %p202 = scmp.ne.s32.totalorder %s197, %s199
      %p203 = scmp.eq.s32.totalorder %s14, 0
      %p204 = por %p202, %p203
      %p205 = scmp.ne.s32.totalorder %s197, %s199
      %p206 = scmp.eq.s32.totalorder %s19, 7
      %p207 = por %p205, %p206
      %p208 = scmp.ne.s32.totalorder %s199, %s200
      %p209 = scmp.eq.s32.totalorder %s19, 0
      %p210 = por %p208, %p209
      %p211 = scmp.ne.s32.totalorder %s199, %s200
      %p212 = scmp.eq.s32.totalorder %s20, 7
      %p213 = por %p211, %p212
      %p215 = scmp.ne.s32.totalorder %s200, %s214
      %p216 = scmp.eq.s32.totalorder %s20, 0
      %p217 = por %p215, %p216
      %s218 = ssub.s32 %s21, %s40
      %s219 = ssub.s32 %s22, %s36
      %s220 = sor.u32 %s218, %s219
      %s221 = ssub.s32 %s23, %s32
      %s222 = sor.u32 %s220, %s221
      %p223 = scmp.eq.s32.totalorder %s222, 0
      %s225 = sadd.s32 %s224, 1
      %s226 = scalar_select %p223, %s224, %s225
      %p229 = pneg %p223
      %p230 = scmp.eq.s32.totalorder %s14, 7
      %p231 = por %p229, %p230
      %p232 = scmp.ne.s32.totalorder %s224, %s227
      %p233 = scmp.eq.s32.totalorder %s14, 0
      %p234 = por %p232, %p233
      %p235 = scmp.ne.s32.totalorder %s224, %s227
      %p236 = scmp.eq.s32.totalorder %s19, 7
      %p237 = por %p235, %p236
      %p238 = scmp.ne.s32.totalorder %s227, %s228
      %p239 = scmp.eq.s32.totalorder %s19, 0
      %p240 = por %p238, %p239
      %p241 = scmp.ne.s32.totalorder %s227, %s228
      %p242 = scmp.eq.s32.totalorder %s20, 7
      %p243 = por %p241, %p242
      %p245 = scmp.ne.s32.totalorder %s228, %s244
      %p246 = scmp.eq.s32.totalorder %s20, 0
      %p247 = por %p245, %p246
      %p248 = scmp.le.s32.totalorder 1, %s14
      %p249 = scmp.lt.s32.totalorder %s14, 9
      %p250 = pnand %p248, %p249
      %p251 = pneg %p250
      // Predicated region
      $region9: #{_lambda_.2} parent=5 // pred_check
        _
      $region10: #{_lambda_.2} parent=5 // pred_check_branch
        %253 = sbr.rel (%p250) target = $region12
      $region11: #{_lambda_.2} parent=5 // pred_region
        %s254 = ssub.s32 %s14, 1
        // Predicated region
        $region13: #{_lambda_.2} parent=11 // pred_check
          %p255 = pneg %p84
        $region14: #{_lambda_.2} parent=11 // pred_check_branch
          %257 = sbr.rel (%p255) target = $region16
        $region15: #{_lambda_.2} parent=11 // pred_region
          _
        $region16: #{_lambda_.2} parent=11 // pred_fallthru
          _
        // Predicated region
        $region17: #{_lambda_.2} parent=11 // pred_check
          %p258 = pneg %p105
        $region18: #{_lambda_.2} parent=11 // pred_check_branch
          %260 = sbr.rel (%p258) target = $region20
        $region19: #{_lambda_.2} parent=11 // pred_region
          _
        $region20: #{_lambda_.2} parent=11 // pred_fallthru
          _
        // Predicated region
        $region21: #{_lambda_.2} parent=11 // pred_check
          %p261 = pneg %p126
        $region22: #{_lambda_.2} parent=11 // pred_check_branch
          %263 = sbr.rel (%p261) target = $region24
        $region23: #{_lambda_.2} parent=11 // pred_region
          _
        $region24: #{_lambda_.2} parent=11 // pred_fallthru
          _
        // Predicated region
        $region25: #{_lambda_.2} parent=11 // pred_check
          %p264 = pneg %p147
        $region26: #{_lambda_.2} parent=11 // pred_check_branch
          %266 = sbr.rel (%p264) target = $region28
        $region27: #{_lambda_.2} parent=11 // pred_region
          _
        $region28: #{_lambda_.2} parent=11 // pred_fallthru
          _
        // Predicated region
        $region29: #{_lambda_.2} parent=11 // pred_check
          %p267 = pneg %p168
        $region30: #{_lambda_.2} parent=11 // pred_check_branch
          %269 = sbr.rel (%p267) target = $region32
        $region31: #{_lambda_.2} parent=11 // pred_region
          _
        $region32: #{_lambda_.2} parent=11 // pred_fallthru
          _
        // Predicated region
        $region33: #{_lambda_.2} parent=11 // pred_check
          %p270 = pneg %p189
        $region34: #{_lambda_.2} parent=11 // pred_check_branch
          %272 = sbr.rel (%p270) target = $region36
        $region35: #{_lambda_.2} parent=11 // pred_region
          _
        $region36: #{_lambda_.2} parent=11 // pred_fallthru
          _
        // Predicated region
        $region37: #{_lambda_.2} parent=11 // pred_check
          %p273 = pneg %p210
        $region38: #{_lambda_.2} parent=11 // pred_check_branch
          %275 = sbr.rel (%p273) target = $region40
        $region39: #{_lambda_.2} parent=11 // pred_region
          _
        $region40: #{_lambda_.2} parent=11 // pred_fallthru
          _
      $region12: #{_lambda_.2} parent=5 // pred_fallthru
        _
      %p276 = scmp.lt.s32.totalorder %s14, 8
      // Predicated region
      $region41: #{_lambda_.2} parent=5 // pred_check
        %p277 = pneg %p276
      $region42: #{_lambda_.2} parent=5 // pred_check_branch
        %279 = sbr.rel (%p277) target = $region44
      $region43: #{_lambda_.2} parent=5 // pred_region
        // Predicated region
        $region45: #{_lambda_.2} parent=43 // pred_check
          %p280 = pneg %p57
        $region46: #{_lambda_.2} parent=43 // pred_check_branch
          %282 = sbr.rel (%p280) target = $region48
        $region47: #{_lambda_.2} parent=43 // pred_region
          %s283 = sand.u32 %s47, 1
          %s284 = sand.u32 %s47, 1
          %s285 = smul.addr %s284, 64
          %s286 = scalar_lea.vmem [#allocation2], %s285
          %s287 = smul.u32 8, %s22
          %s288 = smul.addr %s287, 2
          %s289 = sadd.s32 %s23, %s288
          %s290 = smul.addr %s21, 32
          %s291 = sadd.s32 %s289, %s290
          %s292 = smul.addr %s291, 8
          %s293 = scalar_lea.vmem %s0, %s292
          // Predicated region
          $region49: #{_lambda_.2} parent=47 // pred_check
            _
          $region50: #{_lambda_.2} parent=47 // pred_check_branch
            %295 = sbr.rel (0) target = $region52
          $region51: #{_lambda_.2} parent=47 // pred_region
            // Predicated region
            $region53: #{_lambda_.2} parent=51 // pred_check
              _
            $region54: #{_lambda_.2} parent=51 // pred_check_branch
              %297 = sbr.rel (0) target = $region56
            $region55: #{_lambda_.2} parent=51 // pred_region
              // Predicated region
              $region68: #{_lambda_.2} parent=55 // pred_check
                _
              $region69: #{_lambda_.2} parent=55 // pred_check_branch
                %327 = sbr.rel (0) target = $region71
              $region70: #{_lambda_.2} parent=55 // pred_region
                loop: start=0, step=1, limit=1
                $region72: #{_lambda_.2} parent=70 // loop_pre_header
                  _
                $region73: #{_lambda_.2} parent=70 // loop_header
                  %s329 = sphi 0, %s333
                  %p330 = scmp.ge.s32.totalorder %s329, 1
                  %s334 = sphi %s293, %s293
                  %s335 = sphi %s286, %s286
                $region74: #{_lambda_.2} parent=70 // loop_header_branch
                  %332 = sbr.rel (%p330) target = $region78
                $region75: #{_lambda_.2} parent=70 // loop_body
                  %v336 = vld [vmem:[%s334] sm:$0xff]
                  %337 = vst [vmem:[%s335] sm:$0xff] %v336
                  %v338 = vld [vmem:[%s334 + $0x10] sm:$0xff]
                  %339 = vst [vmem:[%s335 + $0x8] sm:$0xff] %v338
                  %v340 = vld [vmem:[%s334 + $0x20] sm:$0xff]
                  %341 = vst [vmem:[%s335 + $0x10] sm:$0xff] %v340
                  %v342 = vld [vmem:[%s334 + $0x30] sm:$0xff]
                  %343 = vst [vmem:[%s335 + $0x18] sm:$0xff] %v342
                  %v344 = vld [vmem:[%s334 + $0x40] sm:$0xff]
                  %345 = vst [vmem:[%s335 + $0x20] sm:$0xff] %v344
                  %v346 = vld [vmem:[%s334 + $0x50] sm:$0xff]
                  %347 = vst [vmem:[%s335 + $0x28] sm:$0xff] %v346
                  %v348 = vld [vmem:[%s334 + $0x60] sm:$0xff]
                  %349 = vst [vmem:[%s335 + $0x30] sm:$0xff] %v348
                  %v350 = vld [vmem:[%s334 + $0x70] sm:$0xff]
                  %351 = vst [vmem:[%s335 + $0x38] sm:$0xff] %v350
                $region76: #{_lambda_.2} parent=70 // loop_footer
                  %s333 = sadd.s32 1, %s329
                $region77: #{_lambda_.2} parent=70 // loop_footer_branch
                  %328 = sbr.rel target = $region73
                $region78: #{_lambda_.2} parent=70 // loop_exit
                  _
              $region71: #{_lambda_.2} parent=55 // pred_fallthru
                _
              // Predicated region
              $region79: #{_lambda_.2} parent=55 // pred_check
                _
              $region80: #{_lambda_.2} parent=55 // pred_check_branch
                %353 = sbr.rel target = $region82
              $region81: #{_lambda_.2} parent=55 // pred_region
                _
              $region82: #{_lambda_.2} parent=55 // pred_fallthru
                _
            $region56: #{_lambda_.2} parent=51 // pred_fallthru
              _
            // Predicated region
            $region57: #{_lambda_.2} parent=51 // pred_check
              _
            $region58: #{_lambda_.2} parent=51 // pred_check_branch
              %299 = sbr.rel target = $region60
            $region59: #{_lambda_.2} parent=51 // pred_region
              %s301 = ssub.s32 256, 1
              loop: start=0, step=1, limit=1
              $region61: #{_lambda_.2} parent=59 // loop_pre_header
                _
              $region62: #{_lambda_.2} parent=59 // loop_header
                %s303 = sphi 0, %s307
                %p304 = scmp.ge.s32.totalorder %s303, 1
                %s308 = sphi %s293, %s293
                %s309 = sphi %s286, %s286
              $region63: #{_lambda_.2} parent=59 // loop_header_branch
                %306 = sbr.rel (%p304) target = $region67
              $region64: #{_lambda_.2} parent=59 // loop_body
                %v310 = vld [vmem:[%s308] sm:%s301]
                %311 = vst [vmem:[%s309] sm:%s301] %v310
                %v312 = vld [vmem:[%s308 + $0x10] sm:%s301]
                %313 = vst [vmem:[%s309 + $0x8] sm:%s301] %v312
                %v314 = vld [vmem:[%s308 + $0x20] sm:%s301]
                %315 = vst [vmem:[%s309 + $0x10] sm:%s301] %v314
                %v316 = vld [vmem:[%s308 + $0x30] sm:%s301]
                %317 = vst [vmem:[%s309 + $0x18] sm:%s301] %v316
                %v318 = vld [vmem:[%s308 + $0x40] sm:%s301]
                %319 = vst [vmem:[%s309 + $0x20] sm:%s301] %v318
                %v320 = vld [vmem:[%s308 + $0x50] sm:%s301]
                %321 = vst [vmem:[%s309 + $0x28] sm:%s301] %v320
                %v322 = vld [vmem:[%s308 + $0x60] sm:%s301]
                %323 = vst [vmem:[%s309 + $0x30] sm:%s301] %v322
                %v324 = vld [vmem:[%s308 + $0x70] sm:%s301]
                %325 = vst [vmem:[%s309 + $0x38] sm:%s301] %v324
              $region65: #{_lambda_.2} parent=59 // loop_footer
                %s307 = sadd.s32 1, %s303
              $region66: #{_lambda_.2} parent=59 // loop_footer_branch
                %302 = sbr.rel target = $region62
              $region67: #{_lambda_.2} parent=59 // loop_exit
                _
            $region60: #{_lambda_.2} parent=51 // pred_fallthru
              _
          $region52: #{_lambda_.2} parent=47 // pred_fallthru
            _
          %354 = vnop
        $region48: #{_lambda_.2} parent=43 // pred_fallthru
          _
      $region44: #{_lambda_.2} parent=5 // pred_fallthru
        _
      %p355 = scmp.le.s32.totalorder 1, %s14
      %p356 = scmp.lt.s32.totalorder %s14, 9
      %p357 = pnand %p355, %p356
      %p358 = pneg %p357
      // Predicated region
      $region83: #{_lambda_.2} parent=5 // pred_check
        _
      $region84: #{_lambda_.2} parent=5 // pred_check_branch
        %360 = sbr.rel (%p357) target = $region86
      $region85: #{_lambda_.2} parent=5 // pred_region
        %s361 = ssub.s32 %s14, 1
        %s362 = sand.u32 %s50, 1
        %s363 = sand.u32 %s50, 1
        %s364 = smul.addr %s363, 64
        %s365 = scalar_lea.vmem [#allocation2], %s364
        // Predicated region
        $region87: #{_lambda_.2} parent=85 // pred_check
          %p366 = pneg %p63
        $region88: #{_lambda_.2} parent=85 // pred_check_branch
          %368 = sbr.rel (%p366) target = $region90
        $region89: #{_lambda_.2} parent=85 // pred_region
          _
        $region90: #{_lambda_.2} parent=85 // pred_fallthru
          _
        %s369 = sand.u32 %s50, 1
        %s370 = sand.u32 %s50, 1
        %s371 = smul.addr %s370, 64
        %s372 = scalar_lea.vmem [#allocation2], %s371
        %p373 = pneg %p63
        %p374 = pneg %p60
        %p375 = pneg %p84
        %p376 = pneg %p81
        %p377 = pneg %p105
        %p378 = pneg %p102
        %p379 = pneg %p126
        %p380 = pneg %p123
        %p381 = pneg %p147
        %p382 = pneg %p144
        %p383 = pneg %p168
        %p384 = pneg %p165
        %p385 = pneg %p189
        %p386 = pneg %p186
        %p387 = pneg %p210
        %p388 = pneg %p207
        %p389 = pneg %p240
        %p390 = pneg %p237
        %s391 = sand.u32 %s227, 1
        %s392 = sand.u32 %s227, 1
        %s393 = smul.addr %s392, 64
        %s394 = scalar_lea.vmem [#allocation3], %s393
        %s395 = smul.u32 8, %s25
        %s396 = smul.u32 8, %s25
        %v397 = vld [vmem:[%s365] sm:$0xff]
        %v398 = vld [vmem:[%s365 + $0x8] sm:$0xff]
        %v399 = vld [vmem:[%s365 + $0x10] sm:$0xff]
        %v400 = vld [vmem:[%s365 + $0x18] sm:$0xff]
        %v401 = vld [vmem:[%s365 + $0x20] sm:$0xff]
        %v402 = vld [vmem:[%s365 + $0x28] sm:$0xff]
        %v403 = vld [vmem:[%s365 + $0x30] sm:$0xff]
        %v404 = vld [vmem:[%s365 + $0x38] sm:$0xff]
        %v405 = vld [vmem:[%s1] sm:$0x1]
        %v406 = vld [vmem:[%s2] sm:$0x1]
        %vm407 = vcmask 261120
        %v408 = vsel %vm407, %v397, 0.0
        %409 = vadd.xlane.f32.xlu0 %v408
        %v410 = vpop.xlane.xlu0 %409
        %v411 = vsel %vm407, %v398, 0.0
        %412 = vadd.xlane.f32.xlu0 %v411
        %v413 = vpop.xlane.xlu0 %412
        %v414 = vsel %vm407, %v399, 0.0
        %415 = vadd.xlane.f32.xlu0 %v414
        %v416 = vpop.xlane.xlu0 %415
        %v417 = vsel %vm407, %v400, 0.0
        %418 = vadd.xlane.f32.xlu0 %v417
        %v419 = vpop.xlane.xlu0 %418
        %v420 = vsel %vm407, %v401, 0.0
        %421 = vadd.xlane.f32.xlu0 %v420
        %v422 = vpop.xlane.xlu0 %421
        %v423 = vsel %vm407, %v402, 0.0
        %424 = vadd.xlane.f32.xlu0 %v423
        %v425 = vpop.xlane.xlu0 %424
        %v426 = vsel %vm407, %v403, 0.0
        %427 = vadd.xlane.f32.xlu0 %v426
        %v428 = vpop.xlane.xlu0 %427
        %v429 = vsel %vm407, %v404, 0.0
        %430 = vadd.xlane.f32.xlu0 %v429
        %v431 = vpop.xlane.xlu0 %430
        %v432 = vrcp.pop 32.0
        %v433 = vmul.f32 32.0, %v432
        %v434 = vsub.f32 1.0, %v433
        %v435 = vmul.f32 %v432, %v434
        %v436 = vadd.f32 %v432, %v435
        %vm437 = vweird.f32 %v432
        %v438 = vsel %vm437, %v432, %v436
        %v439 = vmul.f32 %v410, %v438
        %v440 = vmul.f32 %v413, %v438
        %v441 = vmul.f32 %v416, %v438
        %v442 = vmul.f32 %v419, %v438
        %v443 = vmul.f32 %v422, %v438
        %v444 = vmul.f32 %v425, %v438
        %v445 = vmul.f32 %v428, %v438
        %v446 = vmul.f32 %v431, %v438
        %v447 = vsub.f32 %v397, %v439
        %v448 = vsub.f32 %v398, %v440
        %v449 = vsub.f32 %v399, %v441
        %v450 = vsub.f32 %v400, %v442
        %v451 = vsub.f32 %v401, %v443
        %v452 = vsub.f32 %v402, %v444
        %v453 = vsub.f32 %v403, %v445
        %v454 = vsub.f32 %v404, %v446
        %v455 = vmul.f32 %v447, %v447
        %v456 = vmul.f32 %v448, %v448
        %v457 = vmul.f32 %v449, %v449
        %v458 = vmul.f32 %v450, %v450
        %v459 = vmul.f32 %v451, %v451
        %v460 = vmul.f32 %v452, %v452
        %v461 = vmul.f32 %v453, %v453
        %v462 = vmul.f32 %v454, %v454
        %v463 = vsel %vm407, %v455, 0.0
        %464 = vadd.xlane.f32.xlu0 %v463
        %v465 = vpop.xlane.xlu0 %464
        %v466 = vsel %vm407, %v456, 0.0
        %467 = vadd.xlane.f32.xlu0 %v466
        %v468 = vpop.xlane.xlu0 %467
        %v469 = vsel %vm407, %v457, 0.0
        %470 = vadd.xlane.f32.xlu0 %v469
        %v471 = vpop.xlane.xlu0 %470
        %v472 = vsel %vm407, %v458, 0.0
        %473 = vadd.xlane.f32.xlu0 %v472
        %v474 = vpop.xlane.xlu0 %473
        %v475 = vsel %vm407, %v459, 0.0
        %476 = vadd.xlane.f32.xlu0 %v475
        %v477 = vpop.xlane.xlu0 %476
        %v478 = vsel %vm407, %v460, 0.0
        %479 = vadd.xlane.f32.xlu0 %v478
        %v480 = vpop.xlane.xlu0 %479
        %v481 = vsel %vm407, %v461, 0.0
        %482 = vadd.xlane.f32.xlu0 %v481
        %v483 = vpop.xlane.xlu0 %482
        %v484 = vsel %vm407, %v462, 0.0
        %485 = vadd.xlane.f32.xlu0 %v484
        %v486 = vpop.xlane.xlu0 %485
        %v487 = vmul.f32 %v465, %v438
        %v488 = vmul.f32 %v468, %v438
        %v489 = vmul.f32 %v471, %v438
        %v490 = vmul.f32 %v474, %v438
        %v491 = vmul.f32 %v477, %v438
        %v492 = vmul.f32 %v480, %v438
        %v493 = vmul.f32 %v483, %v438
        %v494 = vmul.f32 %v486, %v438
        %v495 = vadd.f32 %v487, 1e-05
        %v496 = vadd.f32 %v488, 1e-05
        %v497 = vadd.f32 %v489, 1e-05
        %v498 = vadd.f32 %v490, 1e-05
        %v499 = vadd.f32 %v491, 1e-05
        %v500 = vadd.f32 %v492, 1e-05
        %v501 = vadd.f32 %v493, 1e-05
        %v502 = vadd.f32 %v494, 1e-05
        %v503 = vrsqrt.pop %v495
        %v504 = vmul.f32 %v503, %v495
        %v505 = vmul.f32 %v504, %v503
        %v506 = vmul.f32 0.5, %v505
        %v507 = vsub.f32 1.5, %v506
        %v508 = vmul.f32 %v503, %v507
        %vm509 = vweird.f32 %v495
        %vm510 = vweird.f32 %v503
        %vm511 = vmor %vm509, %vm510
        %v512 = vsel %vm511, %v503, %v508
        %v513 = vrsqrt.pop %v496
        %v514 = vmul.f32 %v513, %v496
        %v515 = vmul.f32 %v514, %v513
        %v516 = vmul.f32 0.5, %v515
        %v517 = vsub.f32 1.5, %v516
        %v518 = vmul.f32 %v513, %v517
        %vm519 = vweird.f32 %v496
        %vm520 = vweird.f32 %v513
        %vm521 = vmor %vm519, %vm520
        %v522 = vsel %vm521, %v513, %v518
        %v523 = vrsqrt.pop %v497
        %v524 = vmul.f32 %v523, %v497
        %v525 = vmul.f32 %v524, %v523
        %v526 = vmul.f32 0.5, %v525
        %v527 = vsub.f32 1.5, %v526
        %v528 = vmul.f32 %v523, %v527
        %vm529 = vweird.f32 %v497
        %vm530 = vweird.f32 %v523
        %vm531 = vmor %vm529, %vm530
        %v532 = vsel %vm531, %v523, %v528
        %v533 = vrsqrt.pop %v498
        %v534 = vmul.f32 %v533, %v498
        %v535 = vmul.f32 %v534, %v533
        %v536 = vmul.f32 0.5, %v535
        %v537 = vsub.f32 1.5, %v536
        %v538 = vmul.f32 %v533, %v537
        %vm539 = vweird.f32 %v498
        %vm540 = vweird.f32 %v533
        %vm541 = vmor %vm539, %vm540
        %v542 = vsel %vm541, %v533, %v538
        %v543 = vrsqrt.pop %v499
        %v544 = vmul.f32 %v543, %v499
        %v545 = vmul.f32 %v544, %v543
        %v546 = vmul.f32 0.5, %v545
        %v547 = vsub.f32 1.5, %v546
        %v548 = vmul.f32 %v543, %v547
        %vm549 = vweird.f32 %v499
        %vm550 = vweird.f32 %v543
        %vm551 = vmor %vm549, %vm550
        %v552 = vsel %vm551, %v543, %v548
        %v553 = vrsqrt.pop %v500
        %v554 = vmul.f32 %v553, %v500
        %v555 = vmul.f32 %v554, %v553
        %v556 = vmul.f32 0.5, %v555
        %v557 = vsub.f32 1.5, %v556
        %v558 = vmul.f32 %v553, %v557
        %vm559 = vweird.f32 %v500
        %vm560 = vweird.f32 %v553
        %vm561 = vmor %vm559, %vm560
        %v562 = vsel %vm561, %v553, %v558
        %v563 = vrsqrt.pop %v501
        %v564 = vmul.f32 %v563, %v501
        %v565 = vmul.f32 %v564, %v563
        %v566 = vmul.f32 0.5, %v565
        %v567 = vsub.f32 1.5, %v566
        %v568 = vmul.f32 %v563, %v567
        %vm569 = vweird.f32 %v501
        %vm570 = vweird.f32 %v563
        %vm571 = vmor %vm569, %vm570
        %v572 = vsel %vm571, %v563, %v568
        %v573 = vrsqrt.pop %v502
        %v574 = vmul.f32 %v573, %v502
        %v575 = vmul.f32 %v574, %v573
        %v576 = vmul.f32 0.5, %v575
        %v577 = vsub.f32 1.5, %v576
        %v578 = vmul.f32 %v573, %v577
        %vm579 = vweird.f32 %v502
        %vm580 = vweird.f32 %v573
        %vm581 = vmor %vm579, %vm580
        %v582 = vsel %vm581, %v573, %v578
        %v583 = vmul.f32 %v447, %v512
        %v584 = vmul.f32 %v448, %v522
        %v585 = vmul.f32 %v449, %v532
        %v586 = vmul.f32 %v450, %v542
        %v587 = vmul.f32 %v451, %v552
        %v588 = vmul.f32 %v452, %v562
        %v589 = vmul.f32 %v453, %v572
        %v590 = vmul.f32 %v454, %v582
        %v592 = vperm.slane %v405, 0
        %v594 = vmul.f32 %v583, %v592
        %v595 = vmul.f32 %v584, %v592
        %v596 = vmul.f32 %v585, %v592
        %v597 = vmul.f32 %v586, %v592
        %v598 = vmul.f32 %v587, %v592
        %v599 = vmul.f32 %v588, %v592
        %v600 = vmul.f32 %v589, %v592
        %v601 = vmul.f32 %v590, %v592
        %v603 = vperm.slane %v406, 0
        %v605 = vadd.f32 %v594, %v603
        %v606 = vadd.f32 %v595, %v603
        %v607 = vadd.f32 %v596, %v603
        %v608 = vadd.f32 %v597, %v603
        %v609 = vadd.f32 %v598, %v603
        %v610 = vadd.f32 %v599, %v603
        %v611 = vadd.f32 %v600, %v603
        %v612 = vadd.f32 %v601, %v603
        %v613 = vld [vmem:[%s3] sm:$0xff]
        %v614 = vld [vmem:[%s3 + $0x8] sm:$0xff]
        %v615 = vld [vmem:[%s3 + $0x10] sm:$0xff]
        %v616 = vld [vmem:[%s3 + $0x18] sm:$0xff]
        %v617 = vld [vmem:[%s4] sm:$0x1]
        %v619 = vperm.slane %v617, 0
        %v622 = vsel %vm407, %v605, 0
        %v625 = vsel %vm407, %v606, 0
        %v628 = vsel %vm407, %v607, 0
        %v631 = vsel %vm407, %v608, 0
        %v634 = vsel %vm407, %v609, 0
        %v637 = vsel %vm407, %v610, 0
        %v640 = vsel %vm407, %v611, 0
        %v643 = vsel %vm407, %v612, 0
        %645 = vmatpush.msra.mxu0 0.0
        %646 = vmatpush.msra.mxu0 0.0
        %647 = vmatpush.msra.mxu0 0.0
        %648 = vmatpush.msra.mxu0 0.0
        %649 = vmatpush.msra.mxu0 0.0
        %650 = vmatpush.msra.mxu0 0.0
        %651 = vmatpush.msra.mxu0 0.0
        %652 = vmatpush.msra.mxu0 0.0
        %653 = vmatpush.msra.mxu0 0.0
        %654 = vmatpush.msra.mxu0 0.0
        %655 = vmatpush.msra.mxu0 0.0
        %656 = vmatpush.msra.mxu0 0.0
        %657 = vmatpush.msra.mxu0 %v616
        %658 = vmatpush.msra.mxu0 %v615
        %659 = vmatpush.msra.mxu0 %v614
        %660 = vmatpush.msra.mxu0 %v613
        %661 = vmatmul.f32.gmra.mxu0 %v622
        %v662 = vpop.f32.mrf.mxu0
        %v663 = vadd.f32 %v619, %v662
        %664 = vmatmul.f32.gmra.mxu0 %v625
        %v665 = vpop.f32.mrf.mxu0
        %v666 = vadd.f32 %v619, %v665
        %667 = vmatmul.f32.gmra.mxu0 %v628
        %v668 = vpop.f32.mrf.mxu0
        %v669 = vadd.f32 %v619, %v668
        %670 = vmatmul.f32.gmra.mxu0 %v631
        %v671 = vpop.f32.mrf.mxu0
        %v672 = vadd.f32 %v619, %v671
        %673 = vmatmul.f32.gmra.mxu0 %v634
        %v674 = vpop.f32.mrf.mxu0
        %v675 = vadd.f32 %v619, %v674
        %676 = vmatmul.f32.gmra.mxu0 %v637
        %v677 = vpop.f32.mrf.mxu0
        %v678 = vadd.f32 %v619, %v677
        %679 = vmatmul.f32.gmra.mxu0 %v640
        %v680 = vpop.f32.mrf.mxu0
        %v681 = vadd.f32 %v619, %v680
        %682 = vmatmul.f32.gmra.mxu0 %v643
        %v683 = vpop.f32.mrf.mxu0
        %v684 = vadd.f32 %v619, %v683
        %685 = vdwg.mxu0
        %v686 = vmul.f32 %v663, 0.25
        %v687 = vmul.f32 %v666, 0.25
        %v688 = vmul.f32 %v669, 0.25
        %v689 = vmul.f32 %v672, 0.25
        %v690 = vmul.f32 %v675, 0.25
        %v691 = vmul.f32 %v678, 0.25
        %v692 = vmul.f32 %v681, 0.25
        %v693 = vmul.f32 %v684, 0.25
        %v694 = vld [vmem:[%s7] sm:$0xff]
        %v695 = vld [vmem:[%s7 + $0x8] sm:$0xff]
        %v696 = vld [vmem:[%s7 + $0x10] sm:$0xff]
        %v697 = vld [vmem:[%s7 + $0x18] sm:$0xff]
        %v698 = vld [vmem:[%s7 + $0x20] sm:$0xff]
        %v699 = vld [vmem:[%s7 + $0x28] sm:$0xff]
        %v700 = vld [vmem:[%s7 + $0x30] sm:$0xff]
        %v701 = vld [vmem:[%s7 + $0x38] sm:$0xff]
        %710 = vrot.lane.b32.xlu0 %v663, 96
        %v711 = vpop.permute.xlu0 %710
        %712 = vrot.lane.b32.xlu0 %v666, 96
        %v713 = vpop.permute.xlu0 %712
        %714 = vrot.lane.b32.xlu0 %v669, 96
        %v715 = vpop.permute.xlu0 %714
        %716 = vrot.lane.b32.xlu0 %v672, 96
        %v717 = vpop.permute.xlu0 %716
        %718 = vrot.lane.b32.xlu0 %v675, 96
        %v719 = vpop.permute.xlu0 %718
        %720 = vrot.lane.b32.xlu0 %v678, 96
        %v721 = vpop.permute.xlu0 %720
        %722 = vrot.lane.b32.xlu0 %v681, 96
        %v723 = vpop.permute.xlu0 %722
        %724 = vrot.lane.b32.xlu0 %v684, 96
        %v725 = vpop.permute.xlu0 %724
        %vm726 = vcmask 130048
        %v728 = vsel %vm726, %v686, 0
        %v731 = vsel %vm726, %v687, 0
        %v734 = vsel %vm726, %v688, 0
        %v737 = vsel %vm726, %v689, 0
        %v740 = vsel %vm726, %v690, 0
        %v743 = vsel %vm726, %v691, 0
        %v746 = vsel %vm726, %v692, 0
        %v749 = vsel %vm726, %v693, 0
        %v751 = vsel %vm726, %v711, 0
        %v753 = vsel %vm726, %v713, 0
        %v755 = vsel %vm726, %v715, 0
        %v757 = vsel %vm726, %v717, 0
        %v759 = vsel %vm726, %v719, 0
        %v761 = vsel %vm726, %v721, 0
        %v763 = vsel %vm726, %v723, 0
        %v765 = vsel %vm726, %v725, 0
        %767 = vmatpush.xpose.msra.mxu0 0.0
        %768 = vmatpush.xpose.msra.mxu0 0.0
        %769 = vmatpush.xpose.msra.mxu0 0.0
        %770 = vmatpush.xpose.msra.mxu0 0.0
        %771 = vmatpush.xpose.msra.mxu0 0.0
        %772 = vmatpush.xpose.msra.mxu0 0.0
        %773 = vmatpush.xpose.msra.mxu0 0.0
        %774 = vmatpush.xpose.msra.mxu0 0.0
        %775 = vmatpush.xpose.msra.mxu0 %v765
        %776 = vmatpush.xpose.msra.mxu0 %v763
        %777 = vmatpush.xpose.msra.mxu0 %v761
        %778 = vmatpush.xpose.msra.mxu0 %v759
        %779 = vmatpush.xpose.msra.mxu0 %v757
        %780 = vmatpush.xpose.msra.mxu0 %v755
        %781 = vmatpush.xpose.msra.mxu0 %v753
        %782 = vmatpush.xpose.msra.mxu0 %v751
        %783 = vmatmul.f32.gmra.mxu0 %v728
        %v784 = vpop.f32.mrf.mxu0
        %v785 = vadd.f32 %v694, %v784
        %786 = vmatmul.f32.gmra.mxu0 %v731
        %v787 = vpop.f32.mrf.mxu0
        %v788 = vadd.f32 %v695, %v787
        %789 = vmatmul.f32.gmra.mxu0 %v734
        %v790 = vpop.f32.mrf.mxu0
        %v791 = vadd.f32 %v696, %v790
        %792 = vmatmul.f32.gmra.mxu0 %v737
        %v793 = vpop.f32.mrf.mxu0
        %v794 = vadd.f32 %v697, %v793
        %795 = vmatmul.f32.gmra.mxu0 %v740
        %v796 = vpop.f32.mrf.mxu0
        %v797 = vadd.f32 %v698, %v796
        %798 = vmatmul.f32.gmra.mxu0 %v743
        %v799 = vpop.f32.mrf.mxu0
        %v800 = vadd.f32 %v699, %v799
        %801 = vmatmul.f32.gmra.mxu0 %v746
        %v802 = vpop.f32.mrf.mxu0
        %v803 = vadd.f32 %v700, %v802
        %804 = vmatmul.f32.gmra.mxu0 %v749
        %v805 = vpop.f32.mrf.mxu0
        %v806 = vadd.f32 %v701, %v805
        %807 = vdwg.mxu0
        %vm808 = vcmask 523264
        %v809 = vsel %vm808, %v785, -inf
        %810 = vmax.xlane.f32.xlu0 %v809
        %v811 = vpop.xlane.xlu0 %810
        %v812 = vsel %vm808, %v788, -inf
        %813 = vmax.xlane.f32.xlu0 %v812
        %v814 = vpop.xlane.xlu0 %813
        %v815 = vsel %vm808, %v791, -inf
        %816 = vmax.xlane.f32.xlu0 %v815
        %v817 = vpop.xlane.xlu0 %816
        %v818 = vsel %vm808, %v794, -inf
        %819 = vmax.xlane.f32.xlu0 %v818
        %v820 = vpop.xlane.xlu0 %819
        %v821 = vsel %vm808, %v797, -inf
        %822 = vmax.xlane.f32.xlu0 %v821
        %v823 = vpop.xlane.xlu0 %822
        %v824 = vsel %vm808, %v800, -inf
        %825 = vmax.xlane.f32.xlu0 %v824
        %v826 = vpop.xlane.xlu0 %825
        %v827 = vsel %vm808, %v803, -inf
        %828 = vmax.xlane.f32.xlu0 %v827
        %v829 = vpop.xlane.xlu0 %828
        %v830 = vsel %vm808, %v806, -inf
        %831 = vmax.xlane.f32.xlu0 %v830
        %v832 = vpop.xlane.xlu0 %831
        %v833 = vsub.f32 %v785, %v811
        %v834 = vsub.f32 %v788, %v814
        %v835 = vsub.f32 %v791, %v817
        %v836 = vsub.f32 %v794, %v820
        %v837 = vsub.f32 %v797, %v823
        %v838 = vsub.f32 %v800, %v826
        %v839 = vsub.f32 %v803, %v829
        %v840 = vsub.f32 %v806, %v832
        %v841 = vmul.f32 %v833, 1.442695
        %v842 = vpow.pop %v841
        %v843 = vmul.f32 %v834, 1.442695
        %v844 = vpow.pop %v843
        %v845 = vmul.f32 %v835, 1.442695
        %v846 = vpow.pop %v845
        %v847 = vmul.f32 %v836, 1.442695
        %v848 = vpow.pop %v847
        %v849 = vmul.f32 %v837, 1.442695
        %v850 = vpow.pop %v849
        %v851 = vmul.f32 %v838, 1.442695
        %v852 = vpow.pop %v851
        %v853 = vmul.f32 %v839, 1.442695
        %v854 = vpow.pop %v853
        %v855 = vmul.f32 %v840, 1.442695
        %v856 = vpow.pop %v855
        %v857 = vsel %vm808, %v842, 0.0
        %858 = vadd.xlane.f32.xlu0 %v857
        %v859 = vpop.xlane.xlu0 %858
        %v860 = vsel %vm808, %v844, 0.0
        %861 = vadd.xlane.f32.xlu0 %v860
        %v862 = vpop.xlane.xlu0 %861
        %v863 = vsel %vm808, %v846, 0.0
        %864 = vadd.xlane.f32.xlu0 %v863
        %v865 = vpop.xlane.xlu0 %864
        %v866 = vsel %vm808, %v848, 0.0
        %867 = vadd.xlane.f32.xlu0 %v866
        %v868 = vpop.xlane.xlu0 %867
        %v869 = vsel %vm808, %v850, 0.0
        %870 = vadd.xlane.f32.xlu0 %v869
        %v871 = vpop.xlane.xlu0 %870
        %v872 = vsel %vm808, %v852, 0.0
        %873 = vadd.xlane.f32.xlu0 %v872
        %v874 = vpop.xlane.xlu0 %873
        %v875 = vsel %vm808, %v854, 0.0
        %876 = vadd.xlane.f32.xlu0 %v875
        %v877 = vpop.xlane.xlu0 %876
        %v878 = vsel %vm808, %v856, 0.0
        %879 = vadd.xlane.f32.xlu0 %v878
        %v880 = vpop.xlane.xlu0 %879
        %v881 = vrcp.pop %v859
        %v882 = vmul.f32 %v859, %v881
        %v883 = vsub.f32 1.0, %v882
        %v884 = vmul.f32 %v881, %v883
        %v885 = vadd.f32 %v881, %v884
        %vm886 = vweird.f32 %v859
        %vm887 = vweird.f32 %v881
        %vm888 = vmor %vm886, %vm887
        %v889 = vsel %vm888, %v881, %v885
        %v890 = vand.u32 2147483647, %v859
        %vm891 = vcmp.eq.f32.partialorder %v890, 8.507059e+37
        %v892 = vand.u32 %v859, 2147483648
        %v893 = vor.u32 1.1754944e-38, %v892
        %v894 = vsel %vm891, %v893, %v889
        %v895 = vmul.f32 %v842, %v894
        %v896 = vrcp.pop %v862
        %v897 = vmul.f32 %v862, %v896
        %v898 = vsub.f32 1.0, %v897
        %v899 = vmul.f32 %v896, %v898
        %v900 = vadd.f32 %v896, %v899
        %vm901 = vweird.f32 %v862
        %vm902 = vweird.f32 %v896
        %vm903 = vmor %vm901, %vm902
        %v904 = vsel %vm903, %v896, %v900
        %v905 = vand.u32 2147483647, %v862
        %vm906 = vcmp.eq.f32.partialorder %v905, 8.507059e+37
        %v907 = vand.u32 %v862, 2147483648
        %v908 = vor.u32 1.1754944e-38, %v907
        %v909 = vsel %vm906, %v908, %v904
        %v910 = vmul.f32 %v844, %v909
        %v911 = vrcp.pop %v865
        %v912 = vmul.f32 %v865, %v911
        %v913 = vsub.f32 1.0, %v912
        %v914 = vmul.f32 %v911, %v913
        %v915 = vadd.f32 %v911, %v914
        %vm916 = vweird.f32 %v865
        %vm917 = vweird.f32 %v911
        %vm918 = vmor %vm916, %vm917
        %v919 = vsel %vm918, %v911, %v915
        %v920 = vand.u32 2147483647, %v865
        %vm921 = vcmp.eq.f32.partialorder %v920, 8.507059e+37
        %v922 = vand.u32 %v865, 2147483648
        %v923 = vor.u32 1.1754944e-38, %v922
        %v924 = vsel %vm921, %v923, %v919
        %v925 = vmul.f32 %v846, %v924
        %v926 = vrcp.pop %v868
        %v927 = vmul.f32 %v868, %v926
        %v928 = vsub.f32 1.0, %v927
        %v929 = vmul.f32 %v926, %v928
        %v930 = vadd.f32 %v926, %v929
        %vm931 = vweird.f32 %v868
        %vm932 = vweird.f32 %v926
        %vm933 = vmor %vm931, %vm932
        %v934 = vsel %vm933, %v926, %v930
        %v935 = vand.u32 2147483647, %v868
        %vm936 = vcmp.eq.f32.partialorder %v935, 8.507059e+37
        %v937 = vand.u32 %v868, 2147483648
        %v938 = vor.u32 1.1754944e-38, %v937
        %v939 = vsel %vm936, %v938, %v934
        %v940 = vmul.f32 %v848, %v939
        %v941 = vrcp.pop %v871
        %v942 = vmul.f32 %v871, %v941
        %v943 = vsub.f32 1.0, %v942
        %v944 = vmul.f32 %v941, %v943
        %v945 = vadd.f32 %v941, %v944
        %vm946 = vweird.f32 %v871
        %vm947 = vweird.f32 %v941
        %vm948 = vmor %vm946, %vm947
        %v949 = vsel %vm948, %v941, %v945
        %v950 = vand.u32 2147483647, %v871
        %vm951 = vcmp.eq.f32.partialorder %v950, 8.507059e+37
        %v952 = vand.u32 %v871, 2147483648
        %v953 = vor.u32 1.1754944e-38, %v952
        %v954 = vsel %vm951, %v953, %v949
        %v955 = vmul.f32 %v850, %v954
        %v956 = vrcp.pop %v874
        %v957 = vmul.f32 %v874, %v956
        %v958 = vsub.f32 1.0, %v957
        %v959 = vmul.f32 %v956, %v958
        %v960 = vadd.f32 %v956, %v959
        %vm961 = vweird.f32 %v874
        %vm962 = vweird.f32 %v956
        %vm963 = vmor %vm961, %vm962
        %v964 = vsel %vm963, %v956, %v960
        %v965 = vand.u32 2147483647, %v874
        %vm966 = vcmp.eq.f32.partialorder %v965, 8.507059e+37
        %v967 = vand.u32 %v874, 2147483648
        %v968 = vor.u32 1.1754944e-38, %v967
        %v969 = vsel %vm966, %v968, %v964
        %v970 = vmul.f32 %v852, %v969
        %v971 = vrcp.pop %v877
        %v972 = vmul.f32 %v877, %v971
        %v973 = vsub.f32 1.0, %v972
        %v974 = vmul.f32 %v971, %v973
        %v975 = vadd.f32 %v971, %v974
        %vm976 = vweird.f32 %v877
        %vm977 = vweird.f32 %v971
        %vm978 = vmor %vm976, %vm977
        %v979 = vsel %vm978, %v971, %v975
        %v980 = vand.u32 2147483647, %v877
        %vm981 = vcmp.eq.f32.partialorder %v980, 8.507059e+37
        %v982 = vand.u32 %v877, 2147483648
        %v983 = vor.u32 1.1754944e-38, %v982
        %v984 = vsel %vm981, %v983, %v979
        %v985 = vmul.f32 %v854, %v984
        %v986 = vrcp.pop %v880
        %v987 = vmul.f32 %v880, %v986
        %v988 = vsub.f32 1.0, %v987
        %v989 = vmul.f32 %v986, %v988
        %v990 = vadd.f32 %v986, %v989
        %vm991 = vweird.f32 %v880
        %vm992 = vweird.f32 %v986
        %vm993 = vmor %vm991, %vm992
        %v994 = vsel %vm993, %v986, %v990
        %v995 = vand.u32 2147483647, %v880
        %vm996 = vcmp.eq.f32.partialorder %v995, 8.507059e+37
        %v997 = vand.u32 %v880, 2147483648
        %v998 = vor.u32 1.1754944e-38, %v997
        %v999 = vsel %vm996, %v998, %v994
        %v1000 = vmul.f32 %v856, %v999
        %1001 = vrot.lane.b32.xlu0 %v663, 64
        %v1002 = vpop.permute.xlu0 %1001
        %1003 = vrot.lane.b32.xlu0 %v666, 64
        %v1004 = vpop.permute.xlu0 %1003
        %1005 = vrot.lane.b32.xlu0 %v669, 64
        %v1006 = vpop.permute.xlu0 %1005
        %1007 = vrot.lane.b32.xlu0 %v672, 64
        %v1008 = vpop.permute.xlu0 %1007
        %1009 = vrot.lane.b32.xlu0 %v675, 64
        %v1010 = vpop.permute.xlu0 %1009
        %1011 = vrot.lane.b32.xlu0 %v678, 64
        %v1012 = vpop.permute.xlu0 %1011
        %1013 = vrot.lane.b32.xlu0 %v681, 64
        %v1014 = vpop.permute.xlu0 %1013
        %1015 = vrot.lane.b32.xlu0 %v684, 64
        %v1016 = vpop.permute.xlu0 %1015
        %v1026 = vsel %vm808, %v895, 0
        %v1029 = vsel %vm808, %v910, 0
        %v1032 = vsel %vm808, %v925, 0
        %v1035 = vsel %vm808, %v940, 0
        %v1038 = vsel %vm808, %v955, 0
        %v1041 = vsel %vm808, %v970, 0
        %v1044 = vsel %vm808, %v985, 0
        %v1047 = vsel %vm808, %v1000, 0
        %1049 = vmatpush.msra.mxu0 0.0
        %1050 = vmatpush.msra.mxu0 0.0
        %1051 = vmatpush.msra.mxu0 0.0
        %1052 = vmatpush.msra.mxu0 0.0
        %1053 = vmatpush.msra.mxu0 0.0
        %1054 = vmatpush.msra.mxu0 0.0
        %1055 = vmatpush.msra.mxu0 0.0
        %1056 = vmatpush.msra.mxu0 0.0
        %1057 = vmatpush.msra.mxu0 %v1016
        %1058 = vmatpush.msra.mxu0 %v1014
        %1059 = vmatpush.msra.mxu0 %v1012
        %1060 = vmatpush.msra.mxu0 %v1010
        %1061 = vmatpush.msra.mxu0 %v1008
        %1062 = vmatpush.msra.mxu0 %v1006
        %1063 = vmatpush.msra.mxu0 %v1004
        %1064 = vmatpush.msra.mxu0 %v1002
        %1065 = vmatmul.f32.gmra.mxu0 %v1026
        %v1066 = vpop.f32.mrf.mxu0
        %v1067 = vadd.f32 0.0, %v1066
        %1068 = vmatmul.f32.gmra.mxu0 %v1029
        %v1069 = vpop.f32.mrf.mxu0
        %v1070 = vadd.f32 0.0, %v1069
        %1071 = vmatmul.f32.gmra.mxu0 %v1032
        %v1072 = vpop.f32.mrf.mxu0
        %v1073 = vadd.f32 0.0, %v1072
        %1074 = vmatmul.f32.gmra.mxu0 %v1035
        %v1075 = vpop.f32.mrf.mxu0
        %v1076 = vadd.f32 0.0, %v1075
        %1077 = vmatmul.f32.gmra.mxu0 %v1038
        %v1078 = vpop.f32.mrf.mxu0
        %v1079 = vadd.f32 0.0, %v1078
        %1080 = vmatmul.f32.gmra.mxu0 %v1041
        %v1081 = vpop.f32.mrf.mxu0
        %v1082 = vadd.f32 0.0, %v1081
        %1083 = vmatmul.f32.gmra.mxu0 %v1044
        %v1084 = vpop.f32.mrf.mxu0
        %v1085 = vadd.f32 0.0, %v1084
        %1086 = vmatmul.f32.gmra.mxu0 %v1047
        %v1087 = vpop.f32.mrf.mxu0
        %v1088 = vadd.f32 0.0, %v1087
        %1089 = vdwg.mxu0
        %s1090 = scalar_lea.vmem %s7, 64
        %v1091 = vld [vmem:[%s1090] sm:$0xff]
        %v1092 = vld [vmem:[%s1090 + $0x8] sm:$0xff]
        %v1093 = vld [vmem:[%s1090 + $0x10] sm:$0xff]
        %v1094 = vld [vmem:[%s1090 + $0x18] sm:$0xff]
        %v1095 = vld [vmem:[%s1090 + $0x20] sm:$0xff]
        %v1096 = vld [vmem:[%s1090 + $0x28] sm:$0xff]
        %v1097 = vld [vmem:[%s1090 + $0x30] sm:$0xff]
        %v1098 = vld [vmem:[%s1090 + $0x38] sm:$0xff]
        %1099 = vrot.lane.b32.xlu0 %v686, 112
        %v1100 = vpop.permute.xlu0 %1099
        %1101 = vrot.lane.b32.xlu0 %v687, 112
        %v1102 = vpop.permute.xlu0 %1101
        %1103 = vrot.lane.b32.xlu0 %v688, 112
        %v1104 = vpop.permute.xlu0 %1103
        %1105 = vrot.lane.b32.xlu0 %v689, 112
        %v1106 = vpop.permute.xlu0 %1105
        %1107 = vrot.lane.b32.xlu0 %v690, 112
        %v1108 = vpop.permute.xlu0 %1107
        %1109 = vrot.lane.b32.xlu0 %v691, 112
        %v1110 = vpop.permute.xlu0 %1109
        %1111 = vrot.lane.b32.xlu0 %v692, 112
        %v1112 = vpop.permute.xlu0 %1111
        %1113 = vrot.lane.b32.xlu0 %v693, 112
        %v1114 = vpop.permute.xlu0 %1113
        %1115 = vrot.lane.b32.xlu0 %v663, 80
        %v1116 = vpop.permute.xlu0 %1115
        %1117 = vrot.lane.b32.xlu0 %v666, 80
        %v1118 = vpop.permute.xlu0 %1117
        %1119 = vrot.lane.b32.xlu0 %v669, 80
        %v1120 = vpop.permute.xlu0 %1119
        %1121 = vrot.lane.b32.xlu0 %v672, 80
        %v1122 = vpop.permute.xlu0 %1121
        %1123 = vrot.lane.b32.xlu0 %v675, 80
        %v1124 = vpop.permute.xlu0 %1123
        %1125 = vrot.lane.b32.xlu0 %v678, 80
        %v1126 = vpop.permute.xlu0 %1125
        %1127 = vrot.lane.b32.xlu0 %v681, 80
        %v1128 = vpop.permute.xlu0 %1127
        %1129 = vrot.lane.b32.xlu0 %v684, 80
        %v1130 = vpop.permute.xlu0 %1129
        %v1131 = vsel %vm726, %v1100, 0
        %v1133 = vsel %vm726, %v1102, 0
        %v1135 = vsel %vm726, %v1104, 0
        %v1137 = vsel %vm726, %v1106, 0
        %v1139 = vsel %vm726, %v1108, 0
        %v1141 = vsel %vm726, %v1110, 0
        %v1143 = vsel %vm726, %v1112, 0
        %v1145 = vsel %vm726, %v1114, 0
        %v1147 = vsel %vm726, %v1116, 0
        %v1149 = vsel %vm726, %v1118, 0
        %v1151 = vsel %vm726, %v1120, 0
        %v1153 = vsel %vm726, %v1122, 0
        %v1155 = vsel %vm726, %v1124, 0
        %v1157 = vsel %vm726, %v1126, 0
        %v1159 = vsel %vm726, %v1128, 0
        %v1161 = vsel %vm726, %v1130, 0
        %1163 = vmatpush.xpose.msra.mxu0 0.0
        %1164 = vmatpush.xpose.msra.mxu0 0.0
        %1165 = vmatpush.xpose.msra.mxu0 0.0
        %1166 = vmatpush.xpose.msra.mxu0 0.0
        %1167 = vmatpush.xpose.msra.mxu0 0.0
        %1168 = vmatpush.xpose.msra.mxu0 0.0
        %1169 = vmatpush.xpose.msra.mxu0 0.0
        %1170 = vmatpush.xpose.msra.mxu0 0.0
        %1171 = vmatpush.xpose.msra.mxu0 %v1161
        %1172 = vmatpush.xpose.msra.mxu0 %v1159
        %1173 = vmatpush.xpose.msra.mxu0 %v1157
        %1174 = vmatpush.xpose.msra.mxu0 %v1155
        %1175 = vmatpush.xpose.msra.mxu0 %v1153
        %1176 = vmatpush.xpose.msra.mxu0 %v1151
        %1177 = vmatpush.xpose.msra.mxu0 %v1149
        %1178 = vmatpush.xpose.msra.mxu0 %v1147
        %1179 = vmatmul.f32.gmra.mxu0 %v1131
        %v1180 = vpop.f32.mrf.mxu0
        %v1181 = vadd.f32 %v1091, %v1180
        %1182 = vmatmul.f32.gmra.mxu0 %v1133
        %v1183 = vpop.f32.mrf.mxu0
        %v1184 = vadd.f32 %v1092, %v1183
        %1185 = vmatmul.f32.gmra.mxu0 %v1135
        %v1186 = vpop.f32.mrf.mxu0
        %v1187 = vadd.f32 %v1093, %v1186
        %1188 = vmatmul.f32.gmra.mxu0 %v1137
        %v1189 = vpop.f32.mrf.mxu0
        %v1190 = vadd.f32 %v1094, %v1189
        %1191 = vmatmul.f32.gmra.mxu0 %v1139
        %v1192 = vpop.f32.mrf.mxu0
        %v1193 = vadd.f32 %v1095, %v1192
        %1194 = vmatmul.f32.gmra.mxu0 %v1141
        %v1195 = vpop.f32.mrf.mxu0
        %v1196 = vadd.f32 %v1096, %v1195
        %1197 = vmatmul.f32.gmra.mxu0 %v1143
        %v1198 = vpop.f32.mrf.mxu0
        %v1199 = vadd.f32 %v1097, %v1198
        %1200 = vmatmul.f32.gmra.mxu0 %v1145
        %v1201 = vpop.f32.mrf.mxu0
        %v1202 = vadd.f32 %v1098, %v1201
        %1203 = vdwg.mxu0
        %v1204 = vsel %vm808, %v1181, -inf
        %1205 = vmax.xlane.f32.xlu0 %v1204
        %v1206 = vpop.xlane.xlu0 %1205
        %v1207 = vsel %vm808, %v1184, -inf
        %1208 = vmax.xlane.f32.xlu0 %v1207
        %v1209 = vpop.xlane.xlu0 %1208
        %v1210 = vsel %vm808, %v1187, -inf
        %1211 = vmax.xlane.f32.xlu0 %v1210
        %v1212 = vpop.xlane.xlu0 %1211
        %v1213 = vsel %vm808, %v1190, -inf
        %1214 = vmax.xlane.f32.xlu0 %v1213
        %v1215 = vpop.xlane.xlu0 %1214
        %v1216 = vsel %vm808, %v1193, -inf
        %1217 = vmax.xlane.f32.xlu0 %v1216
        %v1218 = vpop.xlane.xlu0 %1217
        %v1219 = vsel %vm808, %v1196, -inf
        %1220 = vmax.xlane.f32.xlu0 %v1219
        %v1221 = vpop.xlane.xlu0 %1220
        %v1222 = vsel %vm808, %v1199, -inf
        %1223 = vmax.xlane.f32.xlu0 %v1222
        %v1224 = vpop.xlane.xlu0 %1223
        %v1225 = vsel %vm808, %v1202, -inf
        %1226 = vmax.xlane.f32.xlu0 %v1225
        %v1227 = vpop.xlane.xlu0 %1226
        %v1228 = vsub.f32 %v1181, %v1206
        %v1229 = vsub.f32 %v1184, %v1209
        %v1230 = vsub.f32 %v1187, %v1212
        %v1231 = vsub.f32 %v1190, %v1215
        %v1232 = vsub.f32 %v1193, %v1218
        %v1233 = vsub.f32 %v1196, %v1221
        %v1234 = vsub.f32 %v1199, %v1224
        %v1235 = vsub.f32 %v1202, %v1227
        %v1236 = vmul.f32 %v1228, 1.442695
        %v1237 = vpow.pop %v1236
        %v1238 = vmul.f32 %v1229, 1.442695
        %v1239 = vpow.pop %v1238
        %v1240 = vmul.f32 %v1230, 1.442695
        %v1241 = vpow.pop %v1240
        %v1242 = vmul.f32 %v1231, 1.442695
        %v1243 = vpow.pop %v1242
        %v1244 = vmul.f32 %v1232, 1.442695
        %v1245 = vpow.pop %v1244
        %v1246 = vmul.f32 %v1233, 1.442695
        %v1247 = vpow.pop %v1246
        %v1248 = vmul.f32 %v1234, 1.442695
        %v1249 = vpow.pop %v1248
        %v1250 = vmul.f32 %v1235, 1.442695
        %v1251 = vpow.pop %v1250
        %v1252 = vsel %vm808, %v1237, 0.0
        %1253 = vadd.xlane.f32.xlu0 %v1252
        %v1254 = vpop.xlane.xlu0 %1253
        %v1255 = vsel %vm808, %v1239, 0.0
        %1256 = vadd.xlane.f32.xlu0 %v1255
        %v1257 = vpop.xlane.xlu0 %1256
        %v1258 = vsel %vm808, %v1241, 0.0
        %1259 = vadd.xlane.f32.xlu0 %v1258
        %v1260 = vpop.xlane.xlu0 %1259
        %v1261 = vsel %vm808, %v1243, 0.0
        %1262 = vadd.xlane.f32.xlu0 %v1261
        %v1263 = vpop.xlane.xlu0 %1262
        %v1264 = vsel %vm808, %v1245, 0.0
        %1265 = vadd.xlane.f32.xlu0 %v1264
        %v1266 = vpop.xlane.xlu0 %1265
        %v1267 = vsel %vm808, %v1247, 0.0
        %1268 = vadd.xlane.f32.xlu0 %v1267
        %v1269 = vpop.xlane.xlu0 %1268
        %v1270 = vsel %vm808, %v1249, 0.0
        %1271 = vadd.xlane.f32.xlu0 %v1270
        %v1272 = vpop.xlane.xlu0 %1271
        %v1273 = vsel %vm808, %v1251, 0.0
        %1274 = vadd.xlane.f32.xlu0 %v1273
        %v1275 = vpop.xlane.xlu0 %1274
        %v1276 = vrcp.pop %v1254
        %v1277 = vmul.f32 %v1254, %v1276
        %v1278 = vsub.f32 1.0, %v1277
        %v1279 = vmul.f32 %v1276, %v1278
        %v1280 = vadd.f32 %v1276, %v1279
        %vm1281 = vweird.f32 %v1254
        %vm1282 = vweird.f32 %v1276
        %vm1283 = vmor %vm1281, %vm1282
        %v1284 = vsel %vm1283, %v1276, %v1280
        %v1285 = vand.u32 2147483647, %v1254
        %vm1286 = vcmp.eq.f32.partialorder %v1285, 8.507059e+37
        %v1287 = vand.u32 %v1254, 2147483648
        %v1288 = vor.u32 1.1754944e-38, %v1287
        %v1289 = vsel %vm1286, %v1288, %v1284
        %v1290 = vmul.f32 %v1237, %v1289
        %v1291 = vrcp.pop %v1257
        %v1292 = vmul.f32 %v1257, %v1291
        %v1293 = vsub.f32 1.0, %v1292
        %v1294 = vmul.f32 %v1291, %v1293
        %v1295 = vadd.f32 %v1291, %v1294
        %vm1296 = vweird.f32 %v1257
        %vm1297 = vweird.f32 %v1291
        %vm1298 = vmor %vm1296, %vm1297
        %v1299 = vsel %vm1298, %v1291, %v1295
        %v1300 = vand.u32 2147483647, %v1257
        %vm1301 = vcmp.eq.f32.partialorder %v1300, 8.507059e+37
        %v1302 = vand.u32 %v1257, 2147483648
        %v1303 = vor.u32 1.1754944e-38, %v1302
        %v1304 = vsel %vm1301, %v1303, %v1299
        %v1305 = vmul.f32 %v1239, %v1304
        %v1306 = vrcp.pop %v1260
        %v1307 = vmul.f32 %v1260, %v1306
        %v1308 = vsub.f32 1.0, %v1307
        %v1309 = vmul.f32 %v1306, %v1308
        %v1310 = vadd.f32 %v1306, %v1309
        %vm1311 = vweird.f32 %v1260
        %vm1312 = vweird.f32 %v1306
        %vm1313 = vmor %vm1311, %vm1312
        %v1314 = vsel %vm1313, %v1306, %v1310
        %v1315 = vand.u32 2147483647, %v1260
        %vm1316 = vcmp.eq.f32.partialorder %v1315, 8.507059e+37
        %v1317 = vand.u32 %v1260, 2147483648
        %v1318 = vor.u32 1.1754944e-38, %v1317
        %v1319 = vsel %vm1316, %v1318, %v1314
        %v1320 = vmul.f32 %v1241, %v1319
        %v1321 = vrcp.pop %v1263
        %v1322 = vmul.f32 %v1263, %v1321
        %v1323 = vsub.f32 1.0, %v1322
        %v1324 = vmul.f32 %v1321, %v1323
        %v1325 = vadd.f32 %v1321, %v1324
        %vm1326 = vweird.f32 %v1263
        %vm1327 = vweird.f32 %v1321
        %vm1328 = vmor %vm1326, %vm1327
        %v1329 = vsel %vm1328, %v1321, %v1325
        %v1330 = vand.u32 2147483647, %v1263
        %vm1331 = vcmp.eq.f32.partialorder %v1330, 8.507059e+37
        %v1332 = vand.u32 %v1263, 2147483648
        %v1333 = vor.u32 1.1754944e-38, %v1332
        %v1334 = vsel %vm1331, %v1333, %v1329
        %v1335 = vmul.f32 %v1243, %v1334
        %v1336 = vrcp.pop %v1266
        %v1337 = vmul.f32 %v1266, %v1336
        %v1338 = vsub.f32 1.0, %v1337
        %v1339 = vmul.f32 %v1336, %v1338
        %v1340 = vadd.f32 %v1336, %v1339
        %vm1341 = vweird.f32 %v1266
        %vm1342 = vweird.f32 %v1336
        %vm1343 = vmor %vm1341, %vm1342
        %v1344 = vsel %vm1343, %v1336, %v1340
        %v1345 = vand.u32 2147483647, %v1266
        %vm1346 = vcmp.eq.f32.partialorder %v1345, 8.507059e+37
        %v1347 = vand.u32 %v1266, 2147483648
        %v1348 = vor.u32 1.1754944e-38, %v1347
        %v1349 = vsel %vm1346, %v1348, %v1344
        %v1350 = vmul.f32 %v1245, %v1349
        %v1351 = vrcp.pop %v1269
        %v1352 = vmul.f32 %v1269, %v1351
        %v1353 = vsub.f32 1.0, %v1352
        %v1354 = vmul.f32 %v1351, %v1353
        %v1355 = vadd.f32 %v1351, %v1354
        %vm1356 = vweird.f32 %v1269
        %vm1357 = vweird.f32 %v1351
        %vm1358 = vmor %vm1356, %vm1357
        %v1359 = vsel %vm1358, %v1351, %v1355
        %v1360 = vand.u32 2147483647, %v1269
        %vm1361 = vcmp.eq.f32.partialorder %v1360, 8.507059e+37
        %v1362 = vand.u32 %v1269, 2147483648
        %v1363 = vor.u32 1.1754944e-38, %v1362
        %v1364 = vsel %vm1361, %v1363, %v1359
        %v1365 = vmul.f32 %v1247, %v1364
        %v1366 = vrcp.pop %v1272
        %v1367 = vmul.f32 %v1272, %v1366
        %v1368 = vsub.f32 1.0, %v1367
        %v1369 = vmul.f32 %v1366, %v1368
        %v1370 = vadd.f32 %v1366, %v1369
        %vm1371 = vweird.f32 %v1272
        %vm1372 = vweird.f32 %v1366
        %vm1373 = vmor %vm1371, %vm1372
        %v1374 = vsel %vm1373, %v1366, %v1370
        %v1375 = vand.u32 2147483647, %v1272
        %vm1376 = vcmp.eq.f32.partialorder %v1375, 8.507059e+37
        %v1377 = vand.u32 %v1272, 2147483648
        %v1378 = vor.u32 1.1754944e-38, %v1377
        %v1379 = vsel %vm1376, %v1378, %v1374
        %v1380 = vmul.f32 %v1249, %v1379
        %v1381 = vrcp.pop %v1275
        %v1382 = vmul.f32 %v1275, %v1381
        %v1383 = vsub.f32 1.0, %v1382
        %v1384 = vmul.f32 %v1381, %v1383
        %v1385 = vadd.f32 %v1381, %v1384
        %vm1386 = vweird.f32 %v1275
        %vm1387 = vweird.f32 %v1381
        %vm1388 = vmor %vm1386, %vm1387
        %v1389 = vsel %vm1388, %v1381, %v1385
        %v1390 = vand.u32 2147483647, %v1275
        %vm1391 = vcmp.eq.f32.partialorder %v1390, 8.507059e+37
        %v1392 = vand.u32 %v1275, 2147483648
        %v1393 = vor.u32 1.1754944e-38, %v1392
        %v1394 = vsel %vm1391, %v1393, %v1389
        %v1395 = vmul.f32 %v1251, %v1394
        %1396 = vrot.lane.b32.xlu0 %v663, 48
        %v1397 = vpop.permute.xlu0 %1396
        %1398 = vrot.lane.b32.xlu0 %v666, 48
        %v1399 = vpop.permute.xlu0 %1398
        %1400 = vrot.lane.b32.xlu0 %v669, 48
        %v1401 = vpop.permute.xlu0 %1400
        %1402 = vrot.lane.b32.xlu0 %v672, 48
        %v1403 = vpop.permute.xlu0 %1402
        %1404 = vrot.lane.b32.xlu0 %v675, 48
        %v1405 = vpop.permute.xlu0 %1404
        %1406 = vrot.lane.b32.xlu0 %v678, 48
        %v1407 = vpop.permute.xlu0 %1406
        %1408 = vrot.lane.b32.xlu0 %v681, 48
        %v1409 = vpop.permute.xlu0 %1408
        %1410 = vrot.lane.b32.xlu0 %v684, 48
        %v1411 = vpop.permute.xlu0 %1410
        %v1421 = vsel %vm808, %v1290, 0
        %v1424 = vsel %vm808, %v1305, 0
        %v1427 = vsel %vm808, %v1320, 0
        %v1430 = vsel %vm808, %v1335, 0
        %v1433 = vsel %vm808, %v1350, 0
        %v1436 = vsel %vm808, %v1365, 0
        %v1439 = vsel %vm808, %v1380, 0
        %v1442 = vsel %vm808, %v1395, 0
        %1444 = vmatpush.msra.mxu0 0.0
        %1445 = vmatpush.msra.mxu0 0.0
        %1446 = vmatpush.msra.mxu0 0.0
        %1447 = vmatpush.msra.mxu0 0.0
        %1448 = vmatpush.msra.mxu0 0.0
        %1449 = vmatpush.msra.mxu0 0.0
        %1450 = vmatpush.msra.mxu0 0.0
        %1451 = vmatpush.msra.mxu0 0.0
        %1452 = vmatpush.msra.mxu0 %v1411
        %1453 = vmatpush.msra.mxu0 %v1409
        %1454 = vmatpush.msra.mxu0 %v1407
        %1455 = vmatpush.msra.mxu0 %v1405
        %1456 = vmatpush.msra.mxu0 %v1403
        %1457 = vmatpush.msra.mxu0 %v1401
        %1458 = vmatpush.msra.mxu0 %v1399
        %1459 = vmatpush.msra.mxu0 %v1397
        %1460 = vmatmul.f32.gmra.mxu0 %v1421
        %v1461 = vpop.f32.mrf.mxu0
        %v1462 = vadd.f32 0.0, %v1461
        %1463 = vmatmul.f32.gmra.mxu0 %v1424
        %v1464 = vpop.f32.mrf.mxu0
        %v1465 = vadd.f32 0.0, %v1464
        %1466 = vmatmul.f32.gmra.mxu0 %v1427
        %v1467 = vpop.f32.mrf.mxu0
        %v1468 = vadd.f32 0.0, %v1467
        %1469 = vmatmul.f32.gmra.mxu0 %v1430
        %v1470 = vpop.f32.mrf.mxu0
        %v1471 = vadd.f32 0.0, %v1470
        %1472 = vmatmul.f32.gmra.mxu0 %v1433
        %v1473 = vpop.f32.mrf.mxu0
        %v1474 = vadd.f32 0.0, %v1473
        %1475 = vmatmul.f32.gmra.mxu0 %v1436
        %v1476 = vpop.f32.mrf.mxu0
        %v1477 = vadd.f32 0.0, %v1476
        %1478 = vmatmul.f32.gmra.mxu0 %v1439
        %v1479 = vpop.f32.mrf.mxu0
        %v1480 = vadd.f32 0.0, %v1479
        %1481 = vmatmul.f32.gmra.mxu0 %v1442
        %v1482 = vpop.f32.mrf.mxu0
        %v1483 = vadd.f32 0.0, %v1482
        %1484 = vdwg.mxu0
        %1493 = vrot.lane.b32.xlu0 %v1462, 16
        %v1494 = vpop.permute.xlu0 %1493
        %1495 = vrot.lane.b32.xlu0 %v1465, 16
        %v1496 = vpop.permute.xlu0 %1495
        %1497 = vrot.lane.b32.xlu0 %v1468, 16
        %v1498 = vpop.permute.xlu0 %1497
        %1499 = vrot.lane.b32.xlu0 %v1471, 16
        %v1500 = vpop.permute.xlu0 %1499
        %1501 = vrot.lane.b32.xlu0 %v1474, 16
        %v1502 = vpop.permute.xlu0 %1501
        %1503 = vrot.lane.b32.xlu0 %v1477, 16
        %v1504 = vpop.permute.xlu0 %1503
        %1505 = vrot.lane.b32.xlu0 %v1480, 16
        %v1506 = vpop.permute.xlu0 %1505
        %1507 = vrot.lane.b32.xlu0 %v1483, 16
        %v1508 = vpop.permute.xlu0 %1507
        %v1517 = vsel %vm726, %v1067, %v1494
        %v1518 = vsel %vm726, %v1070, %v1496
        %v1519 = vsel %vm726, %v1073, %v1498
        %v1520 = vsel %vm726, %v1076, %v1500
        %v1521 = vsel %vm726, %v1079, %v1502
        %v1522 = vsel %vm726, %v1082, %v1504
        %v1523 = vsel %vm726, %v1085, %v1506
        %v1524 = vsel %vm726, %v1088, %v1508
        %v1525 = vld [vmem:[%s5] sm:$0xff]
        %v1526 = vld [vmem:[%s5 + $0x8] sm:$0xff]
        %v1527 = vld [vmem:[%s5 + $0x10] sm:$0xff]
        %v1528 = vld [vmem:[%s5 + $0x18] sm:$0xff]
        %v1529 = vld [vmem:[%s6] sm:$0x1]
        %v1531 = vperm.slane %v1529, 0
        %v1534 = vsel %vm407, %v1517, 0
        %v1537 = vsel %vm407, %v1518, 0
        %v1540 = vsel %vm407, %v1519, 0
        %v1543 = vsel %vm407, %v1520, 0
        %v1546 = vsel %vm407, %v1521, 0
        %v1549 = vsel %vm407, %v1522, 0
        %v1552 = vsel %vm407, %v1523, 0
        %v1555 = vsel %vm407, %v1524, 0
        %1557 = vmatpush.msra.mxu0 0.0
        %1558 = vmatpush.msra.mxu0 0.0
        %1559 = vmatpush.msra.mxu0 0.0
        %1560 = vmatpush.msra.mxu0 0.0
        %1561 = vmatpush.msra.mxu0 0.0
        %1562 = vmatpush.msra.mxu0 0.0
        %1563 = vmatpush.msra.mxu0 0.0
        %1564 = vmatpush.msra.mxu0 0.0
        %1565 = vmatpush.msra.mxu0 0.0
        %1566 = vmatpush.msra.mxu0 0.0
        %1567 = vmatpush.msra.mxu0 0.0
        %1568 = vmatpush.msra.mxu0 0.0
        %1569 = vmatpush.msra.mxu0 %v1528
        %1570 = vmatpush.msra.mxu0 %v1527
        %1571 = vmatpush.msra.mxu0 %v1526
        %1572 = vmatpush.msra.mxu0 %v1525
        %1573 = vmatmul.f32.gmra.mxu0 %v1534
        %v1574 = vpop.f32.mrf.mxu0
        %v1575 = vadd.f32 %v1531, %v1574
        %1576 = vmatmul.f32.gmra.mxu0 %v1537
        %v1577 = vpop.f32.mrf.mxu0
        %v1578 = vadd.f32 %v1531, %v1577
        %1579 = vmatmul.f32.gmra.mxu0 %v1540
        %v1580 = vpop.f32.mrf.mxu0
        %v1581 = vadd.f32 %v1531, %v1580
        %1582 = vmatmul.f32.gmra.mxu0 %v1543
        %v1583 = vpop.f32.mrf.mxu0
        %v1584 = vadd.f32 %v1531, %v1583
        %1585 = vmatmul.f32.gmra.mxu0 %v1546
        %v1586 = vpop.f32.mrf.mxu0
        %v1587 = vadd.f32 %v1531, %v1586
        %1588 = vmatmul.f32.gmra.mxu0 %v1549
        %v1589 = vpop.f32.mrf.mxu0
        %v1590 = vadd.f32 %v1531, %v1589
        %1591 = vmatmul.f32.gmra.mxu0 %v1552
        %v1592 = vpop.f32.mrf.mxu0
        %v1593 = vadd.f32 %v1531, %v1592
        %1594 = vmatmul.f32.gmra.mxu0 %v1555
        %v1595 = vpop.f32.mrf.mxu0
        %v1596 = vadd.f32 %v1531, %v1595
        %1597 = vdwg.mxu0
        %v1598 = vadd.f32 %v397, %v1575
        %v1599 = vadd.f32 %v398, %v1578
        %v1600 = vadd.f32 %v399, %v1581
        %v1601 = vadd.f32 %v400, %v1584
        %v1602 = vadd.f32 %v401, %v1587
        %v1603 = vadd.f32 %v402, %v1590
        %v1604 = vadd.f32 %v403, %v1593
        %v1605 = vadd.f32 %v404, %v1596
        %1606 = vst.msk [vmem:[%s394] sm:$0xff] %vm407, %v1598
        %1607 = vst.msk [vmem:[%s394 + $0x8] sm:$0xff] %vm407, %v1599
        %1608 = vst.msk [vmem:[%s394 + $0x10] sm:$0xff] %vm407, %v1600
        %1609 = vst.msk [vmem:[%s394 + $0x18] sm:$0xff] %vm407, %v1601
        %1610 = vst.msk [vmem:[%s394 + $0x20] sm:$0xff] %vm407, %v1602
        %1611 = vst.msk [vmem:[%s394 + $0x28] sm:$0xff] %vm407, %v1603
        %1612 = vst.msk [vmem:[%s394 + $0x30] sm:$0xff] %vm407, %v1604
        %1613 = vst.msk [vmem:[%s394 + $0x38] sm:$0xff] %vm407, %v1605
        %s1614 = sand.u32 %s227, 1
        %s1615 = sand.u32 %s227, 1
        %s1616 = smul.addr %s1615, 64
        %s1617 = scalar_lea.vmem [#allocation3], %s1616
        // Predicated region
        $region91: #{_lambda_.2} parent=85 // pred_check
          %p1618 = pneg %p237
        $region92: #{_lambda_.2} parent=85 // pred_check_branch
          %1620 = sbr.rel (%p1618) target = $region94
        $region93: #{_lambda_.2} parent=85 // pred_region
          %s1621 = smul.u32 8, %s25
          %s1622 = smul.addr %s1621, 2
          %s1623 = sadd.s32 %s26, %s1622
          %s1624 = smul.addr %s24, 32
          %s1625 = sadd.s32 %s1623, %s1624
          %s1626 = smul.addr %s1625, 8
          %s1627 = scalar_lea.vmem %s8, %s1626
          // Predicated region
          $region95: #{_lambda_.2} parent=93 // pred_check
            _
          $region96: #{_lambda_.2} parent=93 // pred_check_branch
            %1629 = sbr.rel (0) target = $region98
          $region97: #{_lambda_.2} parent=93 // pred_region
            // Predicated region
            $region99: #{_lambda_.2} parent=97 // pred_check
              _
            $region100: #{_lambda_.2} parent=97 // pred_check_branch
              %1631 = sbr.rel (0) target = $region102
            $region101: #{_lambda_.2} parent=97 // pred_region
              // Predicated region
              $region114: #{_lambda_.2} parent=101 // pred_check
                _
              $region115: #{_lambda_.2} parent=101 // pred_check_branch
                %1661 = sbr.rel (0) target = $region117
              $region116: #{_lambda_.2} parent=101 // pred_region
                loop: start=0, step=1, limit=1
                $region118: #{_lambda_.2} parent=116 // loop_pre_header
                  _
                $region119: #{_lambda_.2} parent=116 // loop_header
                  %s1663 = sphi 0, %s1667
                  %p1664 = scmp.ge.s32.totalorder %s1663, 1
                  %s1668 = sphi %s1617, %s1617
                  %s1669 = sphi %s1627, %s1627
                $region120: #{_lambda_.2} parent=116 // loop_header_branch
                  %1666 = sbr.rel (%p1664) target = $region124
                $region121: #{_lambda_.2} parent=116 // loop_body
                  %v1670 = vld [vmem:[%s1668] sm:$0xff]
                  %1671 = vst [vmem:[%s1669] sm:$0xff] %v1670
                  %v1672 = vld [vmem:[%s1668 + $0x8] sm:$0xff]
                  %1673 = vst [vmem:[%s1669 + $0x10] sm:$0xff] %v1672
                  %v1674 = vld [vmem:[%s1668 + $0x10] sm:$0xff]
                  %1675 = vst [vmem:[%s1669 + $0x20] sm:$0xff] %v1674
                  %v1676 = vld [vmem:[%s1668 + $0x18] sm:$0xff]
                  %1677 = vst [vmem:[%s1669 + $0x30] sm:$0xff] %v1676
                  %v1678 = vld [vmem:[%s1668 + $0x20] sm:$0xff]
                  %1679 = vst [vmem:[%s1669 + $0x40] sm:$0xff] %v1678
                  %v1680 = vld [vmem:[%s1668 + $0x28] sm:$0xff]
                  %1681 = vst [vmem:[%s1669 + $0x50] sm:$0xff] %v1680
                  %v1682 = vld [vmem:[%s1668 + $0x30] sm:$0xff]
                  %1683 = vst [vmem:[%s1669 + $0x60] sm:$0xff] %v1682
                  %v1684 = vld [vmem:[%s1668 + $0x38] sm:$0xff]
                  %1685 = vst [vmem:[%s1669 + $0x70] sm:$0xff] %v1684
                $region122: #{_lambda_.2} parent=116 // loop_footer
                  %s1667 = sadd.s32 1, %s1663
                $region123: #{_lambda_.2} parent=116 // loop_footer_branch
                  %1662 = sbr.rel target = $region119
                $region124: #{_lambda_.2} parent=116 // loop_exit
                  _
              $region117: #{_lambda_.2} parent=101 // pred_fallthru
                _
              // Predicated region
              $region125: #{_lambda_.2} parent=101 // pred_check
                _
              $region126: #{_lambda_.2} parent=101 // pred_check_branch
                %1687 = sbr.rel target = $region128
              $region127: #{_lambda_.2} parent=101 // pred_region
                _
              $region128: #{_lambda_.2} parent=101 // pred_fallthru
                _
            $region102: #{_lambda_.2} parent=97 // pred_fallthru
              _
            // Predicated region
            $region103: #{_lambda_.2} parent=97 // pred_check
              _
            $region104: #{_lambda_.2} parent=97 // pred_check_branch
              %1633 = sbr.rel target = $region106
            $region105: #{_lambda_.2} parent=97 // pred_region
              %s1635 = ssub.s32 256, 1
              loop: start=0, step=1, limit=1
              $region107: #{_lambda_.2} parent=105 // loop_pre_header
                _
              $region108: #{_lambda_.2} parent=105 // loop_header
                %s1637 = sphi 0, %s1641
                %p1638 = scmp.ge.s32.totalorder %s1637, 1
                %s1642 = sphi %s1617, %s1617
                %s1643 = sphi %s1627, %s1627
              $region109: #{_lambda_.2} parent=105 // loop_header_branch
                %1640 = sbr.rel (%p1638) target = $region113
              $region110: #{_lambda_.2} parent=105 // loop_body
                %v1644 = vld [vmem:[%s1642] sm:%s1635]
                %1645 = vst [vmem:[%s1643] sm:%s1635] %v1644
                %v1646 = vld [vmem:[%s1642 + $0x8] sm:%s1635]
                %1647 = vst [vmem:[%s1643 + $0x10] sm:%s1635] %v1646
                %v1648 = vld [vmem:[%s1642 + $0x10] sm:%s1635]
                %1649 = vst [vmem:[%s1643 + $0x20] sm:%s1635] %v1648
                %v1650 = vld [vmem:[%s1642 + $0x18] sm:%s1635]
                %1651 = vst [vmem:[%s1643 + $0x30] sm:%s1635] %v1650
                %v1652 = vld [vmem:[%s1642 + $0x20] sm:%s1635]
                %1653 = vst [vmem:[%s1643 + $0x40] sm:%s1635] %v1652
                %v1654 = vld [vmem:[%s1642 + $0x28] sm:%s1635]
                %1655 = vst [vmem:[%s1643 + $0x50] sm:%s1635] %v1654
                %v1656 = vld [vmem:[%s1642 + $0x30] sm:%s1635]
                %1657 = vst [vmem:[%s1643 + $0x60] sm:%s1635] %v1656
                %v1658 = vld [vmem:[%s1642 + $0x38] sm:%s1635]
                %1659 = vst [vmem:[%s1643 + $0x70] sm:%s1635] %v1658
              $region111: #{_lambda_.2} parent=105 // loop_footer
                %s1641 = sadd.s32 1, %s1637
              $region112: #{_lambda_.2} parent=105 // loop_footer_branch
                %1636 = sbr.rel target = $region108
              $region113: #{_lambda_.2} parent=105 // loop_exit
                _
            $region106: #{_lambda_.2} parent=97 // pred_fallthru
              _
          $region98: #{_lambda_.2} parent=93 // pred_fallthru
            _
          %1688 = vnop
        $region94: #{_lambda_.2} parent=85 // pred_fallthru
          _
      $region86: #{_lambda_.2} parent=5 // pred_fallthru
        _
      %p1689 = scmp.le.s32.totalorder 2, %s14
      // Predicated region
      $region129: #{_lambda_.2} parent=5 // pred_check
        %p1690 = pneg %p1689
      $region130: #{_lambda_.2} parent=5 // pred_check_branch
        %1692 = sbr.rel (%p1690) target = $region132
      $region131: #{_lambda_.2} parent=5 // pred_region
        %s1693 = ssub.s32 %s14, 2
        // Predicated region
        $region133: #{_lambda_.2} parent=131 // pred_check
          %p1694 = pneg %p243
        $region134: #{_lambda_.2} parent=131 // pred_check_branch
          %1696 = sbr.rel (%p1694) target = $region136
        $region135: #{_lambda_.2} parent=131 // pred_region
          %s1697 = sand.u32 %s228, 1
          %s1698 = sand.u32 %s228, 1
          %s1699 = smul.addr %s1698, 64
          %s1700 = scalar_lea.vmem [#allocation3], %s1699
        $region136: #{_lambda_.2} parent=131 // pred_fallthru
          _
      $region132: #{_lambda_.2} parent=5 // pred_fallthru
        _
    $region6: #{_lambda_.2} parent=1 // loop_footer
      %s18 = sadd.s32 1, %s14
    $region7: #{_lambda_.2} parent=1 // loop_footer_branch
      %13 = sbr.rel target = $region3
    $region8: #{_lambda_.2} parent=1 // loop_exit
      _

// kernel: _lambda_.3
$region0: #{_lambda_.3}
  #allocation0 [shape = 'u32[]', space=smem, size = 0x4, offset = 0x4, fixed_abs, tag = 'smem constant byte address 0x4 - core index']
  #allocation1 [shape = 'u32[72,128]{1,0:T(1,128)}', space=vmem, size = 0x9000, scoped, tag = 'internal scratch']
  #allocation2 [shape = 'f32[18,18,128]{2,1,0:T(8,128)}', space=vmem, size = 0x36000, scoped, tag = 'scratch operand']
  %s0 = inlined_call_operand.vmem [shape: f32[2,16,16,32], index: 0, kind: input, shape index: {}]
  %s1 = inlined_call_operand.vmem [shape: f32[1,32], index: 1, kind: input, shape index: {}]
  %s2 = inlined_call_operand.vmem [shape: f32[1,32], index: 2, kind: input, shape index: {}]
  %s3 = inlined_call_operand.vmem [shape: f32[32,128], index: 3, kind: input, shape index: {}]
  %s4 = inlined_call_operand.vmem [shape: f32[1,128], index: 4, kind: input, shape index: {}]
  %s5 = inlined_call_operand.vmem [shape: f32[3,3,128], index: 5, kind: input, shape index: {}]
  %s6 = inlined_call_operand.vmem [shape: f32[1,128], index: 6, kind: input, shape index: {}]
  %s7 = inlined_call_operand.vmem [shape: f32[128,32], index: 7, kind: input, shape index: {}]
  %s8 = inlined_call_operand.vmem [shape: f32[1,32], index: 8, kind: input, shape index: {}]
  %s9 = inlined_call_operand.hbm [shape: f32[2,16,16,32], index: 9, kind: output, shape index: {}]
  %s10 = sld [smem:[#allocation0]]
  $region69: #{_lambda_.3} parent=0
    _
  %s12 = ssub.s32 1, %s10
  %s13 = scalar_select 0, %s12, %s10
  $region1: #{_lambda_.3} parent=0
    #allocation3 [shape = 'u8[262144]{0}', space=vmem, size = 0x40000, scoped, tag = 'output window, operand 0']
    #allocation4 [shape = 's32[2]{0}', space=sflag, size = 0x8, scoped, tag = 'scoped memory for _lambda_.3']
    %14 = vsyncpa [#allocation4], 0
    %s15 = scalar_lea.sflag [#allocation4], 1
    %16 = vsyncpa %s15, 0
    loop: start=0, step=1, limit=4
    $region2: #{_lambda_.3} parent=1 // loop_pre_header
      _
    $region3: #{_lambda_.3} parent=1 // loop_header
      %s18 = sphi 0, %s22
      %p19 = scmp.ge.s32.totalorder %s18, 4
      %s28 = sphi 0, %s30
      %s31 = sphi 0, %s28
      %s32 = sphi 0, %s31
      %s48 = sphi 0, %s32
      %s52 = sphi 0, %s52
      %s54 = sphi 0, %s52
      %s55 = sphi 0, %s54
      %s69 = sphi 0, %s55
      %s73 = sphi 0, %s73
      %s75 = sphi 0, %s73
      %s76 = sphi 0, %s75
      %s90 = sphi 0, %s76
      %s94 = sphi 0, %s94
      %s96 = sphi 0, %s94
      %s97 = sphi 0, %s96
      %s111 = sphi 0, %s97
      %s115 = sphi 0, %s115
      %s117 = sphi 0, %s115
      %s118 = sphi 0, %s117
      %s132 = sphi 0, %s118
      %s136 = sphi 0, %s136
      %s138 = sphi 0, %s136
      %s139 = sphi 0, %s138
      %s153 = sphi 0, %s139
      %s157 = sphi 0, %s157
      %s159 = sphi 0, %s157
      %s160 = sphi 0, %s159
      %s174 = sphi 0, %s160
      %s178 = sphi 0, %s178
      %s180 = sphi 0, %s178
      %s181 = sphi 0, %s180
      %s195 = sphi 0, %s181
      %s199 = sphi 0, %s199
      %s201 = sphi 0, %s199
      %s202 = sphi 0, %s201
      %s216 = sphi 0, %s202
      %s222 = sphi 0, %s224
      %s225 = sphi 0, %s222
      %s226 = sphi 0, %s225
      %s242 = sphi 0, %s226
    $region4: #{_lambda_.3} parent=1 // loop_header_branch
      %21 = sbr.rel (%p19) target = $region8
    $region5: #{_lambda_.3} parent=1 // loop_body
      %s23 = ssub.s32 %s18, 1
      %s24 = ssub.s32 %s18, 2
      %s25 = sadd.s32 %s18, 1
      %s26 = ssub.s32 %s18, %s25
      %p27 = scmp.eq.s32.totalorder %s26, 0
      %s29 = sadd.s32 %s28, 1
      %s30 = scalar_select %p27, %s28, %s29
      %p33 = pneg %p27
      %p34 = scmp.eq.s32.totalorder %s18, 1
      %p35 = por %p33, %p34
      %p36 = scmp.ne.s32.totalorder %s28, %s31
      %p37 = scmp.eq.s32.totalorder %s18, 0
      %p38 = por %p36, %p37
      %p39 = scmp.ne.s32.totalorder %s28, %s31
      %p40 = scmp.eq.s32.totalorder %s23, 1
      %p41 = por %p39, %p40
      %p42 = scmp.ne.s32.totalorder %s31, %s32
      %p43 = scmp.eq.s32.totalorder %s23, 0
      %p44 = por %p42, %p43
      %p45 = scmp.ne.s32.totalorder %s31, %s32
      %p46 = scmp.eq.s32.totalorder %s24, 1
      %p47 = por %p45, %p46
      %p49 = scmp.ne.s32.totalorder %s32, %s48
      %p50 = scmp.eq.s32.totalorder %s24, 0
      %p51 = por %p49, %p50
      %s53 = sadd.s32 %s52, 1
      %p56 = scmp.eq.s32.totalorder %s18, 1
      %p57 = scmp.ne.s32.totalorder %s52, %s54
      %p58 = scmp.eq.s32.totalorder %s18, 0
      %p59 = por %p57, %p58
      %p60 = scmp.ne.s32.totalorder %s52, %s54
      %p61 = scmp.eq.s32.totalorder %s23, 1
      %p62 = por %p60, %p61
      %p63 = scmp.ne.s32.totalorder %s54, %s55
      %p64 = scmp.eq.s32.totalorder %s23, 0
      %p65 = por %p63, %p64
      %p66 = scmp.ne.s32.totalorder %s54, %s55
      %p67 = scmp.eq.s32.totalorder %s24, 1
      %p68 = por %p66, %p67
      %p70 = scmp.ne.s32.totalorder %s55, %s69
      %p71 = scmp.eq.s32.totalorder %s24, 0
      %p72 = por %p70, %p71
      %s74 = sadd.s32 %s73, 1
      %p77 = scmp.eq.s32.totalorder %s18, 1
      %p78 = scmp.ne.s32.totalorder %s73, %s75
      %p79 = scmp.eq.s32.totalorder %s18, 0
      %p80 = por %p78, %p79
      %p81 = scmp.ne.s32.totalorder %s73, %s75
      %p82 = scmp.eq.s32.totalorder %s23, 1
      %p83 = por %p81, %p82
      %p84 = scmp.ne.s32.totalorder %s75, %s76
      %p85 = scmp.eq.s32.totalorder %s23, 0
      %p86 = por %p84, %p85
      %p87 = scmp.ne.s32.totalorder %s75, %s76
      %p88 = scmp.eq.s32.totalorder %s24, 1
      %p89 = por %p87, %p88
      %p91 = scmp.ne.s32.totalorder %s76, %s90
      %p92 = scmp.eq.s32.totalorder %s24, 0
      %p93 = por %p91, %p92
      %s95 = sadd.s32 %s94, 1
      %p98 = scmp.eq.s32.totalorder %s18, 1
      %p99 = scmp.ne.s32.totalorder %s94, %s96
      %p100 = scmp.eq.s32.totalorder %s18, 0
      %p101 = por %p99, %p100
      %p102 = scmp.ne.s32.totalorder %s94, %s96
      %p103 = scmp.eq.s32.totalorder %s23, 1
      %p104 = por %p102, %p103
      %p105 = scmp.ne.s32.totalorder %s96, %s97
      %p106 = scmp.eq.s32.totalorder %s23, 0
      %p107 = por %p105, %p106
      %p108 = scmp.ne.s32.totalorder %s96, %s97
      %p109 = scmp.eq.s32.totalorder %s24, 1
      %p110 = por %p108, %p109
      %p112 = scmp.ne.s32.totalorder %s97, %s111
      %p113 = scmp.eq.s32.totalorder %s24, 0
      %p114 = por %p112, %p113
      %s116 = sadd.s32 %s115, 1
      %p119 = scmp.eq.s32.totalorder %s18, 1
      %p120 = scmp.ne.s32.totalorder %s115, %s117
      %p121 = scmp.eq.s32.totalorder %s18, 0
      %p122 = por %p120, %p121
      %p123 = scmp.ne.s32.totalorder %s115, %s117
      %p124 = scmp.eq.s32.totalorder %s23, 1
      %p125 = por %p123, %p124
      %p126 = scmp.ne.s32.totalorder %s117, %s118
      %p127 = scmp.eq.s32.totalorder %s23, 0
      %p128 = por %p126, %p127
      %p129 = scmp.ne.s32.totalorder %s117, %s118
      %p130 = scmp.eq.s32.totalorder %s24, 1
      %p131 = por %p129, %p130
      %p133 = scmp.ne.s32.totalorder %s118, %s132
      %p134 = scmp.eq.s32.totalorder %s24, 0
      %p135 = por %p133, %p134
      %s137 = sadd.s32 %s136, 1
      %p140 = scmp.eq.s32.totalorder %s18, 1
      %p141 = scmp.ne.s32.totalorder %s136, %s138
      %p142 = scmp.eq.s32.totalorder %s18, 0
      %p143 = por %p141, %p142
      %p144 = scmp.ne.s32.totalorder %s136, %s138
      %p145 = scmp.eq.s32.totalorder %s23, 1
      %p146 = por %p144, %p145
      %p147 = scmp.ne.s32.totalorder %s138, %s139
      %p148 = scmp.eq.s32.totalorder %s23, 0
      %p149 = por %p147, %p148
      %p150 = scmp.ne.s32.totalorder %s138, %s139
      %p151 = scmp.eq.s32.totalorder %s24, 1
      %p152 = por %p150, %p151
      %p154 = scmp.ne.s32.totalorder %s139, %s153
      %p155 = scmp.eq.s32.totalorder %s24, 0
      %p156 = por %p154, %p155
      %s158 = sadd.s32 %s157, 1
      %p161 = scmp.eq.s32.totalorder %s18, 1
      %p162 = scmp.ne.s32.totalorder %s157, %s159
      %p163 = scmp.eq.s32.totalorder %s18, 0
      %p164 = por %p162, %p163
      %p165 = scmp.ne.s32.totalorder %s157, %s159
      %p166 = scmp.eq.s32.totalorder %s23, 1
      %p167 = por %p165, %p166
      %p168 = scmp.ne.s32.totalorder %s159, %s160
      %p169 = scmp.eq.s32.totalorder %s23, 0
      %p170 = por %p168, %p169
      %p171 = scmp.ne.s32.totalorder %s159, %s160
      %p172 = scmp.eq.s32.totalorder %s24, 1
      %p173 = por %p171, %p172
      %p175 = scmp.ne.s32.totalorder %s160, %s174
      %p176 = scmp.eq.s32.totalorder %s24, 0
      %p177 = por %p175, %p176
      %s179 = sadd.s32 %s178, 1
      %p182 = scmp.eq.s32.totalorder %s18, 1
      %p183 = scmp.ne.s32.totalorder %s178, %s180
      %p184 = scmp.eq.s32.totalorder %s18, 0
      %p185 = por %p183, %p184
      %p186 = scmp.ne.s32.totalorder %s178, %s180
      %p187 = scmp.eq.s32.totalorder %s23, 1
      %p188 = por %p186, %p187
      %p189 = scmp.ne.s32.totalorder %s180, %s181
      %p190 = scmp.eq.s32.totalorder %s23, 0
      %p191 = por %p189, %p190
      %p192 = scmp.ne.s32.totalorder %s180, %s181
      %p193 = scmp.eq.s32.totalorder %s24, 1
      %p194 = por %p192, %p193
      %p196 = scmp.ne.s32.totalorder %s181, %s195
      %p197 = scmp.eq.s32.totalorder %s24, 0
      %p198 = por %p196, %p197
      %s200 = sadd.s32 %s199, 1
      %p203 = scmp.eq.s32.totalorder %s18, 1
      %p204 = scmp.ne.s32.totalorder %s199, %s201
      %p205 = scmp.eq.s32.totalorder %s18, 0
      %p206 = por %p204, %p205
      %p207 = scmp.ne.s32.totalorder %s199, %s201
      %p208 = scmp.eq.s32.totalorder %s23, 1
      %p209 = por %p207, %p208
      %p210 = scmp.ne.s32.totalorder %s201, %s202
      %p211 = scmp.eq.s32.totalorder %s23, 0
      %p212 = por %p210, %p211
      %p213 = scmp.ne.s32.totalorder %s201, %s202
      %p214 = scmp.eq.s32.totalorder %s24, 1
      %p215 = por %p213, %p214
      %p217 = scmp.ne.s32.totalorder %s202, %s216
      %p218 = scmp.eq.s32.totalorder %s24, 0
      %p219 = por %p217, %p218
      %s220 = ssub.s32 %s18, %s25
      %p221 = scmp.eq.s32.totalorder %s220, 0
      %s223 = sadd.s32 %s222, 1
      %s224 = scalar_select %p221, %s222, %s223
      %p227 = pneg %p221
      %p228 = scmp.eq.s32.totalorder %s18, 1
      %p229 = por %p227, %p228
      %p230 = scmp.ne.s32.totalorder %s222, %s225
      %p231 = scmp.eq.s32.totalorder %s18, 0
      %p232 = por %p230, %p231
      %p233 = scmp.ne.s32.totalorder %s222, %s225
      %p234 = scmp.eq.s32.totalorder %s23, 1
      %p235 = por %p233, %p234
      %p236 = scmp.ne.s32.totalorder %s225, %s226
      %p237 = scmp.eq.s32.totalorder %s23, 0
      %p238 = por %p236, %p237
      %p239 = scmp.ne.s32.totalorder %s225, %s226
      %p240 = scmp.eq.s32.totalorder %s24, 1
      %p241 = por %p239, %p240
      %p243 = scmp.ne.s32.totalorder %s226, %s242
      %p244 = scmp.eq.s32.totalorder %s24, 0
      %p245 = por %p243, %p244
      %p246 = scmp.le.s32.totalorder 1, %s18
      %p247 = scmp.lt.s32.totalorder %s18, 3
      %p248 = pnand %p246, %p247
      %p249 = pneg %p248
      // Predicated region
      $region9: #{_lambda_.3} parent=5 // pred_check
        _
      $region10: #{_lambda_.3} parent=5 // pred_check_branch
        %251 = sbr.rel (%p248) target = $region12
      $region11: #{_lambda_.3} parent=5 // pred_region
        %s252 = ssub.s32 %s18, 1
        // Predicated region
        $region13: #{_lambda_.3} parent=11 // pred_check
          %p253 = pneg %p65
        $region14: #{_lambda_.3} parent=11 // pred_check_branch
          %255 = sbr.rel (%p253) target = $region16
        $region15: #{_lambda_.3} parent=11 // pred_region
          _
        $region16: #{_lambda_.3} parent=11 // pred_fallthru
          _
        // Predicated region
        $region17: #{_lambda_.3} parent=11 // pred_check
          %p256 = pneg %p86
        $region18: #{_lambda_.3} parent=11 // pred_check_branch
          %258 = sbr.rel (%p256) target = $region20
        $region19: #{_lambda_.3} parent=11 // pred_region
          _
        $region20: #{_lambda_.3} parent=11 // pred_fallthru
          _
        // Predicated region
        $region21: #{_lambda_.3} parent=11 // pred_check
          %p259 = pneg %p107
        $region22: #{_lambda_.3} parent=11 // pred_check_branch
          %261 = sbr.rel (%p259) target = $region24
        $region23: #{_lambda_.3} parent=11 // pred_region
          _
        $region24: #{_lambda_.3} parent=11 // pred_fallthru
          _
        // Predicated region
        $region25: #{_lambda_.3} parent=11 // pred_check
          %p262 = pneg %p128
        $region26: #{_lambda_.3} parent=11 // pred_check_branch
          %264 = sbr.rel (%p262) target = $region28
        $region27: #{_lambda_.3} parent=11 // pred_region
          _
        $region28: #{_lambda_.3} parent=11 // pred_fallthru
          _
        // Predicated region
        $region29: #{_lambda_.3} parent=11 // pred_check
          %p265 = pneg %p149
        $region30: #{_lambda_.3} parent=11 // pred_check_branch
          %267 = sbr.rel (%p265) target = $region32
        $region31: #{_lambda_.3} parent=11 // pred_region
          _
        $region32: #{_lambda_.3} parent=11 // pred_fallthru
          _
        // Predicated region
        $region33: #{_lambda_.3} parent=11 // pred_check
          %p268 = pneg %p170
        $region34: #{_lambda_.3} parent=11 // pred_check_branch
          %270 = sbr.rel (%p268) target = $region36
        $region35: #{_lambda_.3} parent=11 // pred_region
          _
        $region36: #{_lambda_.3} parent=11 // pred_fallthru
          _
        // Predicated region
        $region37: #{_lambda_.3} parent=11 // pred_check
          %p271 = pneg %p191
        $region38: #{_lambda_.3} parent=11 // pred_check_branch
          %273 = sbr.rel (%p271) target = $region40
        $region39: #{_lambda_.3} parent=11 // pred_region
          _
        $region40: #{_lambda_.3} parent=11 // pred_fallthru
          _
        // Predicated region
        $region41: #{_lambda_.3} parent=11 // pred_check
          %p274 = pneg %p212
        $region42: #{_lambda_.3} parent=11 // pred_check_branch
          %276 = sbr.rel (%p274) target = $region44
        $region43: #{_lambda_.3} parent=11 // pred_region
          _
        $region44: #{_lambda_.3} parent=11 // pred_fallthru
          _
      $region12: #{_lambda_.3} parent=5 // pred_fallthru
        _
      %p277 = scmp.lt.s32.totalorder %s18, 2
      // Predicated region
      $region45: #{_lambda_.3} parent=5 // pred_check
        %p278 = pneg %p277
      $region46: #{_lambda_.3} parent=5 // pred_check_branch
        %280 = sbr.rel (%p278) target = $region48
      $region47: #{_lambda_.3} parent=5 // pred_region
        // Predicated region
        $region49: #{_lambda_.3} parent=47 // pred_check
          %p281 = pneg %p38
        $region50: #{_lambda_.3} parent=47 // pred_check_branch
          %283 = sbr.rel (%p281) target = $region52
        $region51: #{_lambda_.3} parent=47 // pred_region
          %p284 = scmp.lt.s32.totalorder %s18, 1
          %s285 = scalar_select %p284, %s18, 1
          %s286 = smul.addr %s285, 32
          %s287 = smul.addr %s286, 8
          %s288 = scalar_lea.vmem %s0, %s287
        $region52: #{_lambda_.3} parent=47 // pred_fallthru
          _
      $region48: #{_lambda_.3} parent=5 // pred_fallthru
        _
      %p289 = scmp.le.s32.totalorder 1, %s18
      %p290 = scmp.lt.s32.totalorder %s18, 3
      %p291 = pnand %p289, %p290
      %p292 = pneg %p291
      // Predicated region
      $region53: #{_lambda_.3} parent=5 // pred_check
        _
      $region54: #{_lambda_.3} parent=5 // pred_check_branch
        %294 = sbr.rel (%p291) target = $region56
      $region55: #{_lambda_.3} parent=5 // pred_region
        %s295 = ssub.s32 %s18, 1
        %p296 = scmp.lt.s32.totalorder %s23, 1
        %s297 = scalar_select %p296, %s23, 1
        %s298 = smul.addr %s297, 32
        %s299 = smul.addr %s298, 8
        %s300 = scalar_lea.vmem %s0, %s299
        %p301 = pneg %p44
        %p302 = pneg %p41
        %p303 = pneg %p65
        %p304 = pneg %p62
        %p305 = pneg %p86
        %p306 = pneg %p83
        %p307 = pneg %p107
        %p308 = pneg %p104
        %p309 = pneg %p128
        %p310 = pneg %p125
        %p311 = pneg %p149
        %p312 = pneg %p146
        %p313 = pneg %p170
        %p314 = pneg %p167
        %p315 = pneg %p191
        %p316 = pneg %p188
        %p317 = pneg %p212
        %p318 = pneg %p209
        %p319 = pneg %p238
        %p320 = pneg %p235
        %s321 = sand.u32 %s225, 1
        %s322 = scalar_lea.sflag [#allocation4], %s321
        %s323 = sand.u32 %s225, 1
        %s324 = smul.addr %s323, 256
        %s325 = scalar_lea.vmem [#allocation3], %s324
        %p326 = scmp.lt.s32.totalorder %s23, 1
        %s327 = scalar_select %p326, %s23, 1
        %s328 = smul.addr %s327, 32
        %s329 = smul.addr %s328, 8
        %s330 = scalar_lea.vmem %s0, %s329
        %v331 = vld [vmem:[%s330] sm:$0xff]
        %v332 = vld [vmem:[%s330 + $0x8] sm:$0xff]
        %v333 = vld [vmem:[%s330 + $0x10] sm:$0xff]
        %v334 = vld [vmem:[%s330 + $0x18] sm:$0xff]
        %v335 = vld [vmem:[%s330 + $0x20] sm:$0xff]
        %v336 = vld [vmem:[%s330 + $0x28] sm:$0xff]
        %v337 = vld [vmem:[%s330 + $0x30] sm:$0xff]
        %v338 = vld [vmem:[%s330 + $0x38] sm:$0xff]
        %v339 = vld [vmem:[%s330 + $0x40] sm:$0xff]
        %v340 = vld [vmem:[%s330 + $0x48] sm:$0xff]
        %v341 = vld [vmem:[%s330 + $0x50] sm:$0xff]
        %v342 = vld [vmem:[%s330 + $0x58] sm:$0xff]
        %v343 = vld [vmem:[%s330 + $0x60] sm:$0xff]
        %v344 = vld [vmem:[%s330 + $0x68] sm:$0xff]
        %v345 = vld [vmem:[%s330 + $0x70] sm:$0xff]
        %v346 = vld [vmem:[%s330 + $0x78] sm:$0xff]
        %v347 = vld [vmem:[%s330 + $0x80] sm:$0xff]
        %v348 = vld [vmem:[%s330 + $0x88] sm:$0xff]
        %v349 = vld [vmem:[%s330 + $0x90] sm:$0xff]
        %v350 = vld [vmem:[%s330 + $0x98] sm:$0xff]
        %v351 = vld [vmem:[%s330 + $0xa0] sm:$0xff]
        %v352 = vld [vmem:[%s330 + $0xa8] sm:$0xff]
        %v353 = vld [vmem:[%s330 + $0xb0] sm:$0xff]
        %v354 = vld [vmem:[%s330 + $0xb8] sm:$0xff]
        %v355 = vld [vmem:[%s330 + $0xc0] sm:$0xff]
        %v356 = vld [vmem:[%s330 + $0xc8] sm:$0xff]
        %v357 = vld [vmem:[%s330 + $0xd0] sm:$0xff]
        %v358 = vld [vmem:[%s330 + $0xd8] sm:$0xff]
        %v359 = vld [vmem:[%s330 + $0xe0] sm:$0xff]
        %v360 = vld [vmem:[%s330 + $0xe8] sm:$0xff]
        %v361 = vld [vmem:[%s330 + $0xf0] sm:$0xff]
        %v362 = vld [vmem:[%s330 + $0xf8] sm:$0xff]
        %v363 = vld [vmem:[%s1] sm:$0x1]
        %v364 = vld [vmem:[%s2] sm:$0x1]
        %vm365 = vcmask 261120
        %v366 = vsel %vm365, %v331, 0.0
        %367 = vadd.xlane.f32.xlu0 %v366
        %v368 = vpop.xlane.xlu0 %367
        %v369 = vsel %vm365, %v332, 0.0
        %370 = vadd.xlane.f32.xlu0 %v369
        %v371 = vpop.xlane.xlu0 %370
        %v372 = vsel %vm365, %v333, 0.0
        %373 = vadd.xlane.f32.xlu0 %v372
        %v374 = vpop.xlane.xlu0 %373
        %v375 = vsel %vm365, %v334, 0.0
        %376 = vadd.xlane.f32.xlu0 %v375
        %v377 = vpop.xlane.xlu0 %376
        %v378 = vsel %vm365, %v335, 0.0
        %379 = vadd.xlane.f32.xlu0 %v378
        %v380 = vpop.xlane.xlu0 %379
        %v381 = vsel %vm365, %v336, 0.0
        %382 = vadd.xlane.f32.xlu0 %v381
        %v383 = vpop.xlane.xlu0 %382
        %v384 = vsel %vm365, %v337, 0.0
        %385 = vadd.xlane.f32.xlu0 %v384
        %v386 = vpop.xlane.xlu0 %385
        %v387 = vsel %vm365, %v338, 0.0
        %388 = vadd.xlane.f32.xlu0 %v387
        %v389 = vpop.xlane.xlu0 %388
        %v390 = vsel %vm365, %v339, 0.0
        %391 = vadd.xlane.f32.xlu0 %v390
        %v392 = vpop.xlane.xlu0 %391
        %v393 = vsel %vm365, %v340, 0.0
        %394 = vadd.xlane.f32.xlu0 %v393
        %v395 = vpop.xlane.xlu0 %394
        %v396 = vsel %vm365, %v341, 0.0
        %397 = vadd.xlane.f32.xlu0 %v396
        %v398 = vpop.xlane.xlu0 %397
        %v399 = vsel %vm365, %v342, 0.0
        %400 = vadd.xlane.f32.xlu0 %v399
        %v401 = vpop.xlane.xlu0 %400
        %v402 = vsel %vm365, %v343, 0.0
        %403 = vadd.xlane.f32.xlu0 %v402
        %v404 = vpop.xlane.xlu0 %403
        %v405 = vsel %vm365, %v344, 0.0
        %406 = vadd.xlane.f32.xlu0 %v405
        %v407 = vpop.xlane.xlu0 %406
        %v408 = vsel %vm365, %v345, 0.0
        %409 = vadd.xlane.f32.xlu0 %v408
        %v410 = vpop.xlane.xlu0 %409
        %v411 = vsel %vm365, %v346, 0.0
        %412 = vadd.xlane.f32.xlu0 %v411
        %v413 = vpop.xlane.xlu0 %412
        %v414 = vsel %vm365, %v347, 0.0
        %415 = vadd.xlane.f32.xlu0 %v414
        %v416 = vpop.xlane.xlu0 %415
        %v417 = vsel %vm365, %v348, 0.0
        %418 = vadd.xlane.f32.xlu0 %v417
        %v419 = vpop.xlane.xlu0 %418
        %v420 = vsel %vm365, %v349, 0.0
        %421 = vadd.xlane.f32.xlu0 %v420
        %v422 = vpop.xlane.xlu0 %421
        %v423 = vsel %vm365, %v350, 0.0
        %424 = vadd.xlane.f32.xlu0 %v423
        %v425 = vpop.xlane.xlu0 %424
        %v426 = vsel %vm365, %v351, 0.0
        %427 = vadd.xlane.f32.xlu0 %v426
        %v428 = vpop.xlane.xlu0 %427
        %v429 = vsel %vm365, %v352, 0.0
        %430 = vadd.xlane.f32.xlu0 %v429
        %v431 = vpop.xlane.xlu0 %430
        %v432 = vsel %vm365, %v353, 0.0
        %433 = vadd.xlane.f32.xlu0 %v432
        %v434 = vpop.xlane.xlu0 %433
        %v435 = vsel %vm365, %v354, 0.0
        %436 = vadd.xlane.f32.xlu0 %v435
        %v437 = vpop.xlane.xlu0 %436
        %v438 = vsel %vm365, %v355, 0.0
        %439 = vadd.xlane.f32.xlu0 %v438
        %v440 = vpop.xlane.xlu0 %439
        %v441 = vsel %vm365, %v356, 0.0
        %442 = vadd.xlane.f32.xlu0 %v441
        %v443 = vpop.xlane.xlu0 %442
        %v444 = vsel %vm365, %v357, 0.0
        %445 = vadd.xlane.f32.xlu0 %v444
        %v446 = vpop.xlane.xlu0 %445
        %v447 = vsel %vm365, %v358, 0.0
        %448 = vadd.xlane.f32.xlu0 %v447
        %v449 = vpop.xlane.xlu0 %448
        %v450 = vsel %vm365, %v359, 0.0
        %451 = vadd.xlane.f32.xlu0 %v450
        %v452 = vpop.xlane.xlu0 %451
        %v453 = vsel %vm365, %v360, 0.0
        %454 = vadd.xlane.f32.xlu0 %v453
        %v455 = vpop.xlane.xlu0 %454
        %v456 = vsel %vm365, %v361, 0.0
        %457 = vadd.xlane.f32.xlu0 %v456
        %v458 = vpop.xlane.xlu0 %457
        %v459 = vsel %vm365, %v362, 0.0
        %460 = vadd.xlane.f32.xlu0 %v459
        %v461 = vpop.xlane.xlu0 %460
        %v462 = vrcp.pop 32.0
        %v463 = vmul.f32 32.0, %v462
        %v464 = vsub.f32 1.0, %v463
        %v465 = vmul.f32 %v462, %v464
        %v466 = vadd.f32 %v462, %v465
        %vm467 = vweird.f32 %v462
        %v468 = vsel %vm467, %v462, %v466
        %v469 = vmul.f32 %v368, %v468
        %v470 = vmul.f32 %v371, %v468
        %v471 = vmul.f32 %v374, %v468
        %v472 = vmul.f32 %v377, %v468
        %v473 = vmul.f32 %v380, %v468
        %v474 = vmul.f32 %v383, %v468
        %v475 = vmul.f32 %v386, %v468
        %v476 = vmul.f32 %v389, %v468
        %v477 = vmul.f32 %v392, %v468
        %v478 = vmul.f32 %v395, %v468
        %v479 = vmul.f32 %v398, %v468
        %v480 = vmul.f32 %v401, %v468
        %v481 = vmul.f32 %v404, %v468
        %v482 = vmul.f32 %v407, %v468
        %v483 = vmul.f32 %v410, %v468
        %v484 = vmul.f32 %v413, %v468
        %v485 = vmul.f32 %v416, %v468
        %v486 = vmul.f32 %v419, %v468
        %v487 = vmul.f32 %v422, %v468
        %v488 = vmul.f32 %v425, %v468
        %v489 = vmul.f32 %v428, %v468
        %v490 = vmul.f32 %v431, %v468
        %v491 = vmul.f32 %v434, %v468
        %v492 = vmul.f32 %v437, %v468
        %v493 = vmul.f32 %v440, %v468
        %v494 = vmul.f32 %v443, %v468
        %v495 = vmul.f32 %v446, %v468
        %v496 = vmul.f32 %v449, %v468
        %v497 = vmul.f32 %v452, %v468
        %v498 = vmul.f32 %v455, %v468
        %v499 = vmul.f32 %v458, %v468
        %v500 = vmul.f32 %v461, %v468
        %v501 = vsub.f32 %v331, %v469
        %v502 = vsub.f32 %v332, %v470
        %v503 = vsub.f32 %v333, %v471
        %v504 = vsub.f32 %v334, %v472
        %v505 = vsub.f32 %v335, %v473
        %v506 = vsub.f32 %v336, %v474
        %v507 = vsub.f32 %v337, %v475
        %v508 = vsub.f32 %v338, %v476
        %v509 = vsub.f32 %v339, %v477
        %v510 = vsub.f32 %v340, %v478
        %v511 = vsub.f32 %v341, %v479
        %v512 = vsub.f32 %v342, %v480
        %v513 = vsub.f32 %v343, %v481
        %v514 = vsub.f32 %v344, %v482
        %v515 = vsub.f32 %v345, %v483
        %v516 = vsub.f32 %v346, %v484
        %v517 = vsub.f32 %v347, %v485
        %v518 = vsub.f32 %v348, %v486
        %v519 = vsub.f32 %v349, %v487
        %v520 = vsub.f32 %v350, %v488
        %v521 = vsub.f32 %v351, %v489
        %v522 = vsub.f32 %v352, %v490
        %v523 = vsub.f32 %v353, %v491
        %v524 = vsub.f32 %v354, %v492
        %v525 = vsub.f32 %v355, %v493
        %v526 = vsub.f32 %v356, %v494
        %v527 = vsub.f32 %v357, %v495
        %v528 = vsub.f32 %v358, %v496
        %v529 = vsub.f32 %v359, %v497
        %v530 = vsub.f32 %v360, %v498
        %v531 = vsub.f32 %v361, %v499
        %v532 = vsub.f32 %v362, %v500
        %v533 = vmul.f32 %v501, %v501
        %v534 = vmul.f32 %v502, %v502
        %v535 = vmul.f32 %v503, %v503
        %v536 = vmul.f32 %v504, %v504
        %v537 = vmul.f32 %v505, %v505
        %v538 = vmul.f32 %v506, %v506
        %v539 = vmul.f32 %v507, %v507
        %v540 = vmul.f32 %v508, %v508
        %v541 = vmul.f32 %v509, %v509
        %v542 = vmul.f32 %v510, %v510
        %v543 = vmul.f32 %v511, %v511
        %v544 = vmul.f32 %v512, %v512
        %v545 = vmul.f32 %v513, %v513
        %v546 = vmul.f32 %v514, %v514
        %v547 = vmul.f32 %v515, %v515
        %v548 = vmul.f32 %v516, %v516
        %v549 = vmul.f32 %v517, %v517
        %v550 = vmul.f32 %v518, %v518
        %v551 = vmul.f32 %v519, %v519
        %v552 = vmul.f32 %v520, %v520
        %v553 = vmul.f32 %v521, %v521
        %v554 = vmul.f32 %v522, %v522
        %v555 = vmul.f32 %v523, %v523
        %v556 = vmul.f32 %v524, %v524
        %v557 = vmul.f32 %v525, %v525
        %v558 = vmul.f32 %v526, %v526
        %v559 = vmul.f32 %v527, %v527
        %v560 = vmul.f32 %v528, %v528
        %v561 = vmul.f32 %v529, %v529
        %v562 = vmul.f32 %v530, %v530
        %v563 = vmul.f32 %v531, %v531
        %v564 = vmul.f32 %v532, %v532
        %v565 = vsel %vm365, %v533, 0.0
        %566 = vadd.xlane.f32.xlu0 %v565
        %v567 = vpop.xlane.xlu0 %566
        %v568 = vsel %vm365, %v534, 0.0
        %569 = vadd.xlane.f32.xlu0 %v568
        %v570 = vpop.xlane.xlu0 %569
        %v571 = vsel %vm365, %v535, 0.0
        %572 = vadd.xlane.f32.xlu0 %v571
        %v573 = vpop.xlane.xlu0 %572
        %v574 = vsel %vm365, %v536, 0.0
        %575 = vadd.xlane.f32.xlu0 %v574
        %v576 = vpop.xlane.xlu0 %575
        %v577 = vsel %vm365, %v537, 0.0
        %578 = vadd.xlane.f32.xlu0 %v577
        %v579 = vpop.xlane.xlu0 %578
        %v580 = vsel %vm365, %v538, 0.0
        %581 = vadd.xlane.f32.xlu0 %v580
        %v582 = vpop.xlane.xlu0 %581
        %v583 = vsel %vm365, %v539, 0.0
        %584 = vadd.xlane.f32.xlu0 %v583
        %v585 = vpop.xlane.xlu0 %584
        %v586 = vsel %vm365, %v540, 0.0
        %587 = vadd.xlane.f32.xlu0 %v586
        %v588 = vpop.xlane.xlu0 %587
        %v589 = vsel %vm365, %v541, 0.0
        %590 = vadd.xlane.f32.xlu0 %v589
        %v591 = vpop.xlane.xlu0 %590
        %v592 = vsel %vm365, %v542, 0.0
        %593 = vadd.xlane.f32.xlu0 %v592
        %v594 = vpop.xlane.xlu0 %593
        %v595 = vsel %vm365, %v543, 0.0
        %596 = vadd.xlane.f32.xlu0 %v595
        %v597 = vpop.xlane.xlu0 %596
        %v598 = vsel %vm365, %v544, 0.0
        %599 = vadd.xlane.f32.xlu0 %v598
        %v600 = vpop.xlane.xlu0 %599
        %v601 = vsel %vm365, %v545, 0.0
        %602 = vadd.xlane.f32.xlu0 %v601
        %v603 = vpop.xlane.xlu0 %602
        %v604 = vsel %vm365, %v546, 0.0
        %605 = vadd.xlane.f32.xlu0 %v604
        %v606 = vpop.xlane.xlu0 %605
        %v607 = vsel %vm365, %v547, 0.0
        %608 = vadd.xlane.f32.xlu0 %v607
        %v609 = vpop.xlane.xlu0 %608
        %v610 = vsel %vm365, %v548, 0.0
        %611 = vadd.xlane.f32.xlu0 %v610
        %v612 = vpop.xlane.xlu0 %611
        %v613 = vsel %vm365, %v549, 0.0
        %614 = vadd.xlane.f32.xlu0 %v613
        %v615 = vpop.xlane.xlu0 %614
        %v616 = vsel %vm365, %v550, 0.0
        %617 = vadd.xlane.f32.xlu0 %v616
        %v618 = vpop.xlane.xlu0 %617
        %v619 = vsel %vm365, %v551, 0.0
        %620 = vadd.xlane.f32.xlu0 %v619
        %v621 = vpop.xlane.xlu0 %620
        %v622 = vsel %vm365, %v552, 0.0
        %623 = vadd.xlane.f32.xlu0 %v622
        %v624 = vpop.xlane.xlu0 %623
        %v625 = vsel %vm365, %v553, 0.0
        %626 = vadd.xlane.f32.xlu0 %v625
        %v627 = vpop.xlane.xlu0 %626
        %v628 = vsel %vm365, %v554, 0.0
        %629 = vadd.xlane.f32.xlu0 %v628
        %v630 = vpop.xlane.xlu0 %629
        %v631 = vsel %vm365, %v555, 0.0
        %632 = vadd.xlane.f32.xlu0 %v631
        %v633 = vpop.xlane.xlu0 %632
        %v634 = vsel %vm365, %v556, 0.0
        %635 = vadd.xlane.f32.xlu0 %v634
        %v636 = vpop.xlane.xlu0 %635
        %v637 = vsel %vm365, %v557, 0.0
        %638 = vadd.xlane.f32.xlu0 %v637
        %v639 = vpop.xlane.xlu0 %638
        %v640 = vsel %vm365, %v558, 0.0
        %641 = vadd.xlane.f32.xlu0 %v640
        %v642 = vpop.xlane.xlu0 %641
        %v643 = vsel %vm365, %v559, 0.0
        %644 = vadd.xlane.f32.xlu0 %v643
        %v645 = vpop.xlane.xlu0 %644
        %v646 = vsel %vm365, %v560, 0.0
        %647 = vadd.xlane.f32.xlu0 %v646
        %v648 = vpop.xlane.xlu0 %647
        %v649 = vsel %vm365, %v561, 0.0
        %650 = vadd.xlane.f32.xlu0 %v649
        %v651 = vpop.xlane.xlu0 %650
        %v652 = vsel %vm365, %v562, 0.0
        %653 = vadd.xlane.f32.xlu0 %v652
        %v654 = vpop.xlane.xlu0 %653
        %v655 = vsel %vm365, %v563, 0.0
        %656 = vadd.xlane.f32.xlu0 %v655
        %v657 = vpop.xlane.xlu0 %656
        %v658 = vsel %vm365, %v564, 0.0
        %659 = vadd.xlane.f32.xlu0 %v658
        %v660 = vpop.xlane.xlu0 %659
        %v661 = vmul.f32 %v567, %v468
        %v662 = vmul.f32 %v570, %v468
        %v663 = vmul.f32 %v573, %v468
        %v664 = vmul.f32 %v576, %v468
        %v665 = vmul.f32 %v579, %v468
        %v666 = vmul.f32 %v582, %v468
        %v667 = vmul.f32 %v585, %v468
        %v668 = vmul.f32 %v588, %v468
        %v669 = vmul.f32 %v591, %v468
        %v670 = vmul.f32 %v594, %v468
        %v671 = vmul.f32 %v597, %v468
        %v672 = vmul.f32 %v600, %v468
        %v673 = vmul.f32 %v603, %v468
        %v674 = vmul.f32 %v606, %v468
        %v675 = vmul.f32 %v609, %v468
        %v676 = vmul.f32 %v612, %v468
        %v677 = vmul.f32 %v615, %v468
        %v678 = vmul.f32 %v618, %v468
        %v679 = vmul.f32 %v621, %v468
        %v680 = vmul.f32 %v624, %v468
        %v681 = vmul.f32 %v627, %v468
        %v682 = vmul.f32 %v630, %v468
        %v683 = vmul.f32 %v633, %v468
        %v684 = vmul.f32 %v636, %v468
        %v685 = vmul.f32 %v639, %v468
        %v686 = vmul.f32 %v642, %v468
        %v687 = vmul.f32 %v645, %v468
        %v688 = vmul.f32 %v648, %v468
        %v689 = vmul.f32 %v651, %v468
        %v690 = vmul.f32 %v654, %v468
        %v691 = vmul.f32 %v657, %v468
        %v692 = vmul.f32 %v660, %v468
        %v693 = vadd.f32 %v661, 1e-05
        %v694 = vadd.f32 %v662, 1e-05
        %v695 = vadd.f32 %v663, 1e-05
        %v696 = vadd.f32 %v664, 1e-05
        %v697 = vadd.f32 %v665, 1e-05
        %v698 = vadd.f32 %v666, 1e-05
        %v699 = vadd.f32 %v667, 1e-05
        %v700 = vadd.f32 %v668, 1e-05
        %v701 = vadd.f32 %v669, 1e-05
        %v702 = vadd.f32 %v670, 1e-05
        %v703 = vadd.f32 %v671, 1e-05
        %v704 = vadd.f32 %v672, 1e-05
        %v705 = vadd.f32 %v673, 1e-05
        %v706 = vadd.f32 %v674, 1e-05
        %v707 = vadd.f32 %v675, 1e-05
        %v708 = vadd.f32 %v676, 1e-05
        %v709 = vadd.f32 %v677, 1e-05
        %v710 = vadd.f32 %v678, 1e-05
        %v711 = vadd.f32 %v679, 1e-05
        %v712 = vadd.f32 %v680, 1e-05
        %v713 = vadd.f32 %v681, 1e-05
        %v714 = vadd.f32 %v682, 1e-05
        %v715 = vadd.f32 %v683, 1e-05
        %v716 = vadd.f32 %v684, 1e-05
        %v717 = vadd.f32 %v685, 1e-05
        %v718 = vadd.f32 %v686, 1e-05
        %v719 = vadd.f32 %v687, 1e-05
        %v720 = vadd.f32 %v688, 1e-05
        %v721 = vadd.f32 %v689, 1e-05
        %v722 = vadd.f32 %v690, 1e-05
        %v723 = vadd.f32 %v691, 1e-05
        %v724 = vadd.f32 %v692, 1e-05
        %v725 = vrsqrt.pop %v693
        %v726 = vmul.f32 %v725, %v693
        %v727 = vmul.f32 %v726, %v725
        %v728 = vmul.f32 0.5, %v727
        %v729 = vsub.f32 1.5, %v728
        %v730 = vmul.f32 %v725, %v729
        %vm731 = vweird.f32 %v693
        %vm732 = vweird.f32 %v725
        %vm733 = vmor %vm731, %vm732
        %v734 = vsel %vm733, %v725, %v730
        %v735 = vrsqrt.pop %v694
        %v736 = vmul.f32 %v735, %v694
        %v737 = vmul.f32 %v736, %v735
        %v738 = vmul.f32 0.5, %v737
        %v739 = vsub.f32 1.5, %v738
        %v740 = vmul.f32 %v735, %v739
        %vm741 = vweird.f32 %v694
        %vm742 = vweird.f32 %v735
        %vm743 = vmor %vm741, %vm742
        %v744 = vsel %vm743, %v735, %v740
        %v745 = vrsqrt.pop %v695
        %v746 = vmul.f32 %v745, %v695
        %v747 = vmul.f32 %v746, %v745
        %v748 = vmul.f32 0.5, %v747
        %v749 = vsub.f32 1.5, %v748
        %v750 = vmul.f32 %v745, %v749
        %vm751 = vweird.f32 %v695
        %vm752 = vweird.f32 %v745
        %vm753 = vmor %vm751, %vm752
        %v754 = vsel %vm753, %v745, %v750
        %v755 = vrsqrt.pop %v696
        %v756 = vmul.f32 %v755, %v696
        %v757 = vmul.f32 %v756, %v755
        %v758 = vmul.f32 0.5, %v757
        %v759 = vsub.f32 1.5, %v758
        %v760 = vmul.f32 %v755, %v759
        %vm761 = vweird.f32 %v696
        %vm762 = vweird.f32 %v755
        %vm763 = vmor %vm761, %vm762
        %v764 = vsel %vm763, %v755, %v760
        %v765 = vrsqrt.pop %v697
        %v766 = vmul.f32 %v765, %v697
        %v767 = vmul.f32 %v766, %v765
        %v768 = vmul.f32 0.5, %v767
        %v769 = vsub.f32 1.5, %v768
        %v770 = vmul.f32 %v765, %v769
        %vm771 = vweird.f32 %v697
        %vm772 = vweird.f32 %v765
        %vm773 = vmor %vm771, %vm772
        %v774 = vsel %vm773, %v765, %v770
        %v775 = vrsqrt.pop %v698
        %v776 = vmul.f32 %v775, %v698
        %v777 = vmul.f32 %v776, %v775
        %v778 = vmul.f32 0.5, %v777
        %v779 = vsub.f32 1.5, %v778
        %v780 = vmul.f32 %v775, %v779
        %vm781 = vweird.f32 %v698
        %vm782 = vweird.f32 %v775
        %vm783 = vmor %vm781, %vm782
        %v784 = vsel %vm783, %v775, %v780
        %v785 = vrsqrt.pop %v699
        %v786 = vmul.f32 %v785, %v699
        %v787 = vmul.f32 %v786, %v785
        %v788 = vmul.f32 0.5, %v787
        %v789 = vsub.f32 1.5, %v788
        %v790 = vmul.f32 %v785, %v789
        %vm791 = vweird.f32 %v699
        %vm792 = vweird.f32 %v785
        %vm793 = vmor %vm791, %vm792
        %v794 = vsel %vm793, %v785, %v790
        %v795 = vrsqrt.pop %v700
        %v796 = vmul.f32 %v795, %v700
        %v797 = vmul.f32 %v796, %v795
        %v798 = vmul.f32 0.5, %v797
        %v799 = vsub.f32 1.5, %v798
        %v800 = vmul.f32 %v795, %v799
        %vm801 = vweird.f32 %v700
        %vm802 = vweird.f32 %v795
        %vm803 = vmor %vm801, %vm802
        %v804 = vsel %vm803, %v795, %v800
        %v805 = vrsqrt.pop %v701
        %v806 = vmul.f32 %v805, %v701
        %v807 = vmul.f32 %v806, %v805
        %v808 = vmul.f32 0.5, %v807
        %v809 = vsub.f32 1.5, %v808
        %v810 = vmul.f32 %v805, %v809
        %vm811 = vweird.f32 %v701
        %vm812 = vweird.f32 %v805
        %vm813 = vmor %vm811, %vm812
        %v814 = vsel %vm813, %v805, %v810
        %v815 = vrsqrt.pop %v702
        %v816 = vmul.f32 %v815, %v702
        %v817 = vmul.f32 %v816, %v815
        %v818 = vmul.f32 0.5, %v817
        %v819 = vsub.f32 1.5, %v818
        %v820 = vmul.f32 %v815, %v819
        %vm821 = vweird.f32 %v702
        %vm822 = vweird.f32 %v815
        %vm823 = vmor %vm821, %vm822
        %v824 = vsel %vm823, %v815, %v820
        %v825 = vrsqrt.pop %v703
        %v826 = vmul.f32 %v825, %v703
        %v827 = vmul.f32 %v826, %v825
        %v828 = vmul.f32 0.5, %v827
        %v829 = vsub.f32 1.5, %v828
        %v830 = vmul.f32 %v825, %v829
        %vm831 = vweird.f32 %v703
        %vm832 = vweird.f32 %v825
        %vm833 = vmor %vm831, %vm832
        %v834 = vsel %vm833, %v825, %v830
        %v835 = vrsqrt.pop %v704
        %v836 = vmul.f32 %v835, %v704
        %v837 = vmul.f32 %v836, %v835
        %v838 = vmul.f32 0.5, %v837
        %v839 = vsub.f32 1.5, %v838
        %v840 = vmul.f32 %v835, %v839
        %vm841 = vweird.f32 %v704
        %vm842 = vweird.f32 %v835
        %vm843 = vmor %vm841, %vm842
        %v844 = vsel %vm843, %v835, %v840
        %v845 = vrsqrt.pop %v705
        %v846 = vmul.f32 %v845, %v705
        %v847 = vmul.f32 %v846, %v845
        %v848 = vmul.f32 0.5, %v847
        %v849 = vsub.f32 1.5, %v848
        %v850 = vmul.f32 %v845, %v849
        %vm851 = vweird.f32 %v705
        %vm852 = vweird.f32 %v845
        %vm853 = vmor %vm851, %vm852
        %v854 = vsel %vm853, %v845, %v850
        %v855 = vrsqrt.pop %v706
        %v856 = vmul.f32 %v855, %v706
        %v857 = vmul.f32 %v856, %v855
        %v858 = vmul.f32 0.5, %v857
        %v859 = vsub.f32 1.5, %v858
        %v860 = vmul.f32 %v855, %v859
        %vm861 = vweird.f32 %v706
        %vm862 = vweird.f32 %v855
        %vm863 = vmor %vm861, %vm862
        %v864 = vsel %vm863, %v855, %v860
        %v865 = vrsqrt.pop %v707
        %v866 = vmul.f32 %v865, %v707
        %v867 = vmul.f32 %v866, %v865
        %v868 = vmul.f32 0.5, %v867
        %v869 = vsub.f32 1.5, %v868
        %v870 = vmul.f32 %v865, %v869
        %vm871 = vweird.f32 %v707
        %vm872 = vweird.f32 %v865
        %vm873 = vmor %vm871, %vm872
        %v874 = vsel %vm873, %v865, %v870
        %v875 = vrsqrt.pop %v708
        %v876 = vmul.f32 %v875, %v708
        %v877 = vmul.f32 %v876, %v875
        %v878 = vmul.f32 0.5, %v877
        %v879 = vsub.f32 1.5, %v878
        %v880 = vmul.f32 %v875, %v879
        %vm881 = vweird.f32 %v708
        %vm882 = vweird.f32 %v875
        %vm883 = vmor %vm881, %vm882
        %v884 = vsel %vm883, %v875, %v880
        %v885 = vrsqrt.pop %v709
        %v886 = vmul.f32 %v885, %v709
        %v887 = vmul.f32 %v886, %v885
        %v888 = vmul.f32 0.5, %v887
        %v889 = vsub.f32 1.5, %v888
        %v890 = vmul.f32 %v885, %v889
        %vm891 = vweird.f32 %v709
        %vm892 = vweird.f32 %v885
        %vm893 = vmor %vm891, %vm892
        %v894 = vsel %vm893, %v885, %v890
        %v895 = vrsqrt.pop %v710
        %v896 = vmul.f32 %v895, %v710
        %v897 = vmul.f32 %v896, %v895
        %v898 = vmul.f32 0.5, %v897
        %v899 = vsub.f32 1.5, %v898
        %v900 = vmul.f32 %v895, %v899
        %vm901 = vweird.f32 %v710
        %vm902 = vweird.f32 %v895
        %vm903 = vmor %vm901, %vm902
        %v904 = vsel %vm903, %v895, %v900
        %v905 = vrsqrt.pop %v711
        %v906 = vmul.f32 %v905, %v711
        %v907 = vmul.f32 %v906, %v905
        %v908 = vmul.f32 0.5, %v907
        %v909 = vsub.f32 1.5, %v908
        %v910 = vmul.f32 %v905, %v909
        %vm911 = vweird.f32 %v711
        %vm912 = vweird.f32 %v905
        %vm913 = vmor %vm911, %vm912
        %v914 = vsel %vm913, %v905, %v910
        %v915 = vrsqrt.pop %v712
        %v916 = vmul.f32 %v915, %v712
        %v917 = vmul.f32 %v916, %v915
        %v918 = vmul.f32 0.5, %v917
        %v919 = vsub.f32 1.5, %v918
        %v920 = vmul.f32 %v915, %v919
        %vm921 = vweird.f32 %v712
        %vm922 = vweird.f32 %v915
        %vm923 = vmor %vm921, %vm922
        %v924 = vsel %vm923, %v915, %v920
        %v925 = vrsqrt.pop %v713
        %v926 = vmul.f32 %v925, %v713
        %v927 = vmul.f32 %v926, %v925
        %v928 = vmul.f32 0.5, %v927
        %v929 = vsub.f32 1.5, %v928
        %v930 = vmul.f32 %v925, %v929
        %vm931 = vweird.f32 %v713
        %vm932 = vweird.f32 %v925
        %vm933 = vmor %vm931, %vm932
        %v934 = vsel %vm933, %v925, %v930
        %v935 = vrsqrt.pop %v714
        %v936 = vmul.f32 %v935, %v714
        %v937 = vmul.f32 %v936, %v935
        %v938 = vmul.f32 0.5, %v937
        %v939 = vsub.f32 1.5, %v938
        %v940 = vmul.f32 %v935, %v939
        %vm941 = vweird.f32 %v714
        %vm942 = vweird.f32 %v935
        %vm943 = vmor %vm941, %vm942
        %v944 = vsel %vm943, %v935, %v940
        %v945 = vrsqrt.pop %v715
        %v946 = vmul.f32 %v945, %v715
        %v947 = vmul.f32 %v946, %v945
        %v948 = vmul.f32 0.5, %v947
        %v949 = vsub.f32 1.5, %v948
        %v950 = vmul.f32 %v945, %v949
        %vm951 = vweird.f32 %v715
        %vm952 = vweird.f32 %v945
        %vm953 = vmor %vm951, %vm952
        %v954 = vsel %vm953, %v945, %v950
        %v955 = vrsqrt.pop %v716
        %v956 = vmul.f32 %v955, %v716
        %v957 = vmul.f32 %v956, %v955
        %v958 = vmul.f32 0.5, %v957
        %v959 = vsub.f32 1.5, %v958
        %v960 = vmul.f32 %v955, %v959
        %vm961 = vweird.f32 %v716
        %vm962 = vweird.f32 %v955
        %vm963 = vmor %vm961, %vm962
        %v964 = vsel %vm963, %v955, %v960
        %v965 = vrsqrt.pop %v717
        %v966 = vmul.f32 %v965, %v717
        %v967 = vmul.f32 %v966, %v965
        %v968 = vmul.f32 0.5, %v967
        %v969 = vsub.f32 1.5, %v968
        %v970 = vmul.f32 %v965, %v969
        %vm971 = vweird.f32 %v717
        %vm972 = vweird.f32 %v965
        %vm973 = vmor %vm971, %vm972
        %v974 = vsel %vm973, %v965, %v970
        %v975 = vrsqrt.pop %v718
        %v976 = vmul.f32 %v975, %v718
        %v977 = vmul.f32 %v976, %v975
        %v978 = vmul.f32 0.5, %v977
        %v979 = vsub.f32 1.5, %v978
        %v980 = vmul.f32 %v975, %v979
        %vm981 = vweird.f32 %v718
        %vm982 = vweird.f32 %v975
        %vm983 = vmor %vm981, %vm982
        %v984 = vsel %vm983, %v975, %v980
        %v985 = vrsqrt.pop %v719
        %v986 = vmul.f32 %v985, %v719
        %v987 = vmul.f32 %v986, %v985
        %v988 = vmul.f32 0.5, %v987
        %v989 = vsub.f32 1.5, %v988
        %v990 = vmul.f32 %v985, %v989
        %vm991 = vweird.f32 %v719
        %vm992 = vweird.f32 %v985
        %vm993 = vmor %vm991, %vm992
        %v994 = vsel %vm993, %v985, %v990
        %v995 = vrsqrt.pop %v720
        %v996 = vmul.f32 %v995, %v720
        %v997 = vmul.f32 %v996, %v995
        %v998 = vmul.f32 0.5, %v997
        %v999 = vsub.f32 1.5, %v998
        %v1000 = vmul.f32 %v995, %v999
        %vm1001 = vweird.f32 %v720
        %vm1002 = vweird.f32 %v995
        %vm1003 = vmor %vm1001, %vm1002
        %v1004 = vsel %vm1003, %v995, %v1000
        %v1005 = vrsqrt.pop %v721
        %v1006 = vmul.f32 %v1005, %v721
        %v1007 = vmul.f32 %v1006, %v1005
        %v1008 = vmul.f32 0.5, %v1007
        %v1009 = vsub.f32 1.5, %v1008
        %v1010 = vmul.f32 %v1005, %v1009
        %vm1011 = vweird.f32 %v721
        %vm1012 = vweird.f32 %v1005
        %vm1013 = vmor %vm1011, %vm1012
        %v1014 = vsel %vm1013, %v1005, %v1010
        %v1015 = vrsqrt.pop %v722
        %v1016 = vmul.f32 %v1015, %v722
        %v1017 = vmul.f32 %v1016, %v1015
        %v1018 = vmul.f32 0.5, %v1017
        %v1019 = vsub.f32 1.5, %v1018
        %v1020 = vmul.f32 %v1015, %v1019
        %vm1021 = vweird.f32 %v722
        %vm1022 = vweird.f32 %v1015
        %vm1023 = vmor %vm1021, %vm1022
        %v1024 = vsel %vm1023, %v1015, %v1020
        %v1025 = vrsqrt.pop %v723
        %v1026 = vmul.f32 %v1025, %v723
        %v1027 = vmul.f32 %v1026, %v1025
        %v1028 = vmul.f32 0.5, %v1027
        %v1029 = vsub.f32 1.5, %v1028
        %v1030 = vmul.f32 %v1025, %v1029
        %vm1031 = vweird.f32 %v723
        %vm1032 = vweird.f32 %v1025
        %vm1033 = vmor %vm1031, %vm1032
        %v1034 = vsel %vm1033, %v1025, %v1030
        %v1035 = vrsqrt.pop %v724
        %v1036 = vmul.f32 %v1035, %v724
        %v1037 = vmul.f32 %v1036, %v1035
        %v1038 = vmul.f32 0.5, %v1037
        %v1039 = vsub.f32 1.5, %v1038
        %v1040 = vmul.f32 %v1035, %v1039
        %vm1041 = vweird.f32 %v724
        %vm1042 = vweird.f32 %v1035
        %vm1043 = vmor %vm1041, %vm1042
        %v1044 = vsel %vm1043, %v1035, %v1040
        %v1045 = vmul.f32 %v501, %v734
        %v1046 = vmul.f32 %v502, %v744
        %v1047 = vmul.f32 %v503, %v754
        %v1048 = vmul.f32 %v504, %v764
        %v1049 = vmul.f32 %v505, %v774
        %v1050 = vmul.f32 %v506, %v784
        %v1051 = vmul.f32 %v507, %v794
        %v1052 = vmul.f32 %v508, %v804
        %v1053 = vmul.f32 %v509, %v814
        %v1054 = vmul.f32 %v510, %v824
        %v1055 = vmul.f32 %v511, %v834
        %v1056 = vmul.f32 %v512, %v844
        %v1057 = vmul.f32 %v513, %v854
        %v1058 = vmul.f32 %v514, %v864
        %v1059 = vmul.f32 %v515, %v874
        %v1060 = vmul.f32 %v516, %v884
        %v1061 = vmul.f32 %v517, %v894
        %v1062 = vmul.f32 %v518, %v904
        %v1063 = vmul.f32 %v519, %v914
        %v1064 = vmul.f32 %v520, %v924
        %v1065 = vmul.f32 %v521, %v934
        %v1066 = vmul.f32 %v522, %v944
        %v1067 = vmul.f32 %v523, %v954
        %v1068 = vmul.f32 %v524, %v964
        %v1069 = vmul.f32 %v525, %v974
        %v1070 = vmul.f32 %v526, %v984
        %v1071 = vmul.f32 %v527, %v994
        %v1072 = vmul.f32 %v528, %v1004
        %v1073 = vmul.f32 %v529, %v1014
        %v1074 = vmul.f32 %v530, %v1024
        %v1075 = vmul.f32 %v531, %v1034
        %v1076 = vmul.f32 %v532, %v1044
        %v1078 = vperm.slane %v363, 0
        %v1080 = vmul.f32 %v1045, %v1078
        %v1081 = vmul.f32 %v1046, %v1078
        %v1082 = vmul.f32 %v1047, %v1078
        %v1083 = vmul.f32 %v1048, %v1078
        %v1084 = vmul.f32 %v1049, %v1078
        %v1085 = vmul.f32 %v1050, %v1078
        %v1086 = vmul.f32 %v1051, %v1078
        %v1087 = vmul.f32 %v1052, %v1078
        %v1088 = vmul.f32 %v1053, %v1078
        %v1089 = vmul.f32 %v1054, %v1078
        %v1090 = vmul.f32 %v1055, %v1078
        %v1091 = vmul.f32 %v1056, %v1078
        %v1092 = vmul.f32 %v1057, %v1078
        %v1093 = vmul.f32 %v1058, %v1078
        %v1094 = vmul.f32 %v1059, %v1078
        %v1095 = vmul.f32 %v1060, %v1078
        %v1096 = vmul.f32 %v1061, %v1078
        %v1097 = vmul.f32 %v1062, %v1078
        %v1098 = vmul.f32 %v1063, %v1078
        %v1099 = vmul.f32 %v1064, %v1078
        %v1100 = vmul.f32 %v1065, %v1078
        %v1101 = vmul.f32 %v1066, %v1078
        %v1102 = vmul.f32 %v1067, %v1078
        %v1103 = vmul.f32 %v1068, %v1078
        %v1104 = vmul.f32 %v1069, %v1078
        %v1105 = vmul.f32 %v1070, %v1078
        %v1106 = vmul.f32 %v1071, %v1078
        %v1107 = vmul.f32 %v1072, %v1078
        %v1108 = vmul.f32 %v1073, %v1078
        %v1109 = vmul.f32 %v1074, %v1078
        %v1110 = vmul.f32 %v1075, %v1078
        %v1111 = vmul.f32 %v1076, %v1078
        %v1113 = vperm.slane %v364, 0
        %v1115 = vadd.f32 %v1080, %v1113
        %v1116 = vadd.f32 %v1081, %v1113
        %v1117 = vadd.f32 %v1082, %v1113
        %v1118 = vadd.f32 %v1083, %v1113
        %v1119 = vadd.f32 %v1084, %v1113
        %v1120 = vadd.f32 %v1085, %v1113
        %v1121 = vadd.f32 %v1086, %v1113
        %v1122 = vadd.f32 %v1087, %v1113
        %v1123 = vadd.f32 %v1088, %v1113
        %v1124 = vadd.f32 %v1089, %v1113
        %v1125 = vadd.f32 %v1090, %v1113
        %v1126 = vadd.f32 %v1091, %v1113
        %v1127 = vadd.f32 %v1092, %v1113
        %v1128 = vadd.f32 %v1093, %v1113
        %v1129 = vadd.f32 %v1094, %v1113
        %v1130 = vadd.f32 %v1095, %v1113
        %v1131 = vadd.f32 %v1096, %v1113
        %v1132 = vadd.f32 %v1097, %v1113
        %v1133 = vadd.f32 %v1098, %v1113
        %v1134 = vadd.f32 %v1099, %v1113
        %v1135 = vadd.f32 %v1100, %v1113
        %v1136 = vadd.f32 %v1101, %v1113
        %v1137 = vadd.f32 %v1102, %v1113
        %v1138 = vadd.f32 %v1103, %v1113
        %v1139 = vadd.f32 %v1104, %v1113
        %v1140 = vadd.f32 %v1105, %v1113
        %v1141 = vadd.f32 %v1106, %v1113
        %v1142 = vadd.f32 %v1107, %v1113
        %v1143 = vadd.f32 %v1108, %v1113
        %v1144 = vadd.f32 %v1109, %v1113
        %v1145 = vadd.f32 %v1110, %v1113
        %v1146 = vadd.f32 %v1111, %v1113
        %v1147 = vld [vmem:[%s3] sm:$0xff]
        %v1148 = vld [vmem:[%s3 + $0x8] sm:$0xff]
        %v1149 = vld [vmem:[%s3 + $0x10] sm:$0xff]
        %v1150 = vld [vmem:[%s3 + $0x18] sm:$0xff]
        %v1151 = vld [vmem:[%s4] sm:$0x1]
        %v1153 = vperm.slane %v1151, 0
        %v1156 = vsel %vm365, %v1115, 0
        %v1159 = vsel %vm365, %v1116, 0
        %v1162 = vsel %vm365, %v1117, 0
        %v1165 = vsel %vm365, %v1118, 0
        %v1168 = vsel %vm365, %v1119, 0
        %v1171 = vsel %vm365, %v1120, 0
        %v1174 = vsel %vm365, %v1121, 0
        %v1177 = vsel %vm365, %v1122, 0
        %v1180 = vsel %vm365, %v1123, 0
        %v1183 = vsel %vm365, %v1124, 0
        %v1186 = vsel %vm365, %v1125, 0
        %v1189 = vsel %vm365, %v1126, 0
        %v1192 = vsel %vm365, %v1127, 0
        %v1195 = vsel %vm365, %v1128, 0
        %v1198 = vsel %vm365, %v1129, 0
        %v1201 = vsel %vm365, %v1130, 0
        %v1204 = vsel %vm365, %v1131, 0
        %v1207 = vsel %vm365, %v1132, 0
        %v1210 = vsel %vm365, %v1133, 0
        %v1213 = vsel %vm365, %v1134, 0
        %v1216 = vsel %vm365, %v1135, 0
        %v1219 = vsel %vm365, %v1136, 0
        %v1222 = vsel %vm365, %v1137, 0
        %v1225 = vsel %vm365, %v1138, 0
        %v1228 = vsel %vm365, %v1139, 0
        %v1231 = vsel %vm365, %v1140, 0
        %v1234 = vsel %vm365, %v1141, 0
        %v1237 = vsel %vm365, %v1142, 0
        %v1240 = vsel %vm365, %v1143, 0
        %v1243 = vsel %vm365, %v1144, 0
        %v1246 = vsel %vm365, %v1145, 0
        %v1249 = vsel %vm365, %v1146, 0
        %1251 = vmatpush.msra.mxu0 0.0
        %1252 = vmatpush.msra.mxu0 0.0
        %1253 = vmatpush.msra.mxu0 0.0
        %1254 = vmatpush.msra.mxu0 0.0
        %1255 = vmatpush.msra.mxu0 0.0
        %1256 = vmatpush.msra.mxu0 0.0
        %1257 = vmatpush.msra.mxu0 0.0
        %1258 = vmatpush.msra.mxu0 0.0
        %1259 = vmatpush.msra.mxu0 0.0
        %1260 = vmatpush.msra.mxu0 0.0
        %1261 = vmatpush.msra.mxu0 0.0
        %1262 = vmatpush.msra.mxu0 0.0
        %1263 = vmatpush.msra.mxu0 %v1150
        %1264 = vmatpush.msra.mxu0 %v1149
        %1265 = vmatpush.msra.mxu0 %v1148
        %1266 = vmatpush.msra.mxu0 %v1147
        %1267 = vmatmul.f32.gmra.mxu0 %v1156
        %v1268 = vpop.f32.mrf.mxu0
        %v1269 = vadd.f32 %v1153, %v1268
        %1270 = vmatmul.f32.gmra.mxu0 %v1159
        %v1271 = vpop.f32.mrf.mxu0
        %v1272 = vadd.f32 %v1153, %v1271
        %1273 = vmatmul.f32.gmra.mxu0 %v1162
        %v1274 = vpop.f32.mrf.mxu0
        %v1275 = vadd.f32 %v1153, %v1274
        %1276 = vmatmul.f32.gmra.mxu0 %v1165
        %v1277 = vpop.f32.mrf.mxu0
        %v1278 = vadd.f32 %v1153, %v1277
        %1279 = vmatmul.f32.gmra.mxu0 %v1168
        %v1280 = vpop.f32.mrf.mxu0
        %v1281 = vadd.f32 %v1153, %v1280
        %1282 = vmatmul.f32.gmra.mxu0 %v1171
        %v1283 = vpop.f32.mrf.mxu0
        %v1284 = vadd.f32 %v1153, %v1283
        %1285 = vmatmul.f32.gmra.mxu0 %v1174
        %v1286 = vpop.f32.mrf.mxu0
        %v1287 = vadd.f32 %v1153, %v1286
        %1288 = vmatmul.f32.gmra.mxu0 %v1177
        %v1289 = vpop.f32.mrf.mxu0
        %v1290 = vadd.f32 %v1153, %v1289
        %1291 = vmatmul.f32.gmra.mxu0 %v1180
        %v1292 = vpop.f32.mrf.mxu0
        %v1293 = vadd.f32 %v1153, %v1292
        %1294 = vmatmul.f32.gmra.mxu0 %v1183
        %v1295 = vpop.f32.mrf.mxu0
        %v1296 = vadd.f32 %v1153, %v1295
        %1297 = vmatmul.f32.gmra.mxu0 %v1186
        %v1298 = vpop.f32.mrf.mxu0
        %v1299 = vadd.f32 %v1153, %v1298
        %1300 = vmatmul.f32.gmra.mxu0 %v1189
        %v1301 = vpop.f32.mrf.mxu0
        %v1302 = vadd.f32 %v1153, %v1301
        %1303 = vmatmul.f32.gmra.mxu0 %v1192
        %v1304 = vpop.f32.mrf.mxu0
        %v1305 = vadd.f32 %v1153, %v1304
        %1306 = vmatmul.f32.gmra.mxu0 %v1195
        %v1307 = vpop.f32.mrf.mxu0
        %v1308 = vadd.f32 %v1153, %v1307
        %1309 = vmatmul.f32.gmra.mxu0 %v1198
        %v1310 = vpop.f32.mrf.mxu0
        %v1311 = vadd.f32 %v1153, %v1310
        %1312 = vmatmul.f32.gmra.mxu0 %v1201
        %v1313 = vpop.f32.mrf.mxu0
        %v1314 = vadd.f32 %v1153, %v1313
        %1315 = vmatmul.f32.gmra.mxu0 %v1204
        %v1316 = vpop.f32.mrf.mxu0
        %v1317 = vadd.f32 %v1153, %v1316
        %1318 = vmatmul.f32.gmra.mxu0 %v1207
        %v1319 = vpop.f32.mrf.mxu0
        %v1320 = vadd.f32 %v1153, %v1319
        %1321 = vmatmul.f32.gmra.mxu0 %v1210
        %v1322 = vpop.f32.mrf.mxu0
        %v1323 = vadd.f32 %v1153, %v1322
        %1324 = vmatmul.f32.gmra.mxu0 %v1213
        %v1325 = vpop.f32.mrf.mxu0
        %v1326 = vadd.f32 %v1153, %v1325
        %1327 = vmatmul.f32.gmra.mxu0 %v1216
        %v1328 = vpop.f32.mrf.mxu0
        %v1329 = vadd.f32 %v1153, %v1328
        %1330 = vmatmul.f32.gmra.mxu0 %v1219
        %v1331 = vpop.f32.mrf.mxu0
        %v1332 = vadd.f32 %v1153, %v1331
        %1333 = vmatmul.f32.gmra.mxu0 %v1222
        %v1334 = vpop.f32.mrf.mxu0
        %v1335 = vadd.f32 %v1153, %v1334
        %1336 = vmatmul.f32.gmra.mxu0 %v1225
        %v1337 = vpop.f32.mrf.mxu0
        %v1338 = vadd.f32 %v1153, %v1337
        %1339 = vmatmul.f32.gmra.mxu0 %v1228
        %v1340 = vpop.f32.mrf.mxu0
        %v1341 = vadd.f32 %v1153, %v1340
        %1342 = vmatmul.f32.gmra.mxu0 %v1231
        %v1343 = vpop.f32.mrf.mxu0
        %v1344 = vadd.f32 %v1153, %v1343
        %1345 = vmatmul.f32.gmra.mxu0 %v1234
        %v1346 = vpop.f32.mrf.mxu0
        %v1347 = vadd.f32 %v1153, %v1346
        %1348 = vmatmul.f32.gmra.mxu0 %v1237
        %v1349 = vpop.f32.mrf.mxu0
        %v1350 = vadd.f32 %v1153, %v1349
        %1351 = vmatmul.f32.gmra.mxu0 %v1240
        %v1352 = vpop.f32.mrf.mxu0
        %v1353 = vadd.f32 %v1153, %v1352
        %1354 = vmatmul.f32.gmra.mxu0 %v1243
        %v1355 = vpop.f32.mrf.mxu0
        %v1356 = vadd.f32 %v1153, %v1355
        %1357 = vmatmul.f32.gmra.mxu0 %v1246
        %v1358 = vpop.f32.mrf.mxu0
        %v1359 = vadd.f32 %v1153, %v1358
        %1360 = vmatmul.f32.gmra.mxu0 %v1249
        %v1361 = vpop.f32.mrf.mxu0
        %v1362 = vadd.f32 %v1153, %v1361
        %1363 = vdwg.mxu0
        %v1364 = vmul.f32 %v1269, 0.5
        %v1365 = vmul.f32 %v1272, 0.5
        %v1366 = vmul.f32 %v1275, 0.5
        %v1367 = vmul.f32 %v1278, 0.5
        %v1368 = vmul.f32 %v1281, 0.5
        %v1369 = vmul.f32 %v1284, 0.5
        %v1370 = vmul.f32 %v1287, 0.5
        %v1371 = vmul.f32 %v1290, 0.5
        %v1372 = vmul.f32 %v1293, 0.5
        %v1373 = vmul.f32 %v1296, 0.5
        %v1374 = vmul.f32 %v1299, 0.5
        %v1375 = vmul.f32 %v1302, 0.5
        %v1376 = vmul.f32 %v1305, 0.5
        %v1377 = vmul.f32 %v1308, 0.5
        %v1378 = vmul.f32 %v1311, 0.5
        %v1379 = vmul.f32 %v1314, 0.5
        %v1380 = vmul.f32 %v1317, 0.5
        %v1381 = vmul.f32 %v1320, 0.5
        %v1382 = vmul.f32 %v1323, 0.5
        %v1383 = vmul.f32 %v1326, 0.5
        %v1384 = vmul.f32 %v1329, 0.5
        %v1385 = vmul.f32 %v1332, 0.5
        %v1386 = vmul.f32 %v1335, 0.5
        %v1387 = vmul.f32 %v1338, 0.5
        %v1388 = vmul.f32 %v1341, 0.5
        %v1389 = vmul.f32 %v1344, 0.5
        %v1390 = vmul.f32 %v1347, 0.5
        %v1391 = vmul.f32 %v1350, 0.5
        %v1392 = vmul.f32 %v1353, 0.5
        %v1393 = vmul.f32 %v1356, 0.5
        %v1394 = vmul.f32 %v1359, 0.5
        %v1395 = vmul.f32 %v1362, 0.5
        %v1396 = vmul.f32 %v1269, 0.044715
        %v1397 = vmul.f32 %v1272, 0.044715
        %v1398 = vmul.f32 %v1275, 0.044715
        %v1399 = vmul.f32 %v1278, 0.044715
        %v1400 = vmul.f32 %v1281, 0.044715
        %v1401 = vmul.f32 %v1284, 0.044715
        %v1402 = vmul.f32 %v1287, 0.044715
        %v1403 = vmul.f32 %v1290, 0.044715
        %v1404 = vmul.f32 %v1293, 0.044715
        %v1405 = vmul.f32 %v1296, 0.044715
        %v1406 = vmul.f32 %v1299, 0.044715
        %v1407 = vmul.f32 %v1302, 0.044715
        %v1408 = vmul.f32 %v1305, 0.044715
        %v1409 = vmul.f32 %v1308, 0.044715
        %v1410 = vmul.f32 %v1311, 0.044715
        %v1411 = vmul.f32 %v1314, 0.044715
        %v1412 = vmul.f32 %v1317, 0.044715
        %v1413 = vmul.f32 %v1320, 0.044715
        %v1414 = vmul.f32 %v1323, 0.044715
        %v1415 = vmul.f32 %v1326, 0.044715
        %v1416 = vmul.f32 %v1329, 0.044715
        %v1417 = vmul.f32 %v1332, 0.044715
        %v1418 = vmul.f32 %v1335, 0.044715
        %v1419 = vmul.f32 %v1338, 0.044715
        %v1420 = vmul.f32 %v1341, 0.044715
        %v1421 = vmul.f32 %v1344, 0.044715
        %v1422 = vmul.f32 %v1347, 0.044715
        %v1423 = vmul.f32 %v1350, 0.044715
        %v1424 = vmul.f32 %v1353, 0.044715
        %v1425 = vmul.f32 %v1356, 0.044715
        %v1426 = vmul.f32 %v1359, 0.044715
        %v1427 = vmul.f32 %v1362, 0.044715
        %v1428 = vmul.f32 %v1396, %v1269
        %v1429 = vmul.f32 %v1397, %v1272
        %v1430 = vmul.f32 %v1398, %v1275
        %v1431 = vmul.f32 %v1399, %v1278
        %v1432 = vmul.f32 %v1400, %v1281
        %v1433 = vmul.f32 %v1401, %v1284
        %v1434 = vmul.f32 %v1402, %v1287
        %v1435 = vmul.f32 %v1403, %v1290
        %v1436 = vmul.f32 %v1404, %v1293
        %v1437 = vmul.f32 %v1405, %v1296
        %v1438 = vmul.f32 %v1406, %v1299
        %v1439 = vmul.f32 %v1407, %v1302
        %v1440 = vmul.f32 %v1408, %v1305
        %v1441 = vmul.f32 %v1409, %v1308
        %v1442 = vmul.f32 %v1410, %v1311
        %v1443 = vmul.f32 %v1411, %v1314
        %v1444 = vmul.f32 %v1412, %v1317
        %v1445 = vmul.f32 %v1413, %v1320
        %v1446 = vmul.f32 %v1414, %v1323
        %v1447 = vmul.f32 %v1415, %v1326
        %v1448 = vmul.f32 %v1416, %v1329
        %v1449 = vmul.f32 %v1417, %v1332
        %v1450 = vmul.f32 %v1418, %v1335
        %v1451 = vmul.f32 %v1419, %v1338
        %v1452 = vmul.f32 %v1420, %v1341
        %v1453 = vmul.f32 %v1421, %v1344
        %v1454 = vmul.f32 %v1422, %v1347
        %v1455 = vmul.f32 %v1423, %v1350
        %v1456 = vmul.f32 %v1424, %v1353
        %v1457 = vmul.f32 %v1425, %v1356
        %v1458 = vmul.f32 %v1426, %v1359
        %v1459 = vmul.f32 %v1427, %v1362
        %v1460 = vmul.f32 %v1428, %v1269
        %v1461 = vmul.f32 %v1429, %v1272
        %v1462 = vmul.f32 %v1430, %v1275
        %v1463 = vmul.f32 %v1431, %v1278
        %v1464 = vmul.f32 %v1432, %v1281
        %v1465 = vmul.f32 %v1433, %v1284
        %v1466 = vmul.f32 %v1434, %v1287
        %v1467 = vmul.f32 %v1435, %v1290
        %v1468 = vmul.f32 %v1436, %v1293
        %v1469 = vmul.f32 %v1437, %v1296
        %v1470 = vmul.f32 %v1438, %v1299
        %v1471 = vmul.f32 %v1439, %v1302
        %v1472 = vmul.f32 %v1440, %v1305
        %v1473 = vmul.f32 %v1441, %v1308
        %v1474 = vmul.f32 %v1442, %v1311
        %v1475 = vmul.f32 %v1443, %v1314
        %v1476 = vmul.f32 %v1444, %v1317
        %v1477 = vmul.f32 %v1445, %v1320
        %v1478 = vmul.f32 %v1446, %v1323
        %v1479 = vmul.f32 %v1447, %v1326
        %v1480 = vmul.f32 %v1448, %v1329
        %v1481 = vmul.f32 %v1449, %v1332
        %v1482 = vmul.f32 %v1450, %v1335
        %v1483 = vmul.f32 %v1451, %v1338
        %v1484 = vmul.f32 %v1452, %v1341
        %v1485 = vmul.f32 %v1453, %v1344
        %v1486 = vmul.f32 %v1454, %v1347
        %v1487 = vmul.f32 %v1455, %v1350
        %v1488 = vmul.f32 %v1456, %v1353
        %v1489 = vmul.f32 %v1457, %v1356
        %v1490 = vmul.f32 %v1458, %v1359
        %v1491 = vmul.f32 %v1459, %v1362
        %v1492 = vadd.f32 %v1269, %v1460
        %v1493 = vadd.f32 %v1272, %v1461
        %v1494 = vadd.f32 %v1275, %v1462
        %v1495 = vadd.f32 %v1278, %v1463
        %v1496 = vadd.f32 %v1281, %v1464
        %v1497 = vadd.f32 %v1284, %v1465
        %v1498 = vadd.f32 %v1287, %v1466
        %v1499 = vadd.f32 %v1290, %v1467
        %v1500 = vadd.f32 %v1293, %v1468
        %v1501 = vadd.f32 %v1296, %v1469
        %v1502 = vadd.f32 %v1299, %v1470
        %v1503 = vadd.f32 %v1302, %v1471
        %v1504 = vadd.f32 %v1305, %v1472
        %v1505 = vadd.f32 %v1308, %v1473
        %v1506 = vadd.f32 %v1311, %v1474
        %v1507 = vadd.f32 %v1314, %v1475
        %v1508 = vadd.f32 %v1317, %v1476
        %v1509 = vadd.f32 %v1320, %v1477
        %v1510 = vadd.f32 %v1323, %v1478
        %v1511 = vadd.f32 %v1326, %v1479
        %v1512 = vadd.f32 %v1329, %v1480
        %v1513 = vadd.f32 %v1332, %v1481
        %v1514 = vadd.f32 %v1335, %v1482
        %v1515 = vadd.f32 %v1338, %v1483
        %v1516 = vadd.f32 %v1341, %v1484
        %v1517 = vadd.f32 %v1344, %v1485
        %v1518 = vadd.f32 %v1347, %v1486
        %v1519 = vadd.f32 %v1350, %v1487
        %v1520 = vadd.f32 %v1353, %v1488
        %v1521 = vadd.f32 %v1356, %v1489
        %v1522 = vadd.f32 %v1359, %v1490
        %v1523 = vadd.f32 %v1362, %v1491
        %v1524 = vmul.f32 %v1492, 0.7978846
        %v1525 = vmul.f32 %v1493, 0.7978846
        %v1526 = vmul.f32 %v1494, 0.7978846
        %v1527 = vmul.f32 %v1495, 0.7978846
        %v1528 = vmul.f32 %v1496, 0.7978846
        %v1529 = vmul.f32 %v1497, 0.7978846
        %v1530 = vmul.f32 %v1498, 0.7978846
        %v1531 = vmul.f32 %v1499, 0.7978846
        %v1532 = vmul.f32 %v1500, 0.7978846
        %v1533 = vmul.f32 %v1501, 0.7978846
        %v1534 = vmul.f32 %v1502, 0.7978846
        %v1535 = vmul.f32 %v1503, 0.7978846
        %v1536 = vmul.f32 %v1504, 0.7978846
        %v1537 = vmul.f32 %v1505, 0.7978846
        %v1538 = vmul.f32 %v1506, 0.7978846
        %v1539 = vmul.f32 %v1507, 0.7978846
        %v1540 = vmul.f32 %v1508, 0.7978846
        %v1541 = vmul.f32 %v1509, 0.7978846
        %v1542 = vmul.f32 %v1510, 0.7978846
        %v1543 = vmul.f32 %v1511, 0.7978846
        %v1544 = vmul.f32 %v1512, 0.7978846
        %v1545 = vmul.f32 %v1513, 0.7978846
        %v1546 = vmul.f32 %v1514, 0.7978846
        %v1547 = vmul.f32 %v1515, 0.7978846
        %v1548 = vmul.f32 %v1516, 0.7978846
        %v1549 = vmul.f32 %v1517, 0.7978846
        %v1550 = vmul.f32 %v1518, 0.7978846
        %v1551 = vmul.f32 %v1519, 0.7978846
        %v1552 = vmul.f32 %v1520, 0.7978846
        %v1553 = vmul.f32 %v1521, 0.7978846
        %v1554 = vmul.f32 %v1522, 0.7978846
        %v1555 = vmul.f32 %v1523, 0.7978846
        %v1556 = vtanh.pop %v1524
        %v1557 = vtanh.pop %v1525
        %v1558 = vtanh.pop %v1526
        %v1559 = vtanh.pop %v1527
        %v1560 = vtanh.pop %v1528
        %v1561 = vtanh.pop %v1529
        %v1562 = vtanh.pop %v1530
        %v1563 = vtanh.pop %v1531
        %v1564 = vtanh.pop %v1532
        %v1565 = vtanh.pop %v1533
        %v1566 = vtanh.pop %v1534
        %v1567 = vtanh.pop %v1535
        %v1568 = vtanh.pop %v1536
        %v1569 = vtanh.pop %v1537
        %v1570 = vtanh.pop %v1538
        %v1571 = vtanh.pop %v1539
        %v1572 = vtanh.pop %v1540
        %v1573 = vtanh.pop %v1541
        %v1574 = vtanh.pop %v1542
        %v1575 = vtanh.pop %v1543
        %v1576 = vtanh.pop %v1544
        %v1577 = vtanh.pop %v1545
        %v1578 = vtanh.pop %v1546
        %v1579 = vtanh.pop %v1547
        %v1580 = vtanh.pop %v1548
        %v1581 = vtanh.pop %v1549
        %v1582 = vtanh.pop %v1550
        %v1583 = vtanh.pop %v1551
        %v1584 = vtanh.pop %v1552
        %v1585 = vtanh.pop %v1553
        %v1586 = vtanh.pop %v1554
        %v1587 = vtanh.pop %v1555
        %v1588 = vadd.f32 %v1556, 1.0
        %v1589 = vadd.f32 %v1557, 1.0
        %v1590 = vadd.f32 %v1558, 1.0
        %v1591 = vadd.f32 %v1559, 1.0
        %v1592 = vadd.f32 %v1560, 1.0
        %v1593 = vadd.f32 %v1561, 1.0
        %v1594 = vadd.f32 %v1562, 1.0
        %v1595 = vadd.f32 %v1563, 1.0
        %v1596 = vadd.f32 %v1564, 1.0
        %v1597 = vadd.f32 %v1565, 1.0
        %v1598 = vadd.f32 %v1566, 1.0
        %v1599 = vadd.f32 %v1567, 1.0
        %v1600 = vadd.f32 %v1568, 1.0
        %v1601 = vadd.f32 %v1569, 1.0
        %v1602 = vadd.f32 %v1570, 1.0
        %v1603 = vadd.f32 %v1571, 1.0
        %v1604 = vadd.f32 %v1572, 1.0
        %v1605 = vadd.f32 %v1573, 1.0
        %v1606 = vadd.f32 %v1574, 1.0
        %v1607 = vadd.f32 %v1575, 1.0
        %v1608 = vadd.f32 %v1576, 1.0
        %v1609 = vadd.f32 %v1577, 1.0
        %v1610 = vadd.f32 %v1578, 1.0
        %v1611 = vadd.f32 %v1579, 1.0
        %v1612 = vadd.f32 %v1580, 1.0
        %v1613 = vadd.f32 %v1581, 1.0
        %v1614 = vadd.f32 %v1582, 1.0
        %v1615 = vadd.f32 %v1583, 1.0
        %v1616 = vadd.f32 %v1584, 1.0
        %v1617 = vadd.f32 %v1585, 1.0
        %v1618 = vadd.f32 %v1586, 1.0
        %v1619 = vadd.f32 %v1587, 1.0
        %v1620 = vmul.f32 %v1364, %v1588
        %v1621 = vmul.f32 %v1365, %v1589
        %v1622 = vmul.f32 %v1366, %v1590
        %v1623 = vmul.f32 %v1367, %v1591
        %v1624 = vmul.f32 %v1368, %v1592
        %v1625 = vmul.f32 %v1369, %v1593
        %v1626 = vmul.f32 %v1370, %v1594
        %v1627 = vmul.f32 %v1371, %v1595
        %v1628 = vmul.f32 %v1372, %v1596
        %v1629 = vmul.f32 %v1373, %v1597
        %v1630 = vmul.f32 %v1374, %v1598
        %v1631 = vmul.f32 %v1375, %v1599
        %v1632 = vmul.f32 %v1376, %v1600
        %v1633 = vmul.f32 %v1377, %v1601
        %v1634 = vmul.f32 %v1378, %v1602
        %v1635 = vmul.f32 %v1379, %v1603
        %v1636 = vmul.f32 %v1380, %v1604
        %v1637 = vmul.f32 %v1381, %v1605
        %v1638 = vmul.f32 %v1382, %v1606
        %v1639 = vmul.f32 %v1383, %v1607
        %v1640 = vmul.f32 %v1384, %v1608
        %v1641 = vmul.f32 %v1385, %v1609
        %v1642 = vmul.f32 %v1386, %v1610
        %v1643 = vmul.f32 %v1387, %v1611
        %v1644 = vmul.f32 %v1388, %v1612
        %v1645 = vmul.f32 %v1389, %v1613
        %v1646 = vmul.f32 %v1390, %v1614
        %v1647 = vmul.f32 %v1391, %v1615
        %v1648 = vmul.f32 %v1392, %v1616
        %v1649 = vmul.f32 %v1393, %v1617
        %v1650 = vmul.f32 %v1394, %v1618
        %v1651 = vmul.f32 %v1395, %v1619
        %1652 = vst [vmem:[#allocation2] sm:$0xff] 0.0
        %1653 = vst [vmem:[#allocation2 + $0x8] sm:$0xff] 0.0
        %1654 = vst [vmem:[#allocation2 + $0x10] sm:$0x3] 0.0
        %1655 = vst [vmem:[#allocation2 + $0x18] sm:$0xff] 0.0
        %1656 = vst [vmem:[#allocation2 + $0x20] sm:$0xff] 0.0
        %1657 = vst [vmem:[#allocation2 + $0x28] sm:$0x3] 0.0
        %1658 = vst [vmem:[#allocation2 + $0x30] sm:$0xff] 0.0
        %1659 = vst [vmem:[#allocation2 + $0x38] sm:$0xff] 0.0
        %1660 = vst [vmem:[#allocation2 + $0x40] sm:$0x3] 0.0
        %1661 = vst [vmem:[#allocation2 + $0x48] sm:$0xff] 0.0
        %1662 = vst [vmem:[#allocation2 + $0x50] sm:$0xff] 0.0
        %1663 = vst [vmem:[#allocation2 + $0x58] sm:$0x3] 0.0
        %1664 = vst [vmem:[#allocation2 + $0x60] sm:$0xff] 0.0
        %1665 = vst [vmem:[#allocation2 + $0x68] sm:$0xff] 0.0
        %1666 = vst [vmem:[#allocation2 + $0x70] sm:$0x3] 0.0
        %1667 = vst [vmem:[#allocation2 + $0x78] sm:$0xff] 0.0
        %1668 = vst [vmem:[#allocation2 + $0x80] sm:$0xff] 0.0
        %1669 = vst [vmem:[#allocation2 + $0x88] sm:$0x3] 0.0
        %1670 = vst [vmem:[#allocation2 + $0x90] sm:$0xff] 0.0
        %1671 = vst [vmem:[#allocation2 + $0x98] sm:$0xff] 0.0
        %1672 = vst [vmem:[#allocation2 + $0xa0] sm:$0x3] 0.0
        %1673 = vst [vmem:[#allocation2 + $0xa8] sm:$0xff] 0.0
        %1674 = vst [vmem:[#allocation2 + $0xb0] sm:$0xff] 0.0
        %1675 = vst [vmem:[#allocation2 + $0xb8] sm:$0x3] 0.0
        %1676 = vst [vmem:[#allocation2 + $0xc0] sm:$0xff] 0.0
        %1677 = vst [vmem:[#allocation2 + $0xc8] sm:$0xff] 0.0
        %1678 = vst [vmem:[#allocation2 + $0xd0] sm:$0x3] 0.0
        %1679 = vst [vmem:[#allocation2 + $0xd8] sm:$0xff] 0.0
        %1680 = vst [vmem:[#allocation2 + $0xe0] sm:$0xff] 0.0
        %1681 = vst [vmem:[#allocation2 + $0xe8] sm:$0x3] 0.0
        %1682 = vst [vmem:[#allocation2 + $0xf0] sm:$0xff] 0.0
        %1683 = vst [vmem:[#allocation2 + $0xf8] sm:$0xff] 0.0
        %1684 = vst [vmem:[#allocation2 + $0x100] sm:$0x3] 0.0
        %1685 = vst [vmem:[#allocation2 + $0x108] sm:$0xff] 0.0
        %1686 = vst [vmem:[#allocation2 + $0x110] sm:$0xff] 0.0
        %1687 = vst [vmem:[#allocation2 + $0x118] sm:$0x3] 0.0
        %1688 = vst [vmem:[#allocation2 + $0x120] sm:$0xff] 0.0
        %1689 = vst [vmem:[#allocation2 + $0x128] sm:$0xff] 0.0
        %1690 = vst [vmem:[#allocation2 + $0x130] sm:$0x3] 0.0
        %1691 = vst [vmem:[#allocation2 + $0x138] sm:$0xff] 0.0
        %1692 = vst [vmem:[#allocation2 + $0x140] sm:$0xff] 0.0
        %1693 = vst [vmem:[#allocation2 + $0x148] sm:$0x3] 0.0
        %1694 = vst [vmem:[#allocation2 + $0x150] sm:$0xff] 0.0
        %1695 = vst [vmem:[#allocation2 + $0x158] sm:$0xff] 0.0
        %1696 = vst [vmem:[#allocation2 + $0x160] sm:$0x3] 0.0
        %1697 = vst [vmem:[#allocation2 + $0x168] sm:$0xff] 0.0
        %1698 = vst [vmem:[#allocation2 + $0x170] sm:$0xff] 0.0
        %1699 = vst [vmem:[#allocation2 + $0x178] sm:$0x3] 0.0
        %1700 = vst [vmem:[#allocation2 + $0x180] sm:$0xff] 0.0
        %1701 = vst [vmem:[#allocation2 + $0x188] sm:$0xff] 0.0
        %1702 = vst [vmem:[#allocation2 + $0x190] sm:$0x3] 0.0
        %1703 = vst [vmem:[#allocation2 + $0x198] sm:$0xff] 0.0
        %1704 = vst [vmem:[#allocation2 + $0x1a0] sm:$0xff] 0.0
        %1705 = vst [vmem:[#allocation2 + $0x1a8] sm:$0x3] 0.0
        %s1706 = scalar_lea.vmem [#allocation2], 24
        %1707 = vst [vmem:[%s1706 + $0x1] sm:$0xff] %v1620
        %1708 = vst [vmem:[%s1706 + $0x9] sm:$0xff] %v1621
        %1709 = vst [vmem:[%s1706 + $0x19] sm:$0xff] %v1622
        %1710 = vst [vmem:[%s1706 + $0x21] sm:$0xff] %v1623
        %1711 = vst [vmem:[%s1706 + $0x31] sm:$0xff] %v1624
        %1712 = vst [vmem:[%s1706 + $0x39] sm:$0xff] %v1625
        %1713 = vst [vmem:[%s1706 + $0x49] sm:$0xff] %v1626
        %1714 = vst [vmem:[%s1706 + $0x51] sm:$0xff] %v1627
        %1715 = vst [vmem:[%s1706 + $0x61] sm:$0xff] %v1628
        %1716 = vst [vmem:[%s1706 + $0x69] sm:$0xff] %v1629
        %1717 = vst [vmem:[%s1706 + $0x79] sm:$0xff] %v1630
        %1718 = vst [vmem:[%s1706 + $0x81] sm:$0xff] %v1631
        %1719 = vst [vmem:[%s1706 + $0x91] sm:$0xff] %v1632
        %1720 = vst [vmem:[%s1706 + $0x99] sm:$0xff] %v1633
        %1721 = vst [vmem:[%s1706 + $0xa9] sm:$0xff] %v1634
        %1722 = vst [vmem:[%s1706 + $0xb1] sm:$0xff] %v1635
        %1723 = vst [vmem:[%s1706 + $0xc1] sm:$0xff] %v1636
        %1724 = vst [vmem:[%s1706 + $0xc9] sm:$0xff] %v1637
        %1725 = vst [vmem:[%s1706 + $0xd9] sm:$0xff] %v1638
        %1726 = vst [vmem:[%s1706 + $0xe1] sm:$0xff] %v1639
        %1727 = vst [vmem:[%s1706 + $0xf1] sm:$0xff] %v1640
        %1728 = vst [vmem:[%s1706 + $0xf9] sm:$0xff] %v1641
        %1729 = vst [vmem:[%s1706 + $0x109] sm:$0xff] %v1642
        %1730 = vst [vmem:[%s1706 + $0x111] sm:$0xff] %v1643
        %1731 = vst [vmem:[%s1706 + $0x121] sm:$0xff] %v1644
        %1732 = vst [vmem:[%s1706 + $0x129] sm:$0xff] %v1645
        %1733 = vst [vmem:[%s1706 + $0x139] sm:$0xff] %v1646
        %1734 = vst [vmem:[%s1706 + $0x141] sm:$0xff] %v1647
        %1735 = vst [vmem:[%s1706 + $0x151] sm:$0xff] %v1648
        %1736 = vst [vmem:[%s1706 + $0x159] sm:$0xff] %v1649
        %1737 = vst [vmem:[%s1706 + $0x169] sm:$0xff] %v1650
        %1738 = vst [vmem:[%s1706 + $0x171] sm:$0xff] %v1651
        %v1739 = vld [vmem:[%s5] sm:$0x7]
        %v1740 = vld [vmem:[%s5 + $0x4] sm:$0x7]
        %v1741 = vld [vmem:[%s5 + $0x8] sm:$0x7]
        %v1742 = vld [vmem:[#allocation2] sm:$0xff]
        %v1743 = vld [vmem:[#allocation2 + $0x8] sm:$0xff]
        %v1744 = vld [vmem:[#allocation2 + $0x18] sm:$0xff]
        %v1745 = vld [vmem:[#allocation2 + $0x20] sm:$0xff]
        %v1746 = vld [vmem:[#allocation2 + $0x30] sm:$0xff]
        %v1747 = vld [vmem:[#allocation2 + $0x38] sm:$0xff]
        %v1748 = vld [vmem:[#allocation2 + $0x48] sm:$0xff]
        %v1749 = vld [vmem:[#allocation2 + $0x50] sm:$0xff]
        %v1750 = vld [vmem:[#allocation2 + $0x60] sm:$0xff]
        %v1751 = vld [vmem:[#allocation2 + $0x68] sm:$0xff]
        %v1752 = vld [vmem:[#allocation2 + $0x78] sm:$0xff]
        %v1753 = vld [vmem:[#allocation2 + $0x80] sm:$0xff]
        %v1754 = vld [vmem:[#allocation2 + $0x90] sm:$0xff]
        %v1755 = vld [vmem:[#allocation2 + $0x98] sm:$0xff]
        %v1756 = vld [vmem:[#allocation2 + $0xa8] sm:$0xff]
        %v1757 = vld [vmem:[#allocation2 + $0xb0] sm:$0xff]
        %v1758 = vld [vmem:[#allocation2 + $0xc0] sm:$0xff]
        %v1759 = vld [vmem:[#allocation2 + $0xc8] sm:$0xff]
        %v1760 = vld [vmem:[#allocation2 + $0xd8] sm:$0xff]
        %v1761 = vld [vmem:[#allocation2 + $0xe0] sm:$0xff]
        %v1762 = vld [vmem:[#allocation2 + $0xf0] sm:$0xff]
        %v1763 = vld [vmem:[#allocation2 + $0xf8] sm:$0xff]
        %v1764 = vld [vmem:[#allocation2 + $0x108] sm:$0xff]
        %v1765 = vld [vmem:[#allocation2 + $0x110] sm:$0xff]
        %v1766 = vld [vmem:[#allocation2 + $0x120] sm:$0xff]
        %v1767 = vld [vmem:[#allocation2 + $0x128] sm:$0xff]
        %v1768 = vld [vmem:[#allocation2 + $0x138] sm:$0xff]
        %v1769 = vld [vmem:[#allocation2 + $0x140] sm:$0xff]
        %v1770 = vld [vmem:[#allocation2 + $0x150] sm:$0xff]
        %v1771 = vld [vmem:[#allocation2 + $0x158] sm:$0xff]
        %v1772 = vld [vmem:[#allocation2 + $0x168] sm:$0xff]
        %v1773 = vld [vmem:[#allocation2 + $0x170] sm:$0xff]
        %v1774 = vperm.slane %v1739, 0
        %v1775 = vmul.f32 %v1742, %v1774
        %v1776 = vmul.f32 %v1743, %v1774
        %v1777 = vmul.f32 %v1744, %v1774
        %v1778 = vmul.f32 %v1745, %v1774
        %v1779 = vmul.f32 %v1746, %v1774
        %v1780 = vmul.f32 %v1747, %v1774
        %v1781 = vmul.f32 %v1748, %v1774
        %v1782 = vmul.f32 %v1749, %v1774
        %v1783 = vmul.f32 %v1750, %v1774
        %v1784 = vmul.f32 %v1751, %v1774
        %v1785 = vmul.f32 %v1752, %v1774
        %v1786 = vmul.f32 %v1753, %v1774
        %v1787 = vmul.f32 %v1754, %v1774
        %v1788 = vmul.f32 %v1755, %v1774
        %v1789 = vmul.f32 %v1756, %v1774
        %v1790 = vmul.f32 %v1757, %v1774
        %v1791 = vmul.f32 %v1758, %v1774
        %v1792 = vmul.f32 %v1759, %v1774
        %v1793 = vmul.f32 %v1760, %v1774
        %v1794 = vmul.f32 %v1761, %v1774
        %v1795 = vmul.f32 %v1762, %v1774
        %v1796 = vmul.f32 %v1763, %v1774
        %v1797 = vmul.f32 %v1764, %v1774
        %v1798 = vmul.f32 %v1765, %v1774
        %v1799 = vmul.f32 %v1766, %v1774
        %v1800 = vmul.f32 %v1767, %v1774
        %v1801 = vmul.f32 %v1768, %v1774
        %v1802 = vmul.f32 %v1769, %v1774
        %v1803 = vmul.f32 %v1770, %v1774
        %v1804 = vmul.f32 %v1771, %v1774
        %v1805 = vmul.f32 %v1772, %v1774
        %v1806 = vmul.f32 %v1773, %v1774
        %v1807 = vadd.f32 %v1775, 0.0
        %v1808 = vadd.f32 %v1776, 0.0
        %v1809 = vadd.f32 %v1777, 0.0
        %v1810 = vadd.f32 %v1778, 0.0
        %v1811 = vadd.f32 %v1779, 0.0
        %v1812 = vadd.f32 %v1780, 0.0
        %v1813 = vadd.f32 %v1781, 0.0
        %v1814 = vadd.f32 %v1782, 0.0
        %v1815 = vadd.f32 %v1783, 0.0
        %v1816 = vadd.f32 %v1784, 0.0
        %v1817 = vadd.f32 %v1785, 0.0
        %v1818 = vadd.f32 %v1786, 0.0
        %v1819 = vadd.f32 %v1787, 0.0
        %v1820 = vadd.f32 %v1788, 0.0
        %v1821 = vadd.f32 %v1789, 0.0
        %v1822 = vadd.f32 %v1790, 0.0
        %v1823 = vadd.f32 %v1791, 0.0
        %v1824 = vadd.f32 %v1792, 0.0
        %v1825 = vadd.f32 %v1793, 0.0
        %v1826 = vadd.f32 %v1794, 0.0
        %v1827 = vadd.f32 %v1795, 0.0
        %v1828 = vadd.f32 %v1796, 0.0
        %v1829 = vadd.f32 %v1797, 0.0
        %v1830 = vadd.f32 %v1798, 0.0
        %v1831 = vadd.f32 %v1799, 0.0
        %v1832 = vadd.f32 %v1800, 0.0
        %v1833 = vadd.f32 %v1801, 0.0
        %v1834 = vadd.f32 %v1802, 0.0
        %v1835 = vadd.f32 %v1803, 0.0
        %v1836 = vadd.f32 %v1804, 0.0
        %v1837 = vadd.f32 %v1805, 0.0
        %v1838 = vadd.f32 %v1806, 0.0
        %v1839 = vld [vmem:[#allocation2 + $0x1] sm:$0xff]
        %v1840 = vld [vmem:[#allocation2 + $0x9] sm:$0xff]
        %v1841 = vld [vmem:[#allocation2 + $0x19] sm:$0xff]
        %v1842 = vld [vmem:[#allocation2 + $0x21] sm:$0xff]
        %v1843 = vld [vmem:[#allocation2 + $0x31] sm:$0xff]
        %v1844 = vld [vmem:[#allocation2 + $0x39] sm:$0xff]
        %v1845 = vld [vmem:[#allocation2 + $0x49] sm:$0xff]
        %v1846 = vld [vmem:[#allocation2 + $0x51] sm:$0xff]
        %v1847 = vld [vmem:[#allocation2 + $0x61] sm:$0xff]
        %v1848 = vld [vmem:[#allocation2 + $0x69] sm:$0xff]
        %v1849 = vld [vmem:[#allocation2 + $0x79] sm:$0xff]
        %v1850 = vld [vmem:[#allocation2 + $0x81] sm:$0xff]
        %v1851 = vld [vmem:[#allocation2 + $0x91] sm:$0xff]
        %v1852 = vld [vmem:[#allocation2 + $0x99] sm:$0xff]
        %v1853 = vld [vmem:[#allocation2 + $0xa9] sm:$0xff]
        %v1854 = vld [vmem:[#allocation2 + $0xb1] sm:$0xff]
        %v1855 = vld [vmem:[#allocation2 + $0xc1] sm:$0xff]
        %v1856 = vld [vmem:[#allocation2 + $0xc9] sm:$0xff]
        %v1857 = vld [vmem:[#allocation2 + $0xd9] sm:$0xff]
        %v1858 = vld [vmem:[#allocation2 + $0xe1] sm:$0xff]
        %v1859 = vld [vmem:[#allocation2 + $0xf1] sm:$0xff]
        %v1860 = vld [vmem:[#allocation2 + $0xf9] sm:$0xff]
        %v1861 = vld [vmem:[#allocation2 + $0x109] sm:$0xff]
        %v1862 = vld [vmem:[#allocation2 + $0x111] sm:$0xff]
        %v1863 = vld [vmem:[#allocation2 + $0x121] sm:$0xff]
        %v1864 = vld [vmem:[#allocation2 + $0x129] sm:$0xff]
        %v1865 = vld [vmem:[#allocation2 + $0x139] sm:$0xff]
        %v1866 = vld [vmem:[#allocation2 + $0x141] sm:$0xff]
        %v1867 = vld [vmem:[#allocation2 + $0x151] sm:$0xff]
        %v1868 = vld [vmem:[#allocation2 + $0x159] sm:$0xff]
        %v1869 = vld [vmem:[#allocation2 + $0x169] sm:$0xff]
        %v1870 = vld [vmem:[#allocation2 + $0x171] sm:$0xff]
        %v1871 = vperm.slane %v1739, 1
        %v1872 = vmul.f32 %v1839, %v1871
        %v1873 = vmul.f32 %v1840, %v1871
        %v1874 = vmul.f32 %v1841, %v1871
        %v1875 = vmul.f32 %v1842, %v1871
        %v1876 = vmul.f32 %v1843, %v1871
        %v1877 = vmul.f32 %v1844, %v1871
        %v1878 = vmul.f32 %v1845, %v1871
        %v1879 = vmul.f32 %v1846, %v1871
        %v1880 = vmul.f32 %v1847, %v1871
        %v1881 = vmul.f32 %v1848, %v1871
        %v1882 = vmul.f32 %v1849, %v1871
        %v1883 = vmul.f32 %v1850, %v1871
        %v1884 = vmul.f32 %v1851, %v1871
        %v1885 = vmul.f32 %v1852, %v1871
        %v1886 = vmul.f32 %v1853, %v1871
        %v1887 = vmul.f32 %v1854, %v1871
        %v1888 = vmul.f32 %v1855, %v1871
        %v1889 = vmul.f32 %v1856, %v1871
        %v1890 = vmul.f32 %v1857, %v1871
        %v1891 = vmul.f32 %v1858, %v1871
        %v1892 = vmul.f32 %v1859, %v1871
        %v1893 = vmul.f32 %v1860, %v1871
        %v1894 = vmul.f32 %v1861, %v1871
        %v1895 = vmul.f32 %v1862, %v1871
        %v1896 = vmul.f32 %v1863, %v1871
        %v1897 = vmul.f32 %v1864, %v1871
        %v1898 = vmul.f32 %v1865, %v1871
        %v1899 = vmul.f32 %v1866, %v1871
        %v1900 = vmul.f32 %v1867, %v1871
        %v1901 = vmul.f32 %v1868, %v1871
        %v1902 = vmul.f32 %v1869, %v1871
        %v1903 = vmul.f32 %v1870, %v1871
        %v1904 = vadd.f32 %v1807, %v1872
        %v1905 = vadd.f32 %v1808, %v1873
        %v1906 = vadd.f32 %v1809, %v1874
        %v1907 = vadd.f32 %v1810, %v1875
        %v1908 = vadd.f32 %v1811, %v1876
        %v1909 = vadd.f32 %v1812, %v1877
        %v1910 = vadd.f32 %v1813, %v1878
        %v1911 = vadd.f32 %v1814, %v1879
        %v1912 = vadd.f32 %v1815, %v1880
        %v1913 = vadd.f32 %v1816, %v1881
        %v1914 = vadd.f32 %v1817, %v1882
        %v1915 = vadd.f32 %v1818, %v1883
        %v1916 = vadd.f32 %v1819, %v1884
        %v1917 = vadd.f32 %v1820, %v1885
        %v1918 = vadd.f32 %v1821, %v1886
        %v1919 = vadd.f32 %v1822, %v1887
        %v1920 = vadd.f32 %v1823, %v1888
        %v1921 = vadd.f32 %v1824, %v1889
        %v1922 = vadd.f32 %v1825, %v1890
        %v1923 = vadd.f32 %v1826, %v1891
        %v1924 = vadd.f32 %v1827, %v1892
        %v1925 = vadd.f32 %v1828, %v1893
        %v1926 = vadd.f32 %v1829, %v1894
        %v1927 = vadd.f32 %v1830, %v1895
        %v1928 = vadd.f32 %v1831, %v1896
        %v1929 = vadd.f32 %v1832, %v1897
        %v1930 = vadd.f32 %v1833, %v1898
        %v1931 = vadd.f32 %v1834, %v1899
        %v1932 = vadd.f32 %v1835, %v1900
        %v1933 = vadd.f32 %v1836, %v1901
        %v1934 = vadd.f32 %v1837, %v1902
        %v1935 = vadd.f32 %v1838, %v1903
        %v1936 = vld [vmem:[#allocation2 + $0x2] sm:$0xff]
        %v1937 = vld [vmem:[#allocation2 + $0xa] sm:$0xff]
        %v1938 = vld [vmem:[#allocation2 + $0x1a] sm:$0xff]
        %v1939 = vld [vmem:[#allocation2 + $0x22] sm:$0xff]
        %v1940 = vld [vmem:[#allocation2 + $0x32] sm:$0xff]
        %v1941 = vld [vmem:[#allocation2 + $0x3a] sm:$0xff]
        %v1942 = vld [vmem:[#allocation2 + $0x4a] sm:$0xff]
        %v1943 = vld [vmem:[#allocation2 + $0x52] sm:$0xff]
        %v1944 = vld [vmem:[#allocation2 + $0x62] sm:$0xff]
        %v1945 = vld [vmem:[#allocation2 + $0x6a] sm:$0xff]
        %v1946 = vld [vmem:[#allocation2 + $0x7a] sm:$0xff]
        %v1947 = vld [vmem:[#allocation2 + $0x82] sm:$0xff]
        %v1948 = vld [vmem:[#allocation2 + $0x92] sm:$0xff]
        %v1949 = vld [vmem:[#allocation2 + $0x9a] sm:$0xff]
        %v1950 = vld [vmem:[#allocation2 + $0xaa] sm:$0xff]
        %v1951 = vld [vmem:[#allocation2 + $0xb2] sm:$0xff]
        %v1952 = vld [vmem:[#allocation2 + $0xc2] sm:$0xff]
        %v1953 = vld [vmem:[#allocation2 + $0xca] sm:$0xff]
        %v1954 = vld [vmem:[#allocation2 + $0xda] sm:$0xff]
        %v1955 = vld [vmem:[#allocation2 + $0xe2] sm:$0xff]
        %v1956 = vld [vmem:[#allocation2 + $0xf2] sm:$0xff]
        %v1957 = vld [vmem:[#allocation2 + $0xfa] sm:$0xff]
        %v1958 = vld [vmem:[#allocation2 + $0x10a] sm:$0xff]
        %v1959 = vld [vmem:[#allocation2 + $0x112] sm:$0xff]
        %v1960 = vld [vmem:[#allocation2 + $0x122] sm:$0xff]
        %v1961 = vld [vmem:[#allocation2 + $0x12a] sm:$0xff]
        %v1962 = vld [vmem:[#allocation2 + $0x13a] sm:$0xff]
        %v1963 = vld [vmem:[#allocation2 + $0x142] sm:$0xff]
        %v1964 = vld [vmem:[#allocation2 + $0x152] sm:$0xff]
        %v1965 = vld [vmem:[#allocation2 + $0x15a] sm:$0xff]
        %v1966 = vld [vmem:[#allocation2 + $0x16a] sm:$0xff]
        %v1967 = vld [vmem:[#allocation2 + $0x172] sm:$0xff]
        %v1968 = vperm.slane %v1739, 2
        %v1969 = vmul.f32 %v1936, %v1968
        %v1970 = vmul.f32 %v1937, %v1968
        %v1971 = vmul.f32 %v1938, %v1968
        %v1972 = vmul.f32 %v1939, %v1968
        %v1973 = vmul.f32 %v1940, %v1968
        %v1974 = vmul.f32 %v1941, %v1968
        %v1975 = vmul.f32 %v1942, %v1968
        %v1976 = vmul.f32 %v1943, %v1968
        %v1977 = vmul.f32 %v1944, %v1968
        %v1978 = vmul.f32 %v1945, %v1968
        %v1979 = vmul.f32 %v1946, %v1968
        %v1980 = vmul.f32 %v1947, %v1968
        %v1981 = vmul.f32 %v1948, %v1968
        %v1982 = vmul.f32 %v1949, %v1968
        %v1983 = vmul.f32 %v1950, %v1968
        %v1984 = vmul.f32 %v1951, %v1968
        %v1985 = vmul.f32 %v1952, %v1968
        %v1986 = vmul.f32 %v1953, %v1968
        %v1987 = vmul.f32 %v1954, %v1968
        %v1988 = vmul.f32 %v1955, %v1968
        %v1989 = vmul.f32 %v1956, %v1968
        %v1990 = vmul.f32 %v1957, %v1968
        %v1991 = vmul.f32 %v1958, %v1968
        %v1992 = vmul.f32 %v1959, %v1968
        %v1993 = vmul.f32 %v1960, %v1968
        %v1994 = vmul.f32 %v1961, %v1968
        %v1995 = vmul.f32 %v1962, %v1968
        %v1996 = vmul.f32 %v1963, %v1968
        %v1997 = vmul.f32 %v1964, %v1968
        %v1998 = vmul.f32 %v1965, %v1968
        %v1999 = vmul.f32 %v1966, %v1968
        %v2000 = vmul.f32 %v1967, %v1968
        %v2001 = vadd.f32 %v1904, %v1969
        %v2002 = vadd.f32 %v1905, %v1970
        %v2003 = vadd.f32 %v1906, %v1971
        %v2004 = vadd.f32 %v1907, %v1972
        %v2005 = vadd.f32 %v1908, %v1973
        %v2006 = vadd.f32 %v1909, %v1974
        %v2007 = vadd.f32 %v1910, %v1975
        %v2008 = vadd.f32 %v1911, %v1976
        %v2009 = vadd.f32 %v1912, %v1977
        %v2010 = vadd.f32 %v1913, %v1978
        %v2011 = vadd.f32 %v1914, %v1979
        %v2012 = vadd.f32 %v1915, %v1980
        %v2013 = vadd.f32 %v1916, %v1981
        %v2014 = vadd.f32 %v1917, %v1982
        %v2015 = vadd.f32 %v1918, %v1983
        %v2016 = vadd.f32 %v1919, %v1984
        %v2017 = vadd.f32 %v1920, %v1985
        %v2018 = vadd.f32 %v1921, %v1986
        %v2019 = vadd.f32 %v1922, %v1987
        %v2020 = vadd.f32 %v1923, %v1988
        %v2021 = vadd.f32 %v1924, %v1989
        %v2022 = vadd.f32 %v1925, %v1990
        %v2023 = vadd.f32 %v1926, %v1991
        %v2024 = vadd.f32 %v1927, %v1992
        %v2025 = vadd.f32 %v1928, %v1993
        %v2026 = vadd.f32 %v1929, %v1994
        %v2027 = vadd.f32 %v1930, %v1995
        %v2028 = vadd.f32 %v1931, %v1996
        %v2029 = vadd.f32 %v1932, %v1997
        %v2030 = vadd.f32 %v1933, %v1998
        %v2031 = vadd.f32 %v1934, %v1999
        %v2032 = vadd.f32 %v1935, %v2000
        %v2033 = vld [vmem:[%s1706] sm:$0xff]
        %v2034 = vld [vmem:[%s1706 + $0x8] sm:$0xff]
        %v2035 = vld [vmem:[%s1706 + $0x18] sm:$0xff]
        %v2036 = vld [vmem:[%s1706 + $0x20] sm:$0xff]
        %v2037 = vld [vmem:[%s1706 + $0x30] sm:$0xff]
        %v2038 = vld [vmem:[%s1706 + $0x38] sm:$0xff]
        %v2039 = vld [vmem:[%s1706 + $0x48] sm:$0xff]
        %v2040 = vld [vmem:[%s1706 + $0x50] sm:$0xff]
        %v2041 = vld [vmem:[%s1706 + $0x60] sm:$0xff]
        %v2042 = vld [vmem:[%s1706 + $0x68] sm:$0xff]
        %v2043 = vld [vmem:[%s1706 + $0x78] sm:$0xff]
        %v2044 = vld [vmem:[%s1706 + $0x80] sm:$0xff]
        %v2045 = vld [vmem:[%s1706 + $0x90] sm:$0xff]
        %v2046 = vld [vmem:[%s1706 + $0x98] sm:$0xff]
        %v2047 = vld [vmem:[%s1706 + $0xa8] sm:$0xff]
        %v2048 = vld [vmem:[%s1706 + $0xb0] sm:$0xff]
        %v2049 = vld [vmem:[%s1706 + $0xc0] sm:$0xff]
        %v2050 = vld [vmem:[%s1706 + $0xc8] sm:$0xff]
        %v2051 = vld [vmem:[%s1706 + $0xd8] sm:$0xff]
        %v2052 = vld [vmem:[%s1706 + $0xe0] sm:$0xff]
        %v2053 = vld [vmem:[%s1706 + $0xf0] sm:$0xff]
        %v2054 = vld [vmem:[%s1706 + $0xf8] sm:$0xff]
        %v2055 = vld [vmem:[%s1706 + $0x108] sm:$0xff]
        %v2056 = vld [vmem:[%s1706 + $0x110] sm:$0xff]
        %v2057 = vld [vmem:[%s1706 + $0x120] sm:$0xff]
        %v2058 = vld [vmem:[%s1706 + $0x128] sm:$0xff]
        %v2059 = vld [vmem:[%s1706 + $0x138] sm:$0xff]
        %v2060 = vld [vmem:[%s1706 + $0x140] sm:$0xff]
        %v2061 = vld [vmem:[%s1706 + $0x150] sm:$0xff]
        %v2062 = vld [vmem:[%s1706 + $0x158] sm:$0xff]
        %v2063 = vld [vmem:[%s1706 + $0x168] sm:$0xff]
        %v2064 = vld [vmem:[%s1706 + $0x170] sm:$0xff]
        %v2065 = vperm.slane %v1740, 0
        %v2066 = vmul.f32 %v2033, %v2065
        %v2067 = vmul.f32 %v2034, %v2065
        %v2068 = vmul.f32 %v2035, %v2065
        %v2069 = vmul.f32 %v2036, %v2065
        %v2070 = vmul.f32 %v2037, %v2065
        %v2071 = vmul.f32 %v2038, %v2065
        %v2072 = vmul.f32 %v2039, %v2065
        %v2073 = vmul.f32 %v2040, %v2065
        %v2074 = vmul.f32 %v2041, %v2065
        %v2075 = vmul.f32 %v2042, %v2065
        %v2076 = vmul.f32 %v2043, %v2065
        %v2077 = vmul.f32 %v2044, %v2065
        %v2078 = vmul.f32 %v2045, %v2065
        %v2079 = vmul.f32 %v2046, %v2065
        %v2080 = vmul.f32 %v2047, %v2065
        %v2081 = vmul.f32 %v2048, %v2065
        %v2082 = vmul.f32 %v2049, %v2065
        %v2083 = vmul.f32 %v2050, %v2065
        %v2084 = vmul.f32 %v2051, %v2065
        %v2085 = vmul.f32 %v2052, %v2065
        %v2086 = vmul.f32 %v2053, %v2065
        %v2087 = vmul.f32 %v2054, %v2065
        %v2088 = vmul.f32 %v2055, %v2065
        %v2089 = vmul.f32 %v2056, %v2065
        %v2090 = vmul.f32 %v2057, %v2065
        %v2091 = vmul.f32 %v2058, %v2065
        %v2092 = vmul.f32 %v2059, %v2065
        %v2093 = vmul.f32 %v2060, %v2065
        %v2094 = vmul.f32 %v2061, %v2065
        %v2095 = vmul.f32 %v2062, %v2065
        %v2096 = vmul.f32 %v2063, %v2065
        %v2097 = vmul.f32 %v2064, %v2065
        %v2098 = vadd.f32 %v2001, %v2066
        %v2099 = vadd.f32 %v2002, %v2067
        %v2100 = vadd.f32 %v2003, %v2068
        %v2101 = vadd.f32 %v2004, %v2069
        %v2102 = vadd.f32 %v2005, %v2070
        %v2103 = vadd.f32 %v2006, %v2071
        %v2104 = vadd.f32 %v2007, %v2072
        %v2105 = vadd.f32 %v2008, %v2073
        %v2106 = vadd.f32 %v2009, %v2074
        %v2107 = vadd.f32 %v2010, %v2075
        %v2108 = vadd.f32 %v2011, %v2076
        %v2109 = vadd.f32 %v2012, %v2077
        %v2110 = vadd.f32 %v2013, %v2078
        %v2111 = vadd.f32 %v2014, %v2079
        %v2112 = vadd.f32 %v2015, %v2080
        %v2113 = vadd.f32 %v2016, %v2081
        %v2114 = vadd.f32 %v2017, %v2082
        %v2115 = vadd.f32 %v2018, %v2083
        %v2116 = vadd.f32 %v2019, %v2084
        %v2117 = vadd.f32 %v2020, %v2085
        %v2118 = vadd.f32 %v2021, %v2086
        %v2119 = vadd.f32 %v2022, %v2087
        %v2120 = vadd.f32 %v2023, %v2088
        %v2121 = vadd.f32 %v2024, %v2089
        %v2122 = vadd.f32 %v2025, %v2090
        %v2123 = vadd.f32 %v2026, %v2091
        %v2124 = vadd.f32 %v2027, %v2092
        %v2125 = vadd.f32 %v2028, %v2093
        %v2126 = vadd.f32 %v2029, %v2094
        %v2127 = vadd.f32 %v2030, %v2095
        %v2128 = vadd.f32 %v2031, %v2096
        %v2129 = vadd.f32 %v2032, %v2097
        %v2130 = vld [vmem:[%s1706 + $0x1] sm:$0xff]
        %v2131 = vld [vmem:[%s1706 + $0x9] sm:$0xff]
        %v2132 = vld [vmem:[%s1706 + $0x19] sm:$0xff]
        %v2133 = vld [vmem:[%s1706 + $0x21] sm:$0xff]
        %v2134 = vld [vmem:[%s1706 + $0x31] sm:$0xff]
        %v2135 = vld [vmem:[%s1706 + $0x39] sm:$0xff]
        %v2136 = vld [vmem:[%s1706 + $0x49] sm:$0xff]
        %v2137 = vld [vmem:[%s1706 + $0x51] sm:$0xff]
        %v2138 = vld [vmem:[%s1706 + $0x61] sm:$0xff]
        %v2139 = vld [vmem:[%s1706 + $0x69] sm:$0xff]
        %v2140 = vld [vmem:[%s1706 + $0x79] sm:$0xff]
        %v2141 = vld [vmem:[%s1706 + $0x81] sm:$0xff]
        %v2142 = vld [vmem:[%s1706 + $0x91] sm:$0xff]
        %v2143 = vld [vmem:[%s1706 + $0x99] sm:$0xff]
        %v2144 = vld [vmem:[%s1706 + $0xa9] sm:$0xff]
        %v2145 = vld [vmem:[%s1706 + $0xb1] sm:$0xff]
        %v2146 = vld [vmem:[%s1706 + $0xc1] sm:$0xff]
        %v2147 = vld [vmem:[%s1706 + $0xc9] sm:$0xff]
        %v2148 = vld [vmem:[%s1706 + $0xd9] sm:$0xff]
        %v2149 = vld [vmem:[%s1706 + $0xe1] sm:$0xff]
        %v2150 = vld [vmem:[%s1706 + $0xf1] sm:$0xff]
        %v2151 = vld [vmem:[%s1706 + $0xf9] sm:$0xff]
        %v2152 = vld [vmem:[%s1706 + $0x109] sm:$0xff]
        %v2153 = vld [vmem:[%s1706 + $0x111] sm:$0xff]
        %v2154 = vld [vmem:[%s1706 + $0x121] sm:$0xff]
        %v2155 = vld [vmem:[%s1706 + $0x129] sm:$0xff]
        %v2156 = vld [vmem:[%s1706 + $0x139] sm:$0xff]
        %v2157 = vld [vmem:[%s1706 + $0x141] sm:$0xff]
        %v2158 = vld [vmem:[%s1706 + $0x151] sm:$0xff]
        %v2159 = vld [vmem:[%s1706 + $0x159] sm:$0xff]
        %v2160 = vld [vmem:[%s1706 + $0x169] sm:$0xff]
        %v2161 = vld [vmem:[%s1706 + $0x171] sm:$0xff]
        %v2162 = vperm.slane %v1740, 1
        %v2163 = vmul.f32 %v2130, %v2162
        %v2164 = vmul.f32 %v2131, %v2162
        %v2165 = vmul.f32 %v2132, %v2162
        %v2166 = vmul.f32 %v2133, %v2162
        %v2167 = vmul.f32 %v2134, %v2162
        %v2168 = vmul.f32 %v2135, %v2162
        %v2169 = vmul.f32 %v2136, %v2162
        %v2170 = vmul.f32 %v2137, %v2162
        %v2171 = vmul.f32 %v2138, %v2162
        %v2172 = vmul.f32 %v2139, %v2162
        %v2173 = vmul.f32 %v2140, %v2162
        %v2174 = vmul.f32 %v2141, %v2162
        %v2175 = vmul.f32 %v2142, %v2162
        %v2176 = vmul.f32 %v2143, %v2162
        %v2177 = vmul.f32 %v2144, %v2162
        %v2178 = vmul.f32 %v2145, %v2162
        %v2179 = vmul.f32 %v2146, %v2162
        %v2180 = vmul.f32 %v2147, %v2162
        %v2181 = vmul.f32 %v2148, %v2162
        %v2182 = vmul.f32 %v2149, %v2162
        %v2183 = vmul.f32 %v2150, %v2162
        %v2184 = vmul.f32 %v2151, %v2162
        %v2185 = vmul.f32 %v2152, %v2162
        %v2186 = vmul.f32 %v2153, %v2162
        %v2187 = vmul.f32 %v2154, %v2162
        %v2188 = vmul.f32 %v2155, %v2162
        %v2189 = vmul.f32 %v2156, %v2162
        %v2190 = vmul.f32 %v2157, %v2162
        %v2191 = vmul.f32 %v2158, %v2162
        %v2192 = vmul.f32 %v2159, %v2162
        %v2193 = vmul.f32 %v2160, %v2162
        %v2194 = vmul.f32 %v2161, %v2162
        %v2195 = vadd.f32 %v2098, %v2163
        %v2196 = vadd.f32 %v2099, %v2164
        %v2197 = vadd.f32 %v2100, %v2165
        %v2198 = vadd.f32 %v2101, %v2166
        %v2199 = vadd.f32 %v2102, %v2167
        %v2200 = vadd.f32 %v2103, %v2168
        %v2201 = vadd.f32 %v2104, %v2169
        %v2202 = vadd.f32 %v2105, %v2170
        %v2203 = vadd.f32 %v2106, %v2171
        %v2204 = vadd.f32 %v2107, %v2172
        %v2205 = vadd.f32 %v2108, %v2173
        %v2206 = vadd.f32 %v2109, %v2174
        %v2207 = vadd.f32 %v2110, %v2175
        %v2208 = vadd.f32 %v2111, %v2176
        %v2209 = vadd.f32 %v2112, %v2177
        %v2210 = vadd.f32 %v2113, %v2178
        %v2211 = vadd.f32 %v2114, %v2179
        %v2212 = vadd.f32 %v2115, %v2180
        %v2213 = vadd.f32 %v2116, %v2181
        %v2214 = vadd.f32 %v2117, %v2182
        %v2215 = vadd.f32 %v2118, %v2183
        %v2216 = vadd.f32 %v2119, %v2184
        %v2217 = vadd.f32 %v2120, %v2185
        %v2218 = vadd.f32 %v2121, %v2186
        %v2219 = vadd.f32 %v2122, %v2187
        %v2220 = vadd.f32 %v2123, %v2188
        %v2221 = vadd.f32 %v2124, %v2189
        %v2222 = vadd.f32 %v2125, %v2190
        %v2223 = vadd.f32 %v2126, %v2191
        %v2224 = vadd.f32 %v2127, %v2192
        %v2225 = vadd.f32 %v2128, %v2193
        %v2226 = vadd.f32 %v2129, %v2194
        %v2227 = vld [vmem:[%s1706 + $0x2] sm:$0xff]
        %v2228 = vld [vmem:[%s1706 + $0xa] sm:$0xff]
        %v2229 = vld [vmem:[%s1706 + $0x1a] sm:$0xff]
        %v2230 = vld [vmem:[%s1706 + $0x22] sm:$0xff]
        %v2231 = vld [vmem:[%s1706 + $0x32] sm:$0xff]
        %v2232 = vld [vmem:[%s1706 + $0x3a] sm:$0xff]
        %v2233 = vld [vmem:[%s1706 + $0x4a] sm:$0xff]
        %v2234 = vld [vmem:[%s1706 + $0x52] sm:$0xff]
        %v2235 = vld [vmem:[%s1706 + $0x62] sm:$0xff]
        %v2236 = vld [vmem:[%s1706 + $0x6a] sm:$0xff]
        %v2237 = vld [vmem:[%s1706 + $0x7a] sm:$0xff]
        %v2238 = vld [vmem:[%s1706 + $0x82] sm:$0xff]
        %v2239 = vld [vmem:[%s1706 + $0x92] sm:$0xff]
        %v2240 = vld [vmem:[%s1706 + $0x9a] sm:$0xff]
        %v2241 = vld [vmem:[%s1706 + $0xaa] sm:$0xff]
        %v2242 = vld [vmem:[%s1706 + $0xb2] sm:$0xff]
        %v2243 = vld [vmem:[%s1706 + $0xc2] sm:$0xff]
        %v2244 = vld [vmem:[%s1706 + $0xca] sm:$0xff]
        %v2245 = vld [vmem:[%s1706 + $0xda] sm:$0xff]
        %v2246 = vld [vmem:[%s1706 + $0xe2] sm:$0xff]
        %v2247 = vld [vmem:[%s1706 + $0xf2] sm:$0xff]
        %v2248 = vld [vmem:[%s1706 + $0xfa] sm:$0xff]
        %v2249 = vld [vmem:[%s1706 + $0x10a] sm:$0xff]
        %v2250 = vld [vmem:[%s1706 + $0x112] sm:$0xff]
        %v2251 = vld [vmem:[%s1706 + $0x122] sm:$0xff]
        %v2252 = vld [vmem:[%s1706 + $0x12a] sm:$0xff]
        %v2253 = vld [vmem:[%s1706 + $0x13a] sm:$0xff]
        %v2254 = vld [vmem:[%s1706 + $0x142] sm:$0xff]
        %v2255 = vld [vmem:[%s1706 + $0x152] sm:$0xff]
        %v2256 = vld [vmem:[%s1706 + $0x15a] sm:$0xff]
        %v2257 = vld [vmem:[%s1706 + $0x16a] sm:$0xff]
        %v2258 = vld [vmem:[%s1706 + $0x172] sm:$0xff]
        %v2259 = vperm.slane %v1740, 2
        %v2260 = vmul.f32 %v2227, %v2259
        %v2261 = vmul.f32 %v2228, %v2259
        %v2262 = vmul.f32 %v2229, %v2259
        %v2263 = vmul.f32 %v2230, %v2259
        %v2264 = vmul.f32 %v2231, %v2259
        %v2265 = vmul.f32 %v2232, %v2259
        %v2266 = vmul.f32 %v2233, %v2259
        %v2267 = vmul.f32 %v2234, %v2259
        %v2268 = vmul.f32 %v2235, %v2259
        %v2269 = vmul.f32 %v2236, %v2259
        %v2270 = vmul.f32 %v2237, %v2259
        %v2271 = vmul.f32 %v2238, %v2259
        %v2272 = vmul.f32 %v2239, %v2259
        %v2273 = vmul.f32 %v2240, %v2259
        %v2274 = vmul.f32 %v2241, %v2259
        %v2275 = vmul.f32 %v2242, %v2259
        %v2276 = vmul.f32 %v2243, %v2259
        %v2277 = vmul.f32 %v2244, %v2259
        %v2278 = vmul.f32 %v2245, %v2259
        %v2279 = vmul.f32 %v2246, %v2259
        %v2280 = vmul.f32 %v2247, %v2259
        %v2281 = vmul.f32 %v2248, %v2259
        %v2282 = vmul.f32 %v2249, %v2259
        %v2283 = vmul.f32 %v2250, %v2259
        %v2284 = vmul.f32 %v2251, %v2259
        %v2285 = vmul.f32 %v2252, %v2259
        %v2286 = vmul.f32 %v2253, %v2259
        %v2287 = vmul.f32 %v2254, %v2259
        %v2288 = vmul.f32 %v2255, %v2259
        %v2289 = vmul.f32 %v2256, %v2259
        %v2290 = vmul.f32 %v2257, %v2259
        %v2291 = vmul.f32 %v2258, %v2259
        %v2292 = vadd.f32 %v2195, %v2260
        %v2293 = vadd.f32 %v2196, %v2261
        %v2294 = vadd.f32 %v2197, %v2262
        %v2295 = vadd.f32 %v2198, %v2263
        %v2296 = vadd.f32 %v2199, %v2264
        %v2297 = vadd.f32 %v2200, %v2265
        %v2298 = vadd.f32 %v2201, %v2266
        %v2299 = vadd.f32 %v2202, %v2267
        %v2300 = vadd.f32 %v2203, %v2268
        %v2301 = vadd.f32 %v2204, %v2269
        %v2302 = vadd.f32 %v2205, %v2270
        %v2303 = vadd.f32 %v2206, %v2271
        %v2304 = vadd.f32 %v2207, %v2272
        %v2305 = vadd.f32 %v2208, %v2273
        %v2306 = vadd.f32 %v2209, %v2274
        %v2307 = vadd.f32 %v2210, %v2275
        %v2308 = vadd.f32 %v2211, %v2276
        %v2309 = vadd.f32 %v2212, %v2277
        %v2310 = vadd.f32 %v2213, %v2278
        %v2311 = vadd.f32 %v2214, %v2279
        %v2312 = vadd.f32 %v2215, %v2280
        %v2313 = vadd.f32 %v2216, %v2281
        %v2314 = vadd.f32 %v2217, %v2282
        %v2315 = vadd.f32 %v2218, %v2283
        %v2316 = vadd.f32 %v2219, %v2284
        %v2317 = vadd.f32 %v2220, %v2285
        %v2318 = vadd.f32 %v2221, %v2286
        %v2319 = vadd.f32 %v2222, %v2287
        %v2320 = vadd.f32 %v2223, %v2288
        %v2321 = vadd.f32 %v2224, %v2289
        %v2322 = vadd.f32 %v2225, %v2290
        %v2323 = vadd.f32 %v2226, %v2291
        %s2324 = scalar_lea.vmem [#allocation2], 48
        %v2325 = vld [vmem:[%s2324] sm:$0xff]
        %v2326 = vld [vmem:[%s2324 + $0x8] sm:$0xff]
        %v2327 = vld [vmem:[%s2324 + $0x18] sm:$0xff]
        %v2328 = vld [vmem:[%s2324 + $0x20] sm:$0xff]
        %v2329 = vld [vmem:[%s2324 + $0x30] sm:$0xff]
        %v2330 = vld [vmem:[%s2324 + $0x38] sm:$0xff]
        %v2331 = vld [vmem:[%s2324 + $0x48] sm:$0xff]
        %v2332 = vld [vmem:[%s2324 + $0x50] sm:$0xff]
        %v2333 = vld [vmem:[%s2324 + $0x60] sm:$0xff]
        %v2334 = vld [vmem:[%s2324 + $0x68] sm:$0xff]
        %v2335 = vld [vmem:[%s2324 + $0x78] sm:$0xff]
        %v2336 = vld [vmem:[%s2324 + $0x80] sm:$0xff]
        %v2337 = vld [vmem:[%s2324 + $0x90] sm:$0xff]
        %v2338 = vld [vmem:[%s2324 + $0x98] sm:$0xff]
        %v2339 = vld [vmem:[%s2324 + $0xa8] sm:$0xff]
        %v2340 = vld [vmem:[%s2324 + $0xb0] sm:$0xff]
        %v2341 = vld [vmem:[%s2324 + $0xc0] sm:$0xff]
        %v2342 = vld [vmem:[%s2324 + $0xc8] sm:$0xff]
        %v2343 = vld [vmem:[%s2324 + $0xd8] sm:$0xff]
        %v2344 = vld [vmem:[%s2324 + $0xe0] sm:$0xff]
        %v2345 = vld [vmem:[%s2324 + $0xf0] sm:$0xff]
        %v2346 = vld [vmem:[%s2324 + $0xf8] sm:$0xff]
        %v2347 = vld [vmem:[%s2324 + $0x108] sm:$0xff]
        %v2348 = vld [vmem:[%s2324 + $0x110] sm:$0xff]
        %v2349 = vld [vmem:[%s2324 + $0x120] sm:$0xff]
        %v2350 = vld [vmem:[%s2324 + $0x128] sm:$0xff]
        %v2351 = vld [vmem:[%s2324 + $0x138] sm:$0xff]
        %v2352 = vld [vmem:[%s2324 + $0x140] sm:$0xff]
        %v2353 = vld [vmem:[%s2324 + $0x150] sm:$0xff]
        %v2354 = vld [vmem:[%s2324 + $0x158] sm:$0xff]
        %v2355 = vld [vmem:[%s2324 + $0x168] sm:$0xff]
        %v2356 = vld [vmem:[%s2324 + $0x170] sm:$0xff]
        %v2357 = vperm.slane %v1741, 0
        %v2358 = vmul.f32 %v2325, %v2357
        %v2359 = vmul.f32 %v2326, %v2357
        %v2360 = vmul.f32 %v2327, %v2357
        %v2361 = vmul.f32 %v2328, %v2357
        %v2362 = vmul.f32 %v2329, %v2357
        %v2363 = vmul.f32 %v2330, %v2357
        %v2364 = vmul.f32 %v2331, %v2357
        %v2365 = vmul.f32 %v2332, %v2357
        %v2366 = vmul.f32 %v2333, %v2357
        %v2367 = vmul.f32 %v2334, %v2357
        %v2368 = vmul.f32 %v2335, %v2357
        %v2369 = vmul.f32 %v2336, %v2357
        %v2370 = vmul.f32 %v2337, %v2357
        %v2371 = vmul.f32 %v2338, %v2357
        %v2372 = vmul.f32 %v2339, %v2357
        %v2373 = vmul.f32 %v2340, %v2357
        %v2374 = vmul.f32 %v2341, %v2357
        %v2375 = vmul.f32 %v2342, %v2357
        %v2376 = vmul.f32 %v2343, %v2357
        %v2377 = vmul.f32 %v2344, %v2357
        %v2378 = vmul.f32 %v2345, %v2357
        %v2379 = vmul.f32 %v2346, %v2357
        %v2380 = vmul.f32 %v2347, %v2357
        %v2381 = vmul.f32 %v2348, %v2357
        %v2382 = vmul.f32 %v2349, %v2357
        %v2383 = vmul.f32 %v2350, %v2357
        %v2384 = vmul.f32 %v2351, %v2357
        %v2385 = vmul.f32 %v2352, %v2357
        %v2386 = vmul.f32 %v2353, %v2357
        %v2387 = vmul.f32 %v2354, %v2357
        %v2388 = vmul.f32 %v2355, %v2357
        %v2389 = vmul.f32 %v2356, %v2357
        %v2390 = vadd.f32 %v2292, %v2358
        %v2391 = vadd.f32 %v2293, %v2359
        %v2392 = vadd.f32 %v2294, %v2360
        %v2393 = vadd.f32 %v2295, %v2361
        %v2394 = vadd.f32 %v2296, %v2362
        %v2395 = vadd.f32 %v2297, %v2363
        %v2396 = vadd.f32 %v2298, %v2364
        %v2397 = vadd.f32 %v2299, %v2365
        %v2398 = vadd.f32 %v2300, %v2366
        %v2399 = vadd.f32 %v2301, %v2367
        %v2400 = vadd.f32 %v2302, %v2368
        %v2401 = vadd.f32 %v2303, %v2369
        %v2402 = vadd.f32 %v2304, %v2370
        %v2403 = vadd.f32 %v2305, %v2371
        %v2404 = vadd.f32 %v2306, %v2372
        %v2405 = vadd.f32 %v2307, %v2373
        %v2406 = vadd.f32 %v2308, %v2374
        %v2407 = vadd.f32 %v2309, %v2375
        %v2408 = vadd.f32 %v2310, %v2376
        %v2409 = vadd.f32 %v2311, %v2377
        %v2410 = vadd.f32 %v2312, %v2378
        %v2411 = vadd.f32 %v2313, %v2379
        %v2412 = vadd.f32 %v2314, %v2380
        %v2413 = vadd.f32 %v2315, %v2381
        %v2414 = vadd.f32 %v2316, %v2382
        %v2415 = vadd.f32 %v2317, %v2383
        %v2416 = vadd.f32 %v2318, %v2384
        %v2417 = vadd.f32 %v2319, %v2385
        %v2418 = vadd.f32 %v2320, %v2386
        %v2419 = vadd.f32 %v2321, %v2387
        %v2420 = vadd.f32 %v2322, %v2388
        %v2421 = vadd.f32 %v2323, %v2389
        %v2422 = vld [vmem:[%s2324 + $0x1] sm:$0xff]
        %v2423 = vld [vmem:[%s2324 + $0x9] sm:$0xff]
        %v2424 = vld [vmem:[%s2324 + $0x19] sm:$0xff]
        %v2425 = vld [vmem:[%s2324 + $0x21] sm:$0xff]
        %v2426 = vld [vmem:[%s2324 + $0x31] sm:$0xff]
        %v2427 = vld [vmem:[%s2324 + $0x39] sm:$0xff]
        %v2428 = vld [vmem:[%s2324 + $0x49] sm:$0xff]
        %v2429 = vld [vmem:[%s2324 + $0x51] sm:$0xff]
        %v2430 = vld [vmem:[%s2324 + $0x61] sm:$0xff]
        %v2431 = vld [vmem:[%s2324 + $0x69] sm:$0xff]
        %v2432 = vld [vmem:[%s2324 + $0x79] sm:$0xff]
        %v2433 = vld [vmem:[%s2324 + $0x81] sm:$0xff]
        %v2434 = vld [vmem:[%s2324 + $0x91] sm:$0xff]
        %v2435 = vld [vmem:[%s2324 + $0x99] sm:$0xff]
        %v2436 = vld [vmem:[%s2324 + $0xa9] sm:$0xff]
        %v2437 = vld [vmem:[%s2324 + $0xb1] sm:$0xff]
        %v2438 = vld [vmem:[%s2324 + $0xc1] sm:$0xff]
        %v2439 = vld [vmem:[%s2324 + $0xc9] sm:$0xff]
        %v2440 = vld [vmem:[%s2324 + $0xd9] sm:$0xff]
        %v2441 = vld [vmem:[%s2324 + $0xe1] sm:$0xff]
        %v2442 = vld [vmem:[%s2324 + $0xf1] sm:$0xff]
        %v2443 = vld [vmem:[%s2324 + $0xf9] sm:$0xff]
        %v2444 = vld [vmem:[%s2324 + $0x109] sm:$0xff]
        %v2445 = vld [vmem:[%s2324 + $0x111] sm:$0xff]
        %v2446 = vld [vmem:[%s2324 + $0x121] sm:$0xff]
        %v2447 = vld [vmem:[%s2324 + $0x129] sm:$0xff]
        %v2448 = vld [vmem:[%s2324 + $0x139] sm:$0xff]
        %v2449 = vld [vmem:[%s2324 + $0x141] sm:$0xff]
        %v2450 = vld [vmem:[%s2324 + $0x151] sm:$0xff]
        %v2451 = vld [vmem:[%s2324 + $0x159] sm:$0xff]
        %v2452 = vld [vmem:[%s2324 + $0x169] sm:$0xff]
        %v2453 = vld [vmem:[%s2324 + $0x171] sm:$0xff]
        %v2454 = vperm.slane %v1741, 1
        %v2455 = vmul.f32 %v2422, %v2454
        %v2456 = vmul.f32 %v2423, %v2454
        %v2457 = vmul.f32 %v2424, %v2454
        %v2458 = vmul.f32 %v2425, %v2454
        %v2459 = vmul.f32 %v2426, %v2454
        %v2460 = vmul.f32 %v2427, %v2454
        %v2461 = vmul.f32 %v2428, %v2454
        %v2462 = vmul.f32 %v2429, %v2454
        %v2463 = vmul.f32 %v2430, %v2454
        %v2464 = vmul.f32 %v2431, %v2454
        %v2465 = vmul.f32 %v2432, %v2454
        %v2466 = vmul.f32 %v2433, %v2454
        %v2467 = vmul.f32 %v2434, %v2454
        %v2468 = vmul.f32 %v2435, %v2454
        %v2469 = vmul.f32 %v2436, %v2454
        %v2470 = vmul.f32 %v2437, %v2454
        %v2471 = vmul.f32 %v2438, %v2454
        %v2472 = vmul.f32 %v2439, %v2454
        %v2473 = vmul.f32 %v2440, %v2454
        %v2474 = vmul.f32 %v2441, %v2454
        %v2475 = vmul.f32 %v2442, %v2454
        %v2476 = vmul.f32 %v2443, %v2454
        %v2477 = vmul.f32 %v2444, %v2454
        %v2478 = vmul.f32 %v2445, %v2454
        %v2479 = vmul.f32 %v2446, %v2454
        %v2480 = vmul.f32 %v2447, %v2454
        %v2481 = vmul.f32 %v2448, %v2454
        %v2482 = vmul.f32 %v2449, %v2454
        %v2483 = vmul.f32 %v2450, %v2454
        %v2484 = vmul.f32 %v2451, %v2454
        %v2485 = vmul.f32 %v2452, %v2454
        %v2486 = vmul.f32 %v2453, %v2454
        %v2487 = vadd.f32 %v2390, %v2455
        %v2488 = vadd.f32 %v2391, %v2456
        %v2489 = vadd.f32 %v2392, %v2457
        %v2490 = vadd.f32 %v2393, %v2458
        %v2491 = vadd.f32 %v2394, %v2459
        %v2492 = vadd.f32 %v2395, %v2460
        %v2493 = vadd.f32 %v2396, %v2461
        %v2494 = vadd.f32 %v2397, %v2462
        %v2495 = vadd.f32 %v2398, %v2463
        %v2496 = vadd.f32 %v2399, %v2464
        %v2497 = vadd.f32 %v2400, %v2465
        %v2498 = vadd.f32 %v2401, %v2466
        %v2499 = vadd.f32 %v2402, %v2467
        %v2500 = vadd.f32 %v2403, %v2468
        %v2501 = vadd.f32 %v2404, %v2469
        %v2502 = vadd.f32 %v2405, %v2470
        %v2503 = vadd.f32 %v2406, %v2471
        %v2504 = vadd.f32 %v2407, %v2472
        %v2505 = vadd.f32 %v2408, %v2473
        %v2506 = vadd.f32 %v2409, %v2474
        %v2507 = vadd.f32 %v2410, %v2475
        %v2508 = vadd.f32 %v2411, %v2476
        %v2509 = vadd.f32 %v2412, %v2477
        %v2510 = vadd.f32 %v2413, %v2478
        %v2511 = vadd.f32 %v2414, %v2479
        %v2512 = vadd.f32 %v2415, %v2480
        %v2513 = vadd.f32 %v2416, %v2481
        %v2514 = vadd.f32 %v2417, %v2482
        %v2515 = vadd.f32 %v2418, %v2483
        %v2516 = vadd.f32 %v2419, %v2484
        %v2517 = vadd.f32 %v2420, %v2485
        %v2518 = vadd.f32 %v2421, %v2486
        %v2519 = vld [vmem:[%s2324 + $0x2] sm:$0xff]
        %v2520 = vld [vmem:[%s2324 + $0xa] sm:$0xff]
        %v2521 = vld [vmem:[%s2324 + $0x1a] sm:$0xff]
        %v2522 = vld [vmem:[%s2324 + $0x22] sm:$0xff]
        %v2523 = vld [vmem:[%s2324 + $0x32] sm:$0xff]
        %v2524 = vld [vmem:[%s2324 + $0x3a] sm:$0xff]
        %v2525 = vld [vmem:[%s2324 + $0x4a] sm:$0xff]
        %v2526 = vld [vmem:[%s2324 + $0x52] sm:$0xff]
        %v2527 = vld [vmem:[%s2324 + $0x62] sm:$0xff]
        %v2528 = vld [vmem:[%s2324 + $0x6a] sm:$0xff]
        %v2529 = vld [vmem:[%s2324 + $0x7a] sm:$0xff]
        %v2530 = vld [vmem:[%s2324 + $0x82] sm:$0xff]
        %v2531 = vld [vmem:[%s2324 + $0x92] sm:$0xff]
        %v2532 = vld [vmem:[%s2324 + $0x9a] sm:$0xff]
        %v2533 = vld [vmem:[%s2324 + $0xaa] sm:$0xff]
        %v2534 = vld [vmem:[%s2324 + $0xb2] sm:$0xff]
        %v2535 = vld [vmem:[%s2324 + $0xc2] sm:$0xff]
        %v2536 = vld [vmem:[%s2324 + $0xca] sm:$0xff]
        %v2537 = vld [vmem:[%s2324 + $0xda] sm:$0xff]
        %v2538 = vld [vmem:[%s2324 + $0xe2] sm:$0xff]
        %v2539 = vld [vmem:[%s2324 + $0xf2] sm:$0xff]
        %v2540 = vld [vmem:[%s2324 + $0xfa] sm:$0xff]
        %v2541 = vld [vmem:[%s2324 + $0x10a] sm:$0xff]
        %v2542 = vld [vmem:[%s2324 + $0x112] sm:$0xff]
        %v2543 = vld [vmem:[%s2324 + $0x122] sm:$0xff]
        %v2544 = vld [vmem:[%s2324 + $0x12a] sm:$0xff]
        %v2545 = vld [vmem:[%s2324 + $0x13a] sm:$0xff]
        %v2546 = vld [vmem:[%s2324 + $0x142] sm:$0xff]
        %v2547 = vld [vmem:[%s2324 + $0x152] sm:$0xff]
        %v2548 = vld [vmem:[%s2324 + $0x15a] sm:$0xff]
        %v2549 = vld [vmem:[%s2324 + $0x16a] sm:$0xff]
        %v2550 = vld [vmem:[%s2324 + $0x172] sm:$0xff]
        %v2551 = vperm.slane %v1741, 2
        %v2552 = vmul.f32 %v2519, %v2551
        %v2553 = vmul.f32 %v2520, %v2551
        %v2554 = vmul.f32 %v2521, %v2551
        %v2555 = vmul.f32 %v2522, %v2551
        %v2556 = vmul.f32 %v2523, %v2551
        %v2557 = vmul.f32 %v2524, %v2551
        %v2558 = vmul.f32 %v2525, %v2551
        %v2559 = vmul.f32 %v2526, %v2551
        %v2560 = vmul.f32 %v2527, %v2551
        %v2561 = vmul.f32 %v2528, %v2551
        %v2562 = vmul.f32 %v2529, %v2551
        %v2563 = vmul.f32 %v2530, %v2551
        %v2564 = vmul.f32 %v2531, %v2551
        %v2565 = vmul.f32 %v2532, %v2551
        %v2566 = vmul.f32 %v2533, %v2551
        %v2567 = vmul.f32 %v2534, %v2551
        %v2568 = vmul.f32 %v2535, %v2551
        %v2569 = vmul.f32 %v2536, %v2551
        %v2570 = vmul.f32 %v2537, %v2551
        %v2571 = vmul.f32 %v2538, %v2551
        %v2572 = vmul.f32 %v2539, %v2551
        %v2573 = vmul.f32 %v2540, %v2551
        %v2574 = vmul.f32 %v2541, %v2551
        %v2575 = vmul.f32 %v2542, %v2551
        %v2576 = vmul.f32 %v2543, %v2551
        %v2577 = vmul.f32 %v2544, %v2551
        %v2578 = vmul.f32 %v2545, %v2551
        %v2579 = vmul.f32 %v2546, %v2551
        %v2580 = vmul.f32 %v2547, %v2551
        %v2581 = vmul.f32 %v2548, %v2551
        %v2582 = vmul.f32 %v2549, %v2551
        %v2583 = vmul.f32 %v2550, %v2551
        %v2584 = vadd.f32 %v2487, %v2552
        %v2585 = vadd.f32 %v2488, %v2553
        %v2586 = vadd.f32 %v2489, %v2554
        %v2587 = vadd.f32 %v2490, %v2555
        %v2588 = vadd.f32 %v2491, %v2556
        %v2589 = vadd.f32 %v2492, %v2557
        %v2590 = vadd.f32 %v2493, %v2558
        %v2591 = vadd.f32 %v2494, %v2559
        %v2592 = vadd.f32 %v2495, %v2560
        %v2593 = vadd.f32 %v2496, %v2561
        %v2594 = vadd.f32 %v2497, %v2562
        %v2595 = vadd.f32 %v2498, %v2563
        %v2596 = vadd.f32 %v2499, %v2564
        %v2597 = vadd.f32 %v2500, %v2565
        %v2598 = vadd.f32 %v2501, %v2566
        %v2599 = vadd.f32 %v2502, %v2567
        %v2600 = vadd.f32 %v2503, %v2568
        %v2601 = vadd.f32 %v2504, %v2569
        %v2602 = vadd.f32 %v2505, %v2570
        %v2603 = vadd.f32 %v2506, %v2571
        %v2604 = vadd.f32 %v2507, %v2572
        %v2605 = vadd.f32 %v2508, %v2573
        %v2606 = vadd.f32 %v2509, %v2574
        %v2607 = vadd.f32 %v2510, %v2575
        %v2608 = vadd.f32 %v2511, %v2576
        %v2609 = vadd.f32 %v2512, %v2577
        %v2610 = vadd.f32 %v2513, %v2578
        %v2611 = vadd.f32 %v2514, %v2579
        %v2612 = vadd.f32 %v2515, %v2580
        %v2613 = vadd.f32 %v2516, %v2581
        %v2614 = vadd.f32 %v2517, %v2582
        %v2615 = vadd.f32 %v2518, %v2583
        %v2616 = vld [vmem:[%s6] sm:$0x1]
        %v2618 = vperm.slane %v2616, 0
        %v2620 = vadd.f32 %v2584, %v2618
        %v2621 = vadd.f32 %v2585, %v2618
        %v2622 = vadd.f32 %v2586, %v2618
        %v2623 = vadd.f32 %v2587, %v2618
        %v2624 = vadd.f32 %v2588, %v2618
        %v2625 = vadd.f32 %v2589, %v2618
        %v2626 = vadd.f32 %v2590, %v2618
        %v2627 = vadd.f32 %v2591, %v2618
        %v2628 = vadd.f32 %v2592, %v2618
        %v2629 = vadd.f32 %v2593, %v2618
        %v2630 = vadd.f32 %v2594, %v2618
        %v2631 = vadd.f32 %v2595, %v2618
        %v2632 = vadd.f32 %v2596, %v2618
        %v2633 = vadd.f32 %v2597, %v2618
        %v2634 = vadd.f32 %v2598, %v2618
        %v2635 = vadd.f32 %v2599, %v2618
        %v2636 = vadd.f32 %v2600, %v2618
        %v2637 = vadd.f32 %v2601, %v2618
        %v2638 = vadd.f32 %v2602, %v2618
        %v2639 = vadd.f32 %v2603, %v2618
        %v2640 = vadd.f32 %v2604, %v2618
        %v2641 = vadd.f32 %v2605, %v2618
        %v2642 = vadd.f32 %v2606, %v2618
        %v2643 = vadd.f32 %v2607, %v2618
        %v2644 = vadd.f32 %v2608, %v2618
        %v2645 = vadd.f32 %v2609, %v2618
        %v2646 = vadd.f32 %v2610, %v2618
        %v2647 = vadd.f32 %v2611, %v2618
        %v2648 = vadd.f32 %v2612, %v2618
        %v2649 = vadd.f32 %v2613, %v2618
        %v2650 = vadd.f32 %v2614, %v2618
        %v2651 = vadd.f32 %v2615, %v2618
        %v2652 = vmul.f32 %v2620, 0.5
        %v2653 = vmul.f32 %v2621, 0.5
        %v2654 = vmul.f32 %v2622, 0.5
        %v2655 = vmul.f32 %v2623, 0.5
        %v2656 = vmul.f32 %v2624, 0.5
        %v2657 = vmul.f32 %v2625, 0.5
        %v2658 = vmul.f32 %v2626, 0.5
        %v2659 = vmul.f32 %v2627, 0.5
        %v2660 = vmul.f32 %v2628, 0.5
        %v2661 = vmul.f32 %v2629, 0.5
        %v2662 = vmul.f32 %v2630, 0.5
        %v2663 = vmul.f32 %v2631, 0.5
        %v2664 = vmul.f32 %v2632, 0.5
        %v2665 = vmul.f32 %v2633, 0.5
        %v2666 = vmul.f32 %v2634, 0.5
        %v2667 = vmul.f32 %v2635, 0.5
        %v2668 = vmul.f32 %v2636, 0.5
        %v2669 = vmul.f32 %v2637, 0.5
        %v2670 = vmul.f32 %v2638, 0.5
        %v2671 = vmul.f32 %v2639, 0.5
        %v2672 = vmul.f32 %v2640, 0.5
        %v2673 = vmul.f32 %v2641, 0.5
        %v2674 = vmul.f32 %v2642, 0.5
        %v2675 = vmul.f32 %v2643, 0.5
        %v2676 = vmul.f32 %v2644, 0.5
        %v2677 = vmul.f32 %v2645, 0.5
        %v2678 = vmul.f32 %v2646, 0.5
        %v2679 = vmul.f32 %v2647, 0.5
        %v2680 = vmul.f32 %v2648, 0.5
        %v2681 = vmul.f32 %v2649, 0.5
        %v2682 = vmul.f32 %v2650, 0.5
        %v2683 = vmul.f32 %v2651, 0.5
        %v2684 = vmul.f32 %v2620, 0.044715
        %v2685 = vmul.f32 %v2621, 0.044715
        %v2686 = vmul.f32 %v2622, 0.044715
        %v2687 = vmul.f32 %v2623, 0.044715
        %v2688 = vmul.f32 %v2624, 0.044715
        %v2689 = vmul.f32 %v2625, 0.044715
        %v2690 = vmul.f32 %v2626, 0.044715
        %v2691 = vmul.f32 %v2627, 0.044715
        %v2692 = vmul.f32 %v2628, 0.044715
        %v2693 = vmul.f32 %v2629, 0.044715
        %v2694 = vmul.f32 %v2630, 0.044715
        %v2695 = vmul.f32 %v2631, 0.044715
        %v2696 = vmul.f32 %v2632, 0.044715
        %v2697 = vmul.f32 %v2633, 0.044715
        %v2698 = vmul.f32 %v2634, 0.044715
        %v2699 = vmul.f32 %v2635, 0.044715
        %v2700 = vmul.f32 %v2636, 0.044715
        %v2701 = vmul.f32 %v2637, 0.044715
        %v2702 = vmul.f32 %v2638, 0.044715
        %v2703 = vmul.f32 %v2639, 0.044715
        %v2704 = vmul.f32 %v2640, 0.044715
        %v2705 = vmul.f32 %v2641, 0.044715
        %v2706 = vmul.f32 %v2642, 0.044715
        %v2707 = vmul.f32 %v2643, 0.044715
        %v2708 = vmul.f32 %v2644, 0.044715
        %v2709 = vmul.f32 %v2645, 0.044715
        %v2710 = vmul.f32 %v2646, 0.044715
        %v2711 = vmul.f32 %v2647, 0.044715
        %v2712 = vmul.f32 %v2648, 0.044715
        %v2713 = vmul.f32 %v2649, 0.044715
        %v2714 = vmul.f32 %v2650, 0.044715
        %v2715 = vmul.f32 %v2651, 0.044715
        %v2716 = vmul.f32 %v2684, %v2620
        %v2717 = vmul.f32 %v2685, %v2621
        %v2718 = vmul.f32 %v2686, %v2622
        %v2719 = vmul.f32 %v2687, %v2623
        %v2720 = vmul.f32 %v2688, %v2624
        %v2721 = vmul.f32 %v2689, %v2625
        %v2722 = vmul.f32 %v2690, %v2626
        %v2723 = vmul.f32 %v2691, %v2627
        %v2724 = vmul.f32 %v2692, %v2628
        %v2725 = vmul.f32 %v2693, %v2629
        %v2726 = vmul.f32 %v2694, %v2630
        %v2727 = vmul.f32 %v2695, %v2631
        %v2728 = vmul.f32 %v2696, %v2632
        %v2729 = vmul.f32 %v2697, %v2633
        %v2730 = vmul.f32 %v2698, %v2634
        %v2731 = vmul.f32 %v2699, %v2635
        %v2732 = vmul.f32 %v2700, %v2636
        %v2733 = vmul.f32 %v2701, %v2637
        %v2734 = vmul.f32 %v2702, %v2638
        %v2735 = vmul.f32 %v2703, %v2639
        %v2736 = vmul.f32 %v2704, %v2640
        %v2737 = vmul.f32 %v2705, %v2641
        %v2738 = vmul.f32 %v2706, %v2642
        %v2739 = vmul.f32 %v2707, %v2643
        %v2740 = vmul.f32 %v2708, %v2644
        %v2741 = vmul.f32 %v2709, %v2645
        %v2742 = vmul.f32 %v2710, %v2646
        %v2743 = vmul.f32 %v2711, %v2647
        %v2744 = vmul.f32 %v2712, %v2648
        %v2745 = vmul.f32 %v2713, %v2649
        %v2746 = vmul.f32 %v2714, %v2650
        %v2747 = vmul.f32 %v2715, %v2651
        %v2748 = vmul.f32 %v2716, %v2620
        %v2749 = vmul.f32 %v2717, %v2621
        %v2750 = vmul.f32 %v2718, %v2622
        %v2751 = vmul.f32 %v2719, %v2623
        %v2752 = vmul.f32 %v2720, %v2624
        %v2753 = vmul.f32 %v2721, %v2625
        %v2754 = vmul.f32 %v2722, %v2626
        %v2755 = vmul.f32 %v2723, %v2627
        %v2756 = vmul.f32 %v2724, %v2628
        %v2757 = vmul.f32 %v2725, %v2629
        %v2758 = vmul.f32 %v2726, %v2630
        %v2759 = vmul.f32 %v2727, %v2631
        %v2760 = vmul.f32 %v2728, %v2632
        %v2761 = vmul.f32 %v2729, %v2633
        %v2762 = vmul.f32 %v2730, %v2634
        %v2763 = vmul.f32 %v2731, %v2635
        %v2764 = vmul.f32 %v2732, %v2636
        %v2765 = vmul.f32 %v2733, %v2637
        %v2766 = vmul.f32 %v2734, %v2638
        %v2767 = vmul.f32 %v2735, %v2639
        %v2768 = vmul.f32 %v2736, %v2640
        %v2769 = vmul.f32 %v2737, %v2641
        %v2770 = vmul.f32 %v2738, %v2642
        %v2771 = vmul.f32 %v2739, %v2643
        %v2772 = vmul.f32 %v2740, %v2644
        %v2773 = vmul.f32 %v2741, %v2645
        %v2774 = vmul.f32 %v2742, %v2646
        %v2775 = vmul.f32 %v2743, %v2647
        %v2776 = vmul.f32 %v2744, %v2648
        %v2777 = vmul.f32 %v2745, %v2649
        %v2778 = vmul.f32 %v2746, %v2650
        %v2779 = vmul.f32 %v2747, %v2651
        %v2780 = vadd.f32 %v2620, %v2748
        %v2781 = vadd.f32 %v2621, %v2749
        %v2782 = vadd.f32 %v2622, %v2750
        %v2783 = vadd.f32 %v2623, %v2751
        %v2784 = vadd.f32 %v2624, %v2752
        %v2785 = vadd.f32 %v2625, %v2753
        %v2786 = vadd.f32 %v2626, %v2754
        %v2787 = vadd.f32 %v2627, %v2755
        %v2788 = vadd.f32 %v2628, %v2756
        %v2789 = vadd.f32 %v2629, %v2757
        %v2790 = vadd.f32 %v2630, %v2758
        %v2791 = vadd.f32 %v2631, %v2759
        %v2792 = vadd.f32 %v2632, %v2760
        %v2793 = vadd.f32 %v2633, %v2761
        %v2794 = vadd.f32 %v2634, %v2762
        %v2795 = vadd.f32 %v2635, %v2763
        %v2796 = vadd.f32 %v2636, %v2764
        %v2797 = vadd.f32 %v2637, %v2765
        %v2798 = vadd.f32 %v2638, %v2766
        %v2799 = vadd.f32 %v2639, %v2767
        %v2800 = vadd.f32 %v2640, %v2768
        %v2801 = vadd.f32 %v2641, %v2769
        %v2802 = vadd.f32 %v2642, %v2770
        %v2803 = vadd.f32 %v2643, %v2771
        %v2804 = vadd.f32 %v2644, %v2772
        %v2805 = vadd.f32 %v2645, %v2773
        %v2806 = vadd.f32 %v2646, %v2774
        %v2807 = vadd.f32 %v2647, %v2775
        %v2808 = vadd.f32 %v2648, %v2776
        %v2809 = vadd.f32 %v2649, %v2777
        %v2810 = vadd.f32 %v2650, %v2778
        %v2811 = vadd.f32 %v2651, %v2779
        %v2812 = vmul.f32 %v2780, 0.7978846
        %v2813 = vmul.f32 %v2781, 0.7978846
        %v2814 = vmul.f32 %v2782, 0.7978846
        %v2815 = vmul.f32 %v2783, 0.7978846
        %v2816 = vmul.f32 %v2784, 0.7978846
        %v2817 = vmul.f32 %v2785, 0.7978846
        %v2818 = vmul.f32 %v2786, 0.7978846
        %v2819 = vmul.f32 %v2787, 0.7978846
        %v2820 = vmul.f32 %v2788, 0.7978846
        %v2821 = vmul.f32 %v2789, 0.7978846
        %v2822 = vmul.f32 %v2790, 0.7978846
        %v2823 = vmul.f32 %v2791, 0.7978846
        %v2824 = vmul.f32 %v2792, 0.7978846
        %v2825 = vmul.f32 %v2793, 0.7978846
        %v2826 = vmul.f32 %v2794, 0.7978846
        %v2827 = vmul.f32 %v2795, 0.7978846
        %v2828 = vmul.f32 %v2796, 0.7978846
        %v2829 = vmul.f32 %v2797, 0.7978846
        %v2830 = vmul.f32 %v2798, 0.7978846
        %v2831 = vmul.f32 %v2799, 0.7978846
        %v2832 = vmul.f32 %v2800, 0.7978846
        %v2833 = vmul.f32 %v2801, 0.7978846
        %v2834 = vmul.f32 %v2802, 0.7978846
        %v2835 = vmul.f32 %v2803, 0.7978846
        %v2836 = vmul.f32 %v2804, 0.7978846
        %v2837 = vmul.f32 %v2805, 0.7978846
        %v2838 = vmul.f32 %v2806, 0.7978846
        %v2839 = vmul.f32 %v2807, 0.7978846
        %v2840 = vmul.f32 %v2808, 0.7978846
        %v2841 = vmul.f32 %v2809, 0.7978846
        %v2842 = vmul.f32 %v2810, 0.7978846
        %v2843 = vmul.f32 %v2811, 0.7978846
        %v2844 = vtanh.pop %v2812
        %v2845 = vtanh.pop %v2813
        %v2846 = vtanh.pop %v2814
        %v2847 = vtanh.pop %v2815
        %v2848 = vtanh.pop %v2816
        %v2849 = vtanh.pop %v2817
        %v2850 = vtanh.pop %v2818
        %v2851 = vtanh.pop %v2819
        %v2852 = vtanh.pop %v2820
        %v2853 = vtanh.pop %v2821
        %v2854 = vtanh.pop %v2822
        %v2855 = vtanh.pop %v2823
        %v2856 = vtanh.pop %v2824
        %v2857 = vtanh.pop %v2825
        %v2858 = vtanh.pop %v2826
        %v2859 = vtanh.pop %v2827
        %v2860 = vtanh.pop %v2828
        %v2861 = vtanh.pop %v2829
        %v2862 = vtanh.pop %v2830
        %v2863 = vtanh.pop %v2831
        %v2864 = vtanh.pop %v2832
        %v2865 = vtanh.pop %v2833
        %v2866 = vtanh.pop %v2834
        %v2867 = vtanh.pop %v2835
        %v2868 = vtanh.pop %v2836
        %v2869 = vtanh.pop %v2837
        %v2870 = vtanh.pop %v2838
        %v2871 = vtanh.pop %v2839
        %v2872 = vtanh.pop %v2840
        %v2873 = vtanh.pop %v2841
        %v2874 = vtanh.pop %v2842
        %v2875 = vtanh.pop %v2843
        %v2876 = vadd.f32 %v2844, 1.0
        %v2877 = vadd.f32 %v2845, 1.0
        %v2878 = vadd.f32 %v2846, 1.0
        %v2879 = vadd.f32 %v2847, 1.0
        %v2880 = vadd.f32 %v2848, 1.0
        %v2881 = vadd.f32 %v2849, 1.0
        %v2882 = vadd.f32 %v2850, 1.0
        %v2883 = vadd.f32 %v2851, 1.0
        %v2884 = vadd.f32 %v2852, 1.0
        %v2885 = vadd.f32 %v2853, 1.0
        %v2886 = vadd.f32 %v2854, 1.0
        %v2887 = vadd.f32 %v2855, 1.0
        %v2888 = vadd.f32 %v2856, 1.0
        %v2889 = vadd.f32 %v2857, 1.0
        %v2890 = vadd.f32 %v2858, 1.0
        %v2891 = vadd.f32 %v2859, 1.0
        %v2892 = vadd.f32 %v2860, 1.0
        %v2893 = vadd.f32 %v2861, 1.0
        %v2894 = vadd.f32 %v2862, 1.0
        %v2895 = vadd.f32 %v2863, 1.0
        %v2896 = vadd.f32 %v2864, 1.0
        %v2897 = vadd.f32 %v2865, 1.0
        %v2898 = vadd.f32 %v2866, 1.0
        %v2899 = vadd.f32 %v2867, 1.0
        %v2900 = vadd.f32 %v2868, 1.0
        %v2901 = vadd.f32 %v2869, 1.0
        %v2902 = vadd.f32 %v2870, 1.0
        %v2903 = vadd.f32 %v2871, 1.0
        %v2904 = vadd.f32 %v2872, 1.0
        %v2905 = vadd.f32 %v2873, 1.0
        %v2906 = vadd.f32 %v2874, 1.0
        %v2907 = vadd.f32 %v2875, 1.0
        %v2908 = vmul.f32 %v2652, %v2876
        %v2909 = vmul.f32 %v2653, %v2877
        %v2910 = vmul.f32 %v2654, %v2878
        %v2911 = vmul.f32 %v2655, %v2879
        %v2912 = vmul.f32 %v2656, %v2880
        %v2913 = vmul.f32 %v2657, %v2881
        %v2914 = vmul.f32 %v2658, %v2882
        %v2915 = vmul.f32 %v2659, %v2883
        %v2916 = vmul.f32 %v2660, %v2884
        %v2917 = vmul.f32 %v2661, %v2885
        %v2918 = vmul.f32 %v2662, %v2886
        %v2919 = vmul.f32 %v2663, %v2887
        %v2920 = vmul.f32 %v2664, %v2888
        %v2921 = vmul.f32 %v2665, %v2889
        %v2922 = vmul.f32 %v2666, %v2890
        %v2923 = vmul.f32 %v2667, %v2891
        %v2924 = vmul.f32 %v2668, %v2892
        %v2925 = vmul.f32 %v2669, %v2893
        %v2926 = vmul.f32 %v2670, %v2894
        %v2927 = vmul.f32 %v2671, %v2895
        %v2928 = vmul.f32 %v2672, %v2896
        %v2929 = vmul.f32 %v2673, %v2897
        %v2930 = vmul.f32 %v2674, %v2898
        %v2931 = vmul.f32 %v2675, %v2899
        %v2932 = vmul.f32 %v2676, %v2900
        %v2933 = vmul.f32 %v2677, %v2901
        %v2934 = vmul.f32 %v2678, %v2902
        %v2935 = vmul.f32 %v2679, %v2903
        %v2936 = vmul.f32 %v2680, %v2904
        %v2937 = vmul.f32 %v2681, %v2905
        %v2938 = vmul.f32 %v2682, %v2906
        %v2939 = vmul.f32 %v2683, %v2907
        %v2940 = vld [vmem:[%s7] sm:$0xff]
        %v2941 = vld [vmem:[%s7 + $0x8] sm:$0xff]
        %v2942 = vld [vmem:[%s7 + $0x10] sm:$0xff]
        %v2943 = vld [vmem:[%s7 + $0x18] sm:$0xff]
        %v2944 = vld [vmem:[%s7 + $0x20] sm:$0xff]
        %v2945 = vld [vmem:[%s7 + $0x28] sm:$0xff]
        %v2946 = vld [vmem:[%s7 + $0x30] sm:$0xff]
        %v2947 = vld [vmem:[%s7 + $0x38] sm:$0xff]
        %v2948 = vld [vmem:[%s7 + $0x40] sm:$0xff]
        %v2949 = vld [vmem:[%s7 + $0x48] sm:$0xff]
        %v2950 = vld [vmem:[%s7 + $0x50] sm:$0xff]
        %v2951 = vld [vmem:[%s7 + $0x58] sm:$0xff]
        %v2952 = vld [vmem:[%s7 + $0x60] sm:$0xff]
        %v2953 = vld [vmem:[%s7 + $0x68] sm:$0xff]
        %v2954 = vld [vmem:[%s7 + $0x70] sm:$0xff]
        %v2955 = vld [vmem:[%s7 + $0x78] sm:$0xff]
        %v2956 = vld [vmem:[%s8] sm:$0x1]
        %v2958 = vperm.slane %v2956, 0
        %2960 = vmatpush.msra.mxu0 %v2955
        %2961 = vmatpush.msra.mxu0 %v2954
        %2962 = vmatpush.msra.mxu0 %v2953
        %2963 = vmatpush.msra.mxu0 %v2952
        %2964 = vmatpush.msra.mxu0 %v2951
        %2965 = vmatpush.msra.mxu0 %v2950
        %2966 = vmatpush.msra.mxu0 %v2949
        %2967 = vmatpush.msra.mxu0 %v2948
        %2968 = vmatpush.msra.mxu0 %v2947
        %2969 = vmatpush.msra.mxu0 %v2946
        %2970 = vmatpush.msra.mxu0 %v2945
        %2971 = vmatpush.msra.mxu0 %v2944
        %2972 = vmatpush.msra.mxu0 %v2943
        %2973 = vmatpush.msra.mxu0 %v2942
        %2974 = vmatpush.msra.mxu0 %v2941
        %2975 = vmatpush.msra.mxu0 %v2940
        %2976 = vmatmul.f32.gmra.mxu0 %v2908
        %v2977 = vpop.f32.mrf.mxu0
        %v2978 = vadd.f32 %v2958, %v2977
        %2979 = vmatmul.f32.gmra.mxu0 %v2909
        %v2980 = vpop.f32.mrf.mxu0
        %v2981 = vadd.f32 %v2958, %v2980
        %2982 = vmatmul.f32.gmra.mxu0 %v2910
        %v2983 = vpop.f32.mrf.mxu0
        %v2984 = vadd.f32 %v2958, %v2983
        %2985 = vmatmul.f32.gmra.mxu0 %v2911
        %v2986 = vpop.f32.mrf.mxu0
        %v2987 = vadd.f32 %v2958, %v2986
        %2988 = vmatmul.f32.gmra.mxu0 %v2912
        %v2989 = vpop.f32.mrf.mxu0
        %v2990 = vadd.f32 %v2958, %v2989
        %2991 = vmatmul.f32.gmra.mxu0 %v2913
        %v2992 = vpop.f32.mrf.mxu0
        %v2993 = vadd.f32 %v2958, %v2992
        %2994 = vmatmul.f32.gmra.mxu0 %v2914
        %v2995 = vpop.f32.mrf.mxu0
        %v2996 = vadd.f32 %v2958, %v2995
        %2997 = vmatmul.f32.gmra.mxu0 %v2915
        %v2998 = vpop.f32.mrf.mxu0
        %v2999 = vadd.f32 %v2958, %v2998
        %3000 = vmatmul.f32.gmra.mxu0 %v2916
        %v3001 = vpop.f32.mrf.mxu0
        %v3002 = vadd.f32 %v2958, %v3001
        %3003 = vmatmul.f32.gmra.mxu0 %v2917
        %v3004 = vpop.f32.mrf.mxu0
        %v3005 = vadd.f32 %v2958, %v3004
        %3006 = vmatmul.f32.gmra.mxu0 %v2918
        %v3007 = vpop.f32.mrf.mxu0
        %v3008 = vadd.f32 %v2958, %v3007
        %3009 = vmatmul.f32.gmra.mxu0 %v2919
        %v3010 = vpop.f32.mrf.mxu0
        %v3011 = vadd.f32 %v2958, %v3010
        %3012 = vmatmul.f32.gmra.mxu0 %v2920
        %v3013 = vpop.f32.mrf.mxu0
        %v3014 = vadd.f32 %v2958, %v3013
        %3015 = vmatmul.f32.gmra.mxu0 %v2921
        %v3016 = vpop.f32.mrf.mxu0
        %v3017 = vadd.f32 %v2958, %v3016
        %3018 = vmatmul.f32.gmra.mxu0 %v2922
        %v3019 = vpop.f32.mrf.mxu0
        %v3020 = vadd.f32 %v2958, %v3019
        %3021 = vmatmul.f32.gmra.mxu0 %v2923
        %v3022 = vpop.f32.mrf.mxu0
        %v3023 = vadd.f32 %v2958, %v3022
        %3024 = vmatmul.f32.gmra.mxu0 %v2924
        %v3025 = vpop.f32.mrf.mxu0
        %v3026 = vadd.f32 %v2958, %v3025
        %3027 = vmatmul.f32.gmra.mxu0 %v2925
        %v3028 = vpop.f32.mrf.mxu0
        %v3029 = vadd.f32 %v2958, %v3028
        %3030 = vmatmul.f32.gmra.mxu0 %v2926
        %v3031 = vpop.f32.mrf.mxu0
        %v3032 = vadd.f32 %v2958, %v3031
        %3033 = vmatmul.f32.gmra.mxu0 %v2927
        %v3034 = vpop.f32.mrf.mxu0
        %v3035 = vadd.f32 %v2958, %v3034
        %3036 = vmatmul.f32.gmra.mxu0 %v2928
        %v3037 = vpop.f32.mrf.mxu0
        %v3038 = vadd.f32 %v2958, %v3037
        %3039 = vmatmul.f32.gmra.mxu0 %v2929
        %v3040 = vpop.f32.mrf.mxu0
        %v3041 = vadd.f32 %v2958, %v3040
        %3042 = vmatmul.f32.gmra.mxu0 %v2930
        %v3043 = vpop.f32.mrf.mxu0
        %v3044 = vadd.f32 %v2958, %v3043
        %3045 = vmatmul.f32.gmra.mxu0 %v2931
        %v3046 = vpop.f32.mrf.mxu0
        %v3047 = vadd.f32 %v2958, %v3046
        %3048 = vmatmul.f32.gmra.mxu0 %v2932
        %v3049 = vpop.f32.mrf.mxu0
        %v3050 = vadd.f32 %v2958, %v3049
        %3051 = vmatmul.f32.gmra.mxu0 %v2933
        %v3052 = vpop.f32.mrf.mxu0
        %v3053 = vadd.f32 %v2958, %v3052
        %3054 = vmatmul.f32.gmra.mxu0 %v2934
        %v3055 = vpop.f32.mrf.mxu0
        %v3056 = vadd.f32 %v2958, %v3055
        %3057 = vmatmul.f32.gmra.mxu0 %v2935
        %v3058 = vpop.f32.mrf.mxu0
        %v3059 = vadd.f32 %v2958, %v3058
        %3060 = vmatmul.f32.gmra.mxu0 %v2936
        %v3061 = vpop.f32.mrf.mxu0
        %v3062 = vadd.f32 %v2958, %v3061
        %3063 = vmatmul.f32.gmra.mxu0 %v2937
        %v3064 = vpop.f32.mrf.mxu0
        %v3065 = vadd.f32 %v2958, %v3064
        %3066 = vmatmul.f32.gmra.mxu0 %v2938
        %v3067 = vpop.f32.mrf.mxu0
        %v3068 = vadd.f32 %v2958, %v3067
        %3069 = vmatmul.f32.gmra.mxu0 %v2939
        %v3070 = vpop.f32.mrf.mxu0
        %v3071 = vadd.f32 %v2958, %v3070
        %3072 = vdwg.mxu0
        %v3073 = vadd.f32 %v1115, %v2978
        %v3074 = vadd.f32 %v1116, %v2981
        %v3075 = vadd.f32 %v1117, %v2984
        %v3076 = vadd.f32 %v1118, %v2987
        %v3077 = vadd.f32 %v1119, %v2990
        %v3078 = vadd.f32 %v1120, %v2993
        %v3079 = vadd.f32 %v1121, %v2996
        %v3080 = vadd.f32 %v1122, %v2999
        %v3081 = vadd.f32 %v1123, %v3002
        %v3082 = vadd.f32 %v1124, %v3005
        %v3083 = vadd.f32 %v1125, %v3008
        %v3084 = vadd.f32 %v1126, %v3011
        %v3085 = vadd.f32 %v1127, %v3014
        %v3086 = vadd.f32 %v1128, %v3017
        %v3087 = vadd.f32 %v1129, %v3020
        %v3088 = vadd.f32 %v1130, %v3023
        %v3089 = vadd.f32 %v1131, %v3026
        %v3090 = vadd.f32 %v1132, %v3029
        %v3091 = vadd.f32 %v1133, %v3032
        %v3092 = vadd.f32 %v1134, %v3035
        %v3093 = vadd.f32 %v1135, %v3038
        %v3094 = vadd.f32 %v1136, %v3041
        %v3095 = vadd.f32 %v1137, %v3044
        %v3096 = vadd.f32 %v1138, %v3047
        %v3097 = vadd.f32 %v1139, %v3050
        %v3098 = vadd.f32 %v1140, %v3053
        %v3099 = vadd.f32 %v1141, %v3056
        %v3100 = vadd.f32 %v1142, %v3059
        %v3101 = vadd.f32 %v1143, %v3062
        %v3102 = vadd.f32 %v1144, %v3065
        %v3103 = vadd.f32 %v1145, %v3068
        %v3104 = vadd.f32 %v1146, %v3071
        %3105 = vst.msk [vmem:[%s325] sm:$0xff] %vm365, %v3073
        %3106 = vst.msk [vmem:[%s325 + $0x8] sm:$0xff] %vm365, %v3074
        %3107 = vst.msk [vmem:[%s325 + $0x10] sm:$0xff] %vm365, %v3075
        %3108 = vst.msk [vmem:[%s325 + $0x18] sm:$0xff] %vm365, %v3076
        %3109 = vst.msk [vmem:[%s325 + $0x20] sm:$0xff] %vm365, %v3077
        %3110 = vst.msk [vmem:[%s325 + $0x28] sm:$0xff] %vm365, %v3078
        %3111 = vst.msk [vmem:[%s325 + $0x30] sm:$0xff] %vm365, %v3079
        %3112 = vst.msk [vmem:[%s325 + $0x38] sm:$0xff] %vm365, %v3080
        %3113 = vst.msk [vmem:[%s325 + $0x40] sm:$0xff] %vm365, %v3081
        %3114 = vst.msk [vmem:[%s325 + $0x48] sm:$0xff] %vm365, %v3082
        %3115 = vst.msk [vmem:[%s325 + $0x50] sm:$0xff] %vm365, %v3083
        %3116 = vst.msk [vmem:[%s325 + $0x58] sm:$0xff] %vm365, %v3084
        %3117 = vst.msk [vmem:[%s325 + $0x60] sm:$0xff] %vm365, %v3085
        %3118 = vst.msk [vmem:[%s325 + $0x68] sm:$0xff] %vm365, %v3086
        %3119 = vst.msk [vmem:[%s325 + $0x70] sm:$0xff] %vm365, %v3087
        %3120 = vst.msk [vmem:[%s325 + $0x78] sm:$0xff] %vm365, %v3088
        %3121 = vst.msk [vmem:[%s325 + $0x80] sm:$0xff] %vm365, %v3089
        %3122 = vst.msk [vmem:[%s325 + $0x88] sm:$0xff] %vm365, %v3090
        %3123 = vst.msk [vmem:[%s325 + $0x90] sm:$0xff] %vm365, %v3091
        %3124 = vst.msk [vmem:[%s325 + $0x98] sm:$0xff] %vm365, %v3092
        %3125 = vst.msk [vmem:[%s325 + $0xa0] sm:$0xff] %vm365, %v3093
        %3126 = vst.msk [vmem:[%s325 + $0xa8] sm:$0xff] %vm365, %v3094
        %3127 = vst.msk [vmem:[%s325 + $0xb0] sm:$0xff] %vm365, %v3095
        %3128 = vst.msk [vmem:[%s325 + $0xb8] sm:$0xff] %vm365, %v3096
        %3129 = vst.msk [vmem:[%s325 + $0xc0] sm:$0xff] %vm365, %v3097
        %3130 = vst.msk [vmem:[%s325 + $0xc8] sm:$0xff] %vm365, %v3098
        %3131 = vst.msk [vmem:[%s325 + $0xd0] sm:$0xff] %vm365, %v3099
        %3132 = vst.msk [vmem:[%s325 + $0xd8] sm:$0xff] %vm365, %v3100
        %3133 = vst.msk [vmem:[%s325 + $0xe0] sm:$0xff] %vm365, %v3101
        %3134 = vst.msk [vmem:[%s325 + $0xe8] sm:$0xff] %vm365, %v3102
        %3135 = vst.msk [vmem:[%s325 + $0xf0] sm:$0xff] %vm365, %v3103
        %3136 = vst.msk [vmem:[%s325 + $0xf8] sm:$0xff] %vm365, %v3104
        %s3137 = sand.u32 %s225, 1
        %s3138 = scalar_lea.sflag [#allocation4], %s3137
        %s3139 = sand.u32 %s225, 1
        %s3140 = smul.addr %s3139, 256
        %s3141 = scalar_lea.vmem [#allocation3], %s3140
        // Predicated region
        $region57: #{_lambda_.3} parent=55 // pred_check
          %p3142 = pneg %p235
        $region58: #{_lambda_.3} parent=55 // pred_check_branch
          %3144 = sbr.rel (%p3142) target = $region60
        $region59: #{_lambda_.3} parent=55 // pred_region
          %3146 = vsyncadd %s3138, 0
          %s3147 = smul.addr %s23, 32
          %s3148 = smul.addr %s3147, 8
          %s3149 = scalar_lea.hbm %s9, %s3148
          %s3150 = sshll.u32 %s3141, 4
          %s3151 = int_to_ptr.vmem [resolvable:$true] %s3150
          %s3152 = sshll.u32 %s3149, 4
          %s3153 = int_to_ptr.hbm [resolvable:$true] %s3152
          %3158 = dma.vmem_to_hbm [thread:$0]  %s3151, 4096, %s3153, %s3138, 128, 128, 8
        $region60: #{_lambda_.3} parent=55 // pred_fallthru
          _
      $region56: #{_lambda_.3} parent=5 // pred_fallthru
        _
      %p3159 = scmp.le.s32.totalorder 2, %s18
      // Predicated region
      $region61: #{_lambda_.3} parent=5 // pred_check
        %p3160 = pneg %p3159
      $region62: #{_lambda_.3} parent=5 // pred_check_branch
        %3162 = sbr.rel (%p3160) target = $region64
      $region63: #{_lambda_.3} parent=5 // pred_region
        %s3163 = ssub.s32 %s18, 2
        // Predicated region
        $region65: #{_lambda_.3} parent=63 // pred_check
          %p3164 = pneg %p241
        $region66: #{_lambda_.3} parent=63 // pred_check_branch
          %3166 = sbr.rel (%p3164) target = $region68
        $region67: #{_lambda_.3} parent=63 // pred_region
          %s3167 = sand.u32 %s226, 1
          %s3168 = scalar_lea.sflag [#allocation4], %s3167
          %s3169 = sand.u32 %s226, 1
          %s3170 = smul.addr %s3169, 256
          %s3171 = scalar_lea.vmem [#allocation3], %s3170
          %3173 = dma.done %s3168, 4096
        $region68: #{_lambda_.3} parent=63 // pred_fallthru
          _
      $region64: #{_lambda_.3} parent=5 // pred_fallthru
        _
    $region6: #{_lambda_.3} parent=1 // loop_footer
      %s22 = sadd.s32 1, %s18
    $region7: #{_lambda_.3} parent=1 // loop_footer_branch
      %17 = sbr.rel target = $region3
    $region8: #{_lambda_.3} parent=1 // loop_exit
      _
    %3174 = vsyncpa [#allocation4], 1
    %s3175 = scalar_lea.sflag [#allocation4], 1
    %3176 = vsyncpa %s3175, 1

</llo_original>
